<compile_context>
chip_gen: v7x
topology: tpu7x:2x2x1
jax: 0.10.0
libtpu: 0.0.40
codegen_flags: <defaults>
</compile_context>

<pallas_src>
import jax
import jax.numpy as jnp
from jax.experimental import pallas as pl
from jax.experimental.pallas import tpu as pltpu

# ----------------------------- config ---------------------------------------
B, T = 2, 8                  # batch, seq-len
N = B * T                    # valid (real) tokens
D = 32                       # input_size (embedding dim)
C = 32                       # context_encoder.output_size
H = C + D                    # highway width
V = 64                       # vocab size
K = 5                        # nn_mapper neighbours per token

NP = 128                     # token rows padded to one full MXU/sublane tile
VP = 128                     # vocab padded to one full 128-lane tile

assert D == C, "weight-block packing below assumes D == C"

PAD, BOS, EOS, UNK = 0, 1, 2, 3          # SPECIAL_TOKENS ids
NOISE_PROB = 0.6
NOISE_PROBS = jnp.array([1.0 - NOISE_PROB, NOISE_PROB * 0.5, NOISE_PROB * 0.5],
                        jnp.float32)

# indices into the packed weight stack [NW, D, D] / bias stack [NB, 1, D]
W_CTX = 0
W_G_XX, W_G_CX, W_G_XC, W_G_CC = 1, 2, 3, 4
W_H_XX, W_H_CX, W_H_XC, W_H_CC = 5, 6, 7, 8
W_O_X, W_O_C = 9, 10
NW = 11
B_CTX, B_G_X, B_G_C, B_H_X, B_H_C, B_O = 0, 1, 2, 3, 4, 5
NB = 6


# ----------------------- fused forward + loss + acc kernel -------------------
def _fused_kernel(x_ref, tgt_ref, emb_ref, l1_ref, w_ref, b_ref,
                  out_ref, loss_ref, acc_ref):
  f32 = jnp.float32

  def mm(a, wi):
    return jnp.dot(a, w_ref[wi], preferred_element_type=f32)

  x = x_ref[...]                                                  # [NP, D]

  # TODO(synk): real context_encoder is a BiRNN / self-attention module that
  # is injected externally; a per-token tanh projection with the same
  # output_size is used as a deterministic stand-in (hiddens_mode = 0).
  ctx = jnp.tanh(mm(x, W_CTX) + b_ref[B_CTX])                     # [NP, C]

  # HighwayLayer with block-partitioned weights: h=[x|ctx] is never built.
  # TODO(synk): nn.Dropout layers in highway_ff run in eval mode (identity).
  t_x = jax.nn.sigmoid(mm(x, W_G_XX) + mm(ctx, W_G_CX) + b_ref[B_G_X])
  t_c = jax.nn.sigmoid(mm(x, W_G_XC) + mm(ctx, W_G_CC) + b_ref[B_G_C])
  h_x = jnp.maximum(mm(x, W_H_XX) + mm(ctx, W_H_CX) + b_ref[B_H_X], 0.0)
  h_c = jnp.maximum(mm(x, W_H_XC) + mm(ctx, W_H_CC) + b_ref[B_H_C], 0.0)
  z_x = t_x * h_x + (1.0 - t_x) * x
  z_c = t_c * h_c + (1.0 - t_c) * ctx

  # final Linear(H -> D), split over the same row blocks
  out = mm(z_x, W_O_X) + mm(z_c, W_O_C) + b_ref[B_O]              # [NP, D]
  out_ref[...] = out

  # valid-token mask: rows >= N are padding
  row = jax.lax.broadcasted_iota(jnp.int32, (NP, 1), 0)
  valid = (row < N).astype(f32)                                   # [NP, 1]

  # MSE(sum) over valid rows (loss_at == 'all')
  diff = (out - tgt_ref[...]) * valid
  loss_ref[0] = jnp.sum(diff * diff)

  # cosine-sim top-1 accuracy vs the pre-unit-normalised embedding table.
  # Per-row positive scaling (|pred|) cannot change the argmax, so the
  # pred-norm divide from batch_cosine_sim is dropped (eps clamp handled in
  # the wrapper normalisation).
  cs = jax.lax.dot_general(out, emb_ref[...], (((1,), (1,)), ((), ())),
                           preferred_element_type=f32)            # [NP, VP]
  col = jax.lax.broadcasted_iota(jnp.int32, cs.shape, 1)
  cs = jnp.where(col < V, cs, -jnp.inf)                           # mask vocab pad
  maxv = jnp.max(cs, axis=1, keepdims=True)
  arg = jnp.min(jnp.where(cs == maxv, col, VP), axis=1, keepdims=True)
  matches = (arg == l1_ref[...]).astype(f32) * valid
  acc_ref[0] = jnp.sum(matches) * (1.0 / N)


def fused_forward_loss_acc(x_p, tgt_p, emb_unit_p, l1_p, w_stack, b_stack):
  vmem = pltpu.MemorySpace.VMEM
  smem = pltpu.MemorySpace.SMEM
  # TODO(synk): when N grows beyond one 128-row block, add a token-block grid
  # axis marked "parallel" (per-block partial loss/acc) to use both v7x cores.
  out, loss, acc = pl.pallas_call(
      _fused_kernel,
      out_shape=(jax.ShapeDtypeStruct((NP, D), jnp.float32),
                 jax.ShapeDtypeStruct((1,), jnp.float32),
                 jax.ShapeDtypeStruct((1,), jnp.float32)),
      in_specs=[pl.BlockSpec(memory_space=vmem)] * 6,
      out_specs=(pl.BlockSpec(memory_space=vmem),
                 pl.BlockSpec(memory_space=smem),
                 pl.BlockSpec(memory_space=smem)),
  )(x_p, tgt_p, emb_unit_p, l1_p, w_stack, b_stack)
  return out, loss[0], acc[0]


# ----------------------------- JAX glue --------------------------------------
def get_noise_channel(key, l1_data, l1_encoded, emb, nn_table):
  """noise_profile == 1 noise channel (random sampling kept in JAX)."""
  k1, k2 = jax.random.split(key)
  n_idx = jax.random.categorical(k1, jnp.log(NOISE_PROBS), shape=l1_data.shape)
  special = ((l1_data == PAD) | (l1_data == EOS) | (l1_data == BOS))
  n_idx = jnp.where(special, 0, n_idx)
  nns = nn_table[l1_data]                                         # [B, T, K]
  # matches torch .random_(0, K-1): exclusive upper bound, i.e. {0..K-2}
  nns_idx = jax.random.randint(k2, l1_data.shape, 0, K - 1)
  l1_nn = jnp.take_along_axis(nns, nns_idx[..., None], axis=2)[..., 0]
  l1_nn_encoded = emb[l1_nn]                                      # [B, T, D]
  l1_noisy = jnp.where(n_idx[..., None] == 0, l1_encoded,
                       jnp.where(n_idx[..., None] == 1, 0.0, l1_nn_encoded))
  n_bin = jnp.where(n_idx != 0, 1, 0)
  return l1_noisy, n_bin


def _pack_params(p):
  """Block-partition the canonical [H,H]/[H,D] weights into [32,32] tiles."""
  w_stack = jnp.stack([
      p["wc"],
      p["wg"][:D, :D], p["wg"][D:, :D], p["wg"][:D, D:], p["wg"][D:, D:],
      p["wh"][:D, :D], p["wh"][D:, :D], p["wh"][:D, D:], p["wh"][D:, D:],
      p["wo"][:D, :], p["wo"][D:, :],
  ])                                                              # [NW, 32, 32]
  b_stack = jnp.stack([
      p["bc"].reshape(1, C),
      p["bg"][:, :D].reshape(1, D), p["bg"][:, D:].reshape(1, C),
      p["bh"][:, :D].reshape(1, D), p["bh"][:, D:].reshape(1, C),
      p["bo"].reshape(1, D),
  ])                                                              # [NB, 1, 32]
  return w_stack, b_stack


def mse_cloze_forward(params, l1_data, noise_key):
  emb = params["emb"]
  l1_encoded = emb[l1_data]                                       # [B, T, D]
  n_encoded, _ = get_noise_channel(noise_key, l1_data, l1_encoded, emb,
                                   params["nn_table"])
  x = n_encoded.reshape(N, D)
  tgt = l1_encoded.reshape(N, D)
  l1_flat = l1_data.reshape(N)

  # pad tokens to a full 128-row tile and the vocab to 128 lanes
  x_p = jnp.zeros((NP, D), jnp.float32).at[:N].set(x)
  tgt_p = jnp.zeros((NP, D), jnp.float32).at[:N].set(tgt)
  l1_p = jnp.full((NP, 1), -1, jnp.int32).at[:N, 0].set(l1_flat)

  # pre-unit-normalise the embedding table (argmax-equivalent to full cosine)
  e_norm = jnp.sqrt(jnp.sum(emb * emb, axis=1, keepdims=True))
  emb_unit = emb / jnp.maximum(e_norm, 1e-10)
  emb_unit_p = jnp.zeros((VP, D), jnp.float32).at[:V].set(emb_unit)

  w_stack, b_stack = _pack_params(params)
  out_p, loss, acc = fused_forward_loss_acc(x_p, tgt_p, emb_unit_p, l1_p,
                                            w_stack, b_stack)
  return loss, acc, out_p[:N]


# pure-JAX reference of the ORIGINAL (unsplit, concat-based) math
def _reference(params, x, target, emb, l1_flat):
  ctx = jnp.tanh(x @ params["wc"] + params["bc"])
  h = jnp.concatenate([x, ctx], axis=-1)
  t = jax.nn.sigmoid(h @ params["wg"] + params["bg"])
  hh = jnp.maximum(h @ params["wh"] + params["bh"], 0.0)
  z = t * hh + (1.0 - t) * h
  out = z @ params["wo"] + params["bo"]
  loss = jnp.sum((out - target) ** 2)
  dots = out @ emb.T
  ab = (jnp.linalg.norm(out, axis=1, keepdims=True)
        * jnp.linalg.norm(emb, axis=1)[None, :])
  ab = jnp.where(ab <= 0.0, 1e-10, ab)
  cs = dots / ab
  arg = jnp.argmax(cs, axis=1)
  acc = jnp.mean((arg == l1_flat).astype(jnp.float32))
  return out, loss, acc


def init_params(key):
  ks = jax.random.split(key, 8)
  p = {}
  p["emb"] = jax.random.normal(ks[0], (V, D), jnp.float32)          # encoder
  p["nn_table"] = jax.random.randint(ks[1], (V, K), 0, V, jnp.int32)  # nn_mapper
  p["wc"] = 0.1 * jax.random.normal(ks[2], (D, C), jnp.float32)     # ctx stand-in
  p["bc"] = jnp.zeros((1, C), jnp.float32)
  # HighwayLayer: uniform(-0.05, 0.05) weights, zero bias (as in __init__)
  p["wg"] = jax.random.uniform(ks[3], (H, H), jnp.float32, -0.05, 0.05)
  p["bg"] = jnp.zeros((1, H), jnp.float32)
  p["wh"] = jax.random.uniform(ks[4], (H, H), jnp.float32, -0.05, 0.05)
  p["bh"] = jnp.zeros((1, H), jnp.float32)
  # final Linear(H -> D)
  bound = 1.0 / (H ** 0.5)
  p["wo"] = jax.random.uniform(ks[5], (H, D), jnp.float32, -bound, bound)
  p["bo"] = jax.random.uniform(ks[6], (1, D), jnp.float32, -bound, bound)
  return p


if __name__ == "__main__":
  key = jax.random.PRNGKey(0)
  pkey, dkey, nkey = jax.random.split(key, 3)
  params = init_params(pkey)

  # l1_data: int token ids [B, T]; put BOS/EOS at the sequence edges
  l1_data = jax.random.randint(dkey, (B, T), 4, V, jnp.int32)
  l1_data = l1_data.at[:, 0].set(BOS).at[:, -1].set(EOS)

  fwd = jax.jit(mse_cloze_forward)
  loss, acc, out = fwd(params, l1_data, nkey)
  loss = jax.block_until_ready(loss)
  acc = jax.block_until_ready(acc)
  out = jax.block_until_ready(out)

  # sanity-check against a pure-JAX reference of the original math
  emb = params["emb"]
  l1_encoded = emb[l1_data]
  n_encoded, _ = get_noise_channel(nkey, l1_data, l1_encoded, emb,
                                   params["nn_table"])
  ref_out, ref_loss, ref_acc = _reference(
      params, n_encoded.reshape(N, D), l1_encoded.reshape(N, D), emb,
      l1_data.reshape(-1))
  assert jnp.allclose(out, ref_out, rtol=2e-3, atol=2e-3)
  assert jnp.allclose(loss, ref_loss, rtol=2e-3, atol=2e-3)
  assert jnp.allclose(acc, ref_acc, atol=1e-6)

  print("KERNEL_OK")
</pallas_src>

<mosaic_0001>
module attributes {stable_mosaic.version = 11 : i64} {
  func.func @_fused_kernel(%arg0: memref<128x32xf32, #tpu.memory_space<vmem>>, %arg1: memref<128x32xf32, #tpu.memory_space<vmem>>, %arg2: memref<128x32xf32, #tpu.memory_space<vmem>>, %arg3: memref<128x1xi32, #tpu.memory_space<vmem>>, %arg4: memref<11x32x32xf32, #tpu.memory_space<vmem>>, %arg5: memref<6x1x32xf32, #tpu.memory_space<vmem>>, %arg6: memref<128x32xf32, #tpu.memory_space<vmem>>, %arg7: memref<1xf32, #tpu.memory_space<smem>>, %arg8: memref<1xf32, #tpu.memory_space<smem>>) attributes {dimension_semantics = [], scalar_prefetch = 0 : i64, scratch_operands = 0 : i64, tpu.core_type = #tpu.core_type<tc>} {
    %c0 = arith.constant 0 : index
    %c0_0 = arith.constant 0 : index
    %0 = vector.load %arg0[%c0, %c0_0] : memref<128x32xf32, #tpu.memory_space<vmem>>, vector<128x32xf32>
    %c0_1 = arith.constant 0 : index
    %c0_2 = arith.constant 0 : index
    %c0_3 = arith.constant 0 : index
    %1 = vector.load %arg4[%c0_1, %c0_2, %c0_3] : memref<11x32x32xf32, #tpu.memory_space<vmem>>, vector<1x32x32xf32>
    %2 = vector.shape_cast %1 : vector<1x32x32xf32> to vector<32x32xf32>
    %cst = arith.constant dense<0.000000e+00> : vector<128x32xf32>
    %3 = tpu.matmul %0, %2, %cst {dimension_numbers = #tpu.dot_dimension_numbers<[1], [0], [0], [1], [0, 0, 1, 1], [], []>} : vector<128x32xf32>, vector<32x32xf32>, vector<128x32xf32> -> vector<128x32xf32>
    %c0_4 = arith.constant 0 : index
    %c0_5 = arith.constant 0 : index
    %c0_6 = arith.constant 0 : index
    %4 = vector.load %arg5[%c0_4, %c0_5, %c0_6] : memref<6x1x32xf32, #tpu.memory_space<vmem>>, vector<1x1x32xf32>
    %5 = vector.shape_cast %4 : vector<1x1x32xf32> to vector<1x32xf32>
    %6 = vector.broadcast %5 : vector<1x32xf32> to vector<128x32xf32>
    %7 = arith.addf %3, %6 : vector<128x32xf32>
    %8 = math.tanh %7 : vector<128x32xf32>
    %c1 = arith.constant 1 : index
    %c0_7 = arith.constant 0 : index
    %c0_8 = arith.constant 0 : index
    %9 = vector.load %arg4[%c1, %c0_7, %c0_8] : memref<11x32x32xf32, #tpu.memory_space<vmem>>, vector<1x32x32xf32>
    %10 = vector.shape_cast %9 : vector<1x32x32xf32> to vector<32x32xf32>
    %cst_9 = arith.constant dense<0.000000e+00> : vector<128x32xf32>
    %11 = tpu.matmul %0, %10, %cst_9 {dimension_numbers = #tpu.dot_dimension_numbers<[1], [0], [0], [1], [0, 0, 1, 1], [], []>} : vector<128x32xf32>, vector<32x32xf32>, vector<128x32xf32> -> vector<128x32xf32>
    %c2 = arith.constant 2 : index
    %c0_10 = arith.constant 0 : index
    %c0_11 = arith.constant 0 : index
    %12 = vector.load %arg4[%c2, %c0_10, %c0_11] : memref<11x32x32xf32, #tpu.memory_space<vmem>>, vector<1x32x32xf32>
    %13 = vector.shape_cast %12 : vector<1x32x32xf32> to vector<32x32xf32>
    %cst_12 = arith.constant dense<0.000000e+00> : vector<128x32xf32>
    %14 = tpu.matmul %8, %13, %cst_12 {dimension_numbers = #tpu.dot_dimension_numbers<[1], [0], [0], [1], [0, 0, 1, 1], [], []>} : vector<128x32xf32>, vector<32x32xf32>, vector<128x32xf32> -> vector<128x32xf32>
    %15 = arith.addf %11, %14 : vector<128x32xf32>
    %c1_13 = arith.constant 1 : index
    %c0_14 = arith.constant 0 : index
    %c0_15 = arith.constant 0 : index
    %16 = vector.load %arg5[%c1_13, %c0_14, %c0_15] : memref<6x1x32xf32, #tpu.memory_space<vmem>>, vector<1x1x32xf32>
    %17 = vector.shape_cast %16 : vector<1x1x32xf32> to vector<1x32xf32>
    %18 = vector.broadcast %17 : vector<1x32xf32> to vector<128x32xf32>
    %19 = arith.addf %15, %18 : vector<128x32xf32>
    %20 = arith.negf %19 : vector<128x32xf32>
    %21 = math.exp %20 : vector<128x32xf32>
    %cst_16 = arith.constant 1.000000e+00 : f32
    %22 = vector.broadcast %cst_16 : f32 to vector<128x32xf32>
    %23 = arith.addf %22, %21 : vector<128x32xf32>
    %24 = arith.divf %22, %23 : vector<128x32xf32>
    %c3 = arith.constant 3 : index
    %c0_17 = arith.constant 0 : index
    %c0_18 = arith.constant 0 : index
    %25 = vector.load %arg4[%c3, %c0_17, %c0_18] : memref<11x32x32xf32, #tpu.memory_space<vmem>>, vector<1x32x32xf32>
    %26 = vector.shape_cast %25 : vector<1x32x32xf32> to vector<32x32xf32>
    %cst_19 = arith.constant dense<0.000000e+00> : vector<128x32xf32>
    %27 = tpu.matmul %0, %26, %cst_19 {dimension_numbers = #tpu.dot_dimension_numbers<[1], [0], [0], [1], [0, 0, 1, 1], [], []>} : vector<128x32xf32>, vector<32x32xf32>, vector<128x32xf32> -> vector<128x32xf32>
    %c4 = arith.constant 4 : index
    %c0_20 = arith.constant 0 : index
    %c0_21 = arith.constant 0 : index
    %28 = vector.load %arg4[%c4, %c0_20, %c0_21] : memref<11x32x32xf32, #tpu.memory_space<vmem>>, vector<1x32x32xf32>
    %29 = vector.shape_cast %28 : vector<1x32x32xf32> to vector<32x32xf32>
    %cst_22 = arith.constant dense<0.000000e+00> : vector<128x32xf32>
    %30 = tpu.matmul %8, %29, %cst_22 {dimension_numbers = #tpu.dot_dimension_numbers<[1], [0], [0], [1], [0, 0, 1, 1], [], []>} : vector<128x32xf32>, vector<32x32xf32>, vector<128x32xf32> -> vector<128x32xf32>
    %31 = arith.addf %27, %30 : vector<128x32xf32>
    %c2_23 = arith.constant 2 : index
    %c0_24 = arith.constant 0 : index
    %c0_25 = arith.constant 0 : index
    %32 = vector.load %arg5[%c2_23, %c0_24, %c0_25] : memref<6x1x32xf32, #tpu.memory_space<vmem>>, vector<1x1x32xf32>
    %33 = vector.shape_cast %32 : vector<1x1x32xf32> to vector<1x32xf32>
    %34 = vector.broadcast %33 : vector<1x32xf32> to vector<128x32xf32>
    %35 = arith.addf %31, %34 : vector<128x32xf32>
    %36 = arith.negf %35 : vector<128x32xf32>
    %37 = math.exp %36 : vector<128x32xf32>
    %cst_26 = arith.constant 1.000000e+00 : f32
    %38 = vector.broadcast %cst_26 : f32 to vector<128x32xf32>
    %39 = arith.addf %38, %37 : vector<128x32xf32>
    %40 = arith.divf %38, %39 : vector<128x32xf32>
    %c5 = arith.constant 5 : index
    %c0_27 = arith.constant 0 : index
    %c0_28 = arith.constant 0 : index
    %41 = vector.load %arg4[%c5, %c0_27, %c0_28] : memref<11x32x32xf32, #tpu.memory_space<vmem>>, vector<1x32x32xf32>
    %42 = vector.shape_cast %41 : vector<1x32x32xf32> to vector<32x32xf32>
    %cst_29 = arith.constant dense<0.000000e+00> : vector<128x32xf32>
    %43 = tpu.matmul %0, %42, %cst_29 {dimension_numbers = #tpu.dot_dimension_numbers<[1], [0], [0], [1], [0, 0, 1, 1], [], []>} : vector<128x32xf32>, vector<32x32xf32>, vector<128x32xf32> -> vector<128x32xf32>
    %c6 = arith.constant 6 : index
    %c0_30 = arith.constant 0 : index
    %c0_31 = arith.constant 0 : index
    %44 = vector.load %arg4[%c6, %c0_30, %c0_31] : memref<11x32x32xf32, #tpu.memory_space<vmem>>, vector<1x32x32xf32>
    %45 = vector.shape_cast %44 : vector<1x32x32xf32> to vector<32x32xf32>
    %cst_32 = arith.constant dense<0.000000e+00> : vector<128x32xf32>
    %46 = tpu.matmul %8, %45, %cst_32 {dimension_numbers = #tpu.dot_dimension_numbers<[1], [0], [0], [1], [0, 0, 1, 1], [], []>} : vector<128x32xf32>, vector<32x32xf32>, vector<128x32xf32> -> vector<128x32xf32>
    %47 = arith.addf %43, %46 : vector<128x32xf32>
    %c3_33 = arith.constant 3 : index
    %c0_34 = arith.constant 0 : index
    %c0_35 = arith.constant 0 : index
    %48 = vector.load %arg5[%c3_33, %c0_34, %c0_35] : memref<6x1x32xf32, #tpu.memory_space<vmem>>, vector<1x1x32xf32>
    %49 = vector.shape_cast %48 : vector<1x1x32xf32> to vector<1x32xf32>
    %50 = vector.broadcast %49 : vector<1x32xf32> to vector<128x32xf32>
    %51 = arith.addf %47, %50 : vector<128x32xf32>
    %cst_36 = arith.constant 0.000000e+00 : f32
    %52 = vector.broadcast %cst_36 : f32 to vector<128x32xf32>
    %53 = arith.maximumf %51, %52 : vector<128x32xf32>
    %c7 = arith.constant 7 : index
    %c0_37 = arith.constant 0 : index
    %c0_38 = arith.constant 0 : index
    %54 = vector.load %arg4[%c7, %c0_37, %c0_38] : memref<11x32x32xf32, #tpu.memory_space<vmem>>, vector<1x32x32xf32>
    %55 = vector.shape_cast %54 : vector<1x32x32xf32> to vector<32x32xf32>
    %cst_39 = arith.constant dense<0.000000e+00> : vector<128x32xf32>
    %56 = tpu.matmul %0, %55, %cst_39 {dimension_numbers = #tpu.dot_dimension_numbers<[1], [0], [0], [1], [0, 0, 1, 1], [], []>} : vector<128x32xf32>, vector<32x32xf32>, vector<128x32xf32> -> vector<128x32xf32>
    %c8 = arith.constant 8 : index
    %c0_40 = arith.constant 0 : index
    %c0_41 = arith.constant 0 : index
    %57 = vector.load %arg4[%c8, %c0_40, %c0_41] : memref<11x32x32xf32, #tpu.memory_space<vmem>>, vector<1x32x32xf32>
    %58 = vector.shape_cast %57 : vector<1x32x32xf32> to vector<32x32xf32>
    %cst_42 = arith.constant dense<0.000000e+00> : vector<128x32xf32>
    %59 = tpu.matmul %8, %58, %cst_42 {dimension_numbers = #tpu.dot_dimension_numbers<[1], [0], [0], [1], [0, 0, 1, 1], [], []>} : vector<128x32xf32>, vector<32x32xf32>, vector<128x32xf32> -> vector<128x32xf32>
    %60 = arith.addf %56, %59 : vector<128x32xf32>
    %c4_43 = arith.constant 4 : index
    %c0_44 = arith.constant 0 : index
    %c0_45 = arith.constant 0 : index
    %61 = vector.load %arg5[%c4_43, %c0_44, %c0_45] : memref<6x1x32xf32, #tpu.memory_space<vmem>>, vector<1x1x32xf32>
    %62 = vector.shape_cast %61 : vector<1x1x32xf32> to vector<1x32xf32>
    %63 = vector.broadcast %62 : vector<1x32xf32> to vector<128x32xf32>
    %64 = arith.addf %60, %63 : vector<128x32xf32>
    %cst_46 = arith.constant 0.000000e+00 : f32
    %65 = vector.broadcast %cst_46 : f32 to vector<128x32xf32>
    %66 = arith.maximumf %64, %65 : vector<128x32xf32>
    %67 = arith.mulf %24, %53 : vector<128x32xf32>
    %cst_47 = arith.constant 1.000000e+00 : f32
    %68 = vector.broadcast %cst_47 : f32 to vector<128x32xf32>
    %69 = arith.subf %68, %24 : vector<128x32xf32>
    %70 = arith.mulf %69, %0 : vector<128x32xf32>
    %71 = arith.addf %67, %70 : vector<128x32xf32>
    %72 = arith.mulf %40, %66 : vector<128x32xf32>
    %cst_48 = arith.constant 1.000000e+00 : f32
    %73 = vector.broadcast %cst_48 : f32 to vector<128x32xf32>
    %74 = arith.subf %73, %40 : vector<128x32xf32>
    %75 = arith.mulf %74, %8 : vector<128x32xf32>
    %76 = arith.addf %72, %75 : vector<128x32xf32>
    %c9 = arith.constant 9 : index
    %c0_49 = arith.constant 0 : index
    %c0_50 = arith.constant 0 : index
    %77 = vector.load %arg4[%c9, %c0_49, %c0_50] : memref<11x32x32xf32, #tpu.memory_space<vmem>>, vector<1x32x32xf32>
    %78 = vector.shape_cast %77 : vector<1x32x32xf32> to vector<32x32xf32>
    %cst_51 = arith.constant dense<0.000000e+00> : vector<128x32xf32>
    %79 = tpu.matmul %71, %78, %cst_51 {dimension_numbers = #tpu.dot_dimension_numbers<[1], [0], [0], [1], [0, 0, 1, 1], [], []>} : vector<128x32xf32>, vector<32x32xf32>, vector<128x32xf32> -> vector<128x32xf32>
    %c10 = arith.constant 10 : index
    %c0_52 = arith.constant 0 : index
    %c0_53 = arith.constant 0 : index
    %80 = vector.load %arg4[%c10, %c0_52, %c0_53] : memref<11x32x32xf32, #tpu.memory_space<vmem>>, vector<1x32x32xf32>
    %81 = vector.shape_cast %80 : vector<1x32x32xf32> to vector<32x32xf32>
    %cst_54 = arith.constant dense<0.000000e+00> : vector<128x32xf32>
    %82 = tpu.matmul %76, %81, %cst_54 {dimension_numbers = #tpu.dot_dimension_numbers<[1], [0], [0], [1], [0, 0, 1, 1], [], []>} : vector<128x32xf32>, vector<32x32xf32>, vector<128x32xf32> -> vector<128x32xf32>
    %83 = arith.addf %79, %82 : vector<128x32xf32>
    %c5_55 = arith.constant 5 : index
    %c0_56 = arith.constant 0 : index
    %c0_57 = arith.constant 0 : index
    %84 = vector.load %arg5[%c5_55, %c0_56, %c0_57] : memref<6x1x32xf32, #tpu.memory_space<vmem>>, vector<1x1x32xf32>
    %85 = vector.shape_cast %84 : vector<1x1x32xf32> to vector<1x32xf32>
    %86 = vector.broadcast %85 : vector<1x32xf32> to vector<128x32xf32>
    %87 = arith.addf %83, %86 : vector<128x32xf32>
    %c0_58 = arith.constant 0 : index
    %c0_59 = arith.constant 0 : index
    %88 = vector.load %arg6[%c0_58, %c0_59] : memref<128x32xf32, #tpu.memory_space<vmem>>, vector<128x32xf32>
    tpu.vector_store %arg6[%c0_58, %c0_59], %87 {strides = array<i32>} : memref<128x32xf32, #tpu.memory_space<vmem>>, vector<128x32xf32>,
    %89 = tpu.iota {dimensions = array<i32: 0>} : vector<128x1xi32>
    %c16_i32 = arith.constant 16 : i32
    %90 = vector.broadcast %c16_i32 : i32 to vector<128x1xi32>
    %91 = arith.cmpi slt, %89, %90 : vector<128x1xi32>
    %92 = arith.extui %91 : vector<128x1xi1> to vector<128x1xi32>
    %93 = arith.sitofp %92 : vector<128x1xi32> to vector<128x1xf32>
    %c0_60 = arith.constant 0 : index
    %c0_61 = arith.constant 0 : index
    %94 = vector.load %arg1[%c0_60, %c0_61] : memref<128x32xf32, #tpu.memory_space<vmem>>, vector<128x32xf32>
    %95 = arith.subf %87, %94 : vector<128x32xf32>
    %96 = vector.broadcast %93 : vector<128x1xf32> to vector<128x32xf32>
    %97 = arith.mulf %95, %96 : vector<128x32xf32>
    %98 = arith.mulf %97, %97 : vector<128x32xf32>
    %99 = vector.shape_cast %98 : vector<128x32xf32> to vector<1x128x32xf32>
    %cst_62 = arith.constant dense<0.000000e+00> : vector<1xf32>
    %100 = vector.multi_reduction <add>, %99, %cst_62 [1, 2] : vector<1x128x32xf32> to vector<1xf32>
    %101 = vector.shape_cast %100 : vector<1xf32> to vector<1x1x1xf32>
    %102 = vector.extract %101[0, 0, 0] : f32 from vector<1x1x1xf32>
    %c0_63 = arith.constant 0 : index
    %103 = memref.load %arg7[%c0_63] : memref<1xf32, #tpu.memory_space<smem>>
    memref.store %102, %arg7[%c0_63] : memref<1xf32, #tpu.memory_space<smem>>
    %c0_64 = arith.constant 0 : index
    %c0_65 = arith.constant 0 : index
    %104 = vector.load %arg2[%c0_64, %c0_65] : memref<128x32xf32, #tpu.memory_space<vmem>>, vector<128x32xf32>
    %cst_66 = arith.constant dense<0.000000e+00> : vector<128x128xf32>
    %105 = tpu.matmul %87, %104, %cst_66 {dimension_numbers = #tpu.dot_dimension_numbers<[1], [1], [0], [0], [0, 0, 1, 0], [], []>} : vector<128x32xf32>, vector<128x32xf32>, vector<128x128xf32> -> vector<128x128xf32>
    %106 = tpu.iota {dimensions = array<i32: 1>} : vector<128x128xi32>
    %c64_i32 = arith.constant 64 : i32
    %107 = vector.broadcast %c64_i32 : i32 to vector<128x128xi32>
    %108 = arith.cmpi slt, %106, %107 : vector<128x128xi32>
    %cst_67 = arith.constant 0xFF800000 : f32
    %109 = vector.broadcast %cst_67 : f32 to vector<128x128xf32>
    %110 = arith.select %108, %105, %109 : vector<128x128xi1>, vector<128x128xf32>
    %cst_68 = arith.constant dense<0xFF800000> : vector<128xf32>
    %111 = vector.multi_reduction <maximumf>, %110, %cst_68 [1] : vector<128x128xf32> to vector<128xf32>
    %112 = vector.shape_cast %111 : vector<128xf32> to vector<128x1xf32>
    %113 = vector.broadcast %112 : vector<128x1xf32> to vector<128x128xf32>
    %114 = arith.cmpf oeq, %110, %113 : vector<128x128xf32>
    %c128_i32 = arith.constant 128 : i32
    %115 = vector.broadcast %c128_i32 : i32 to vector<128x128xi32>
    %116 = arith.select %114, %106, %115 : vector<128x128xi1>, vector<128x128xi32>
    %cst_69 = arith.constant dense<2147483647> : vector<128xi32>
    %117 = vector.multi_reduction <minsi>, %116, %cst_69 [1] : vector<128x128xi32> to vector<128xi32>
    %118 = vector.shape_cast %117 : vector<128xi32> to vector<128x1xi32>
    %c0_70 = arith.constant 0 : index
    %c0_71 = arith.constant 0 : index
    %119 = vector.load %arg3[%c0_70, %c0_71] : memref<128x1xi32, #tpu.memory_space<vmem>>, vector<128x1xi32>
    %120 = arith.cmpi eq, %118, %119 : vector<128x1xi32>
    %121 = arith.extui %120 : vector<128x1xi1> to vector<128x1xi32>
    %122 = arith.sitofp %121 : vector<128x1xi32> to vector<128x1xf32>
    %123 = arith.mulf %122, %93 : vector<128x1xf32>
    %124 = vector.shape_cast %123 : vector<128x1xf32> to vector<1x128x1xf32>
    %cst_72 = arith.constant dense<0.000000e+00> : vector<1xf32>
    %125 = vector.multi_reduction <add>, %124, %cst_72 [1, 2] : vector<1x128x1xf32> to vector<1xf32>
    %126 = vector.shape_cast %125 : vector<1xf32> to vector<1x1x1xf32>
    %127 = vector.extract %126[0, 0, 0] : f32 from vector<1x1x1xf32>
    %cst_73 = arith.constant 6.250000e-02 : f32
    %128 = arith.mulf %127, %cst_73 : f32
    %c0_74 = arith.constant 0 : index
    %129 = memref.load %arg8[%c0_74] : memref<1xf32, #tpu.memory_space<smem>>
    memref.store %128, %arg8[%c0_74] : memref<1xf32, #tpu.memory_space<smem>>
    return
  }
}

</mosaic_0001>

<llo_original>
// kernel: mse_cloze_forward.1
$region0: #{mse_cloze_forward.1}
  #allocation0 [shape = 'u32[]', space=smem, size = 0x4, offset = 0x4, fixed_abs, tag = 'smem constant byte address 0x4 - core index']
  #allocation1 [shape = 'u32[144,128]{1,0:T(1,128)}', space=vmem, size = 0x12000, scoped, tag = 'internal scratch']
  %s0 = inlined_call_operand.vmem [shape: f32[128,32], index: 0, kind: input, shape index: {}]
  %s1 = inlined_call_operand.vmem [shape: f32[128,32], index: 1, kind: input, shape index: {}]
  %s2 = inlined_call_operand.vmem [shape: f32[128,32], index: 2, kind: input, shape index: {}]
  %s3 = inlined_call_operand.vmem [shape: s32[128,1], index: 3, kind: input, shape index: {}]
  %s4 = inlined_call_operand.vmem [shape: f32[11,32,32], index: 4, kind: input, shape index: {}]
  %s5 = inlined_call_operand.vmem [shape: f32[6,1,32], index: 5, kind: input, shape index: {}]
  %s6 = inlined_call_operand.vmem [shape: f32[128,32], index: 6, kind: output, shape index: {0}]
  %s7 = inlined_call_operand.hbm [shape: f32[1], index: 7, kind: output, shape index: {1}]
  %s8 = inlined_call_operand.hbm [shape: f32[1], index: 8, kind: output, shape index: {2}]
  %9 = xla_tuple %s6, %s7, %s8
  %s10 = sld [smem:[#allocation0]]
  $region50: #{mse_cloze_forward.1} parent=0
    _
  %s12 = ssub.s32 1, %s10
  %s13 = scalar_select 0, %s12, %s10
  $region1: #{mse_cloze_forward.1} parent=0
    #allocation2 [shape = 'u8[512]{0}', space=smem, size = 0x200, scoped, tag = 'output window, operand 1, single buffered']
    #allocation3 [shape = 's32[1]{0}', space=sflag, size = 0x4, scoped, tag = 'scoped memory for mse_cloze_forward.1']
    #allocation4 [shape = 'u8[512]{0}', space=smem, size = 0x200, scoped, tag = 'output window, operand 2, single buffered']
    #allocation5 [shape = 's32[1]{0}', space=sflag, size = 0x4, scoped, tag = 'scoped memory for mse_cloze_forward.1']
    %14 = vsyncpa [#allocation3], 0
    %15 = vsyncpa [#allocation5], 0
    // Predicated region
    $region2: #{mse_cloze_forward.1} parent=1 // pred_check
      _
    $region3: #{mse_cloze_forward.1} parent=1 // pred_check_branch
      %17 = sbr.rel (0) target = $region5
    $region4: #{mse_cloze_forward.1} parent=1 // pred_region
      _
    $region5: #{mse_cloze_forward.1} parent=1 // pred_fallthru
      _
    // Predicated region
    $region6: #{mse_cloze_forward.1} parent=1 // pred_check
      _
    $region7: #{mse_cloze_forward.1} parent=1 // pred_check_branch
      %19 = sbr.rel (0) target = $region9
    $region8: #{mse_cloze_forward.1} parent=1 // pred_region
      _
    $region9: #{mse_cloze_forward.1} parent=1 // pred_fallthru
      _
    // Predicated region
    $region10: #{mse_cloze_forward.1} parent=1 // pred_check
      _
    $region11: #{mse_cloze_forward.1} parent=1 // pred_check_branch
      %21 = sbr.rel (0) target = $region13
    $region12: #{mse_cloze_forward.1} parent=1 // pred_region
      _
    $region13: #{mse_cloze_forward.1} parent=1 // pred_fallthru
      _
    // Predicated region
    $region14: #{mse_cloze_forward.1} parent=1 // pred_check
      _
    $region15: #{mse_cloze_forward.1} parent=1 // pred_check_branch
      %23 = sbr.rel (0) target = $region17
    $region16: #{mse_cloze_forward.1} parent=1 // pred_region
      _
    $region17: #{mse_cloze_forward.1} parent=1 // pred_fallthru
      _
    // Predicated region
    $region18: #{mse_cloze_forward.1} parent=1 // pred_check
      _
    $region19: #{mse_cloze_forward.1} parent=1 // pred_check_branch
      %25 = sbr.rel (0) target = $region21
    $region20: #{mse_cloze_forward.1} parent=1 // pred_region
      _
    $region21: #{mse_cloze_forward.1} parent=1 // pred_fallthru
      _
    // Predicated region
    $region22: #{mse_cloze_forward.1} parent=1 // pred_check
      _
    $region23: #{mse_cloze_forward.1} parent=1 // pred_check_branch
      %27 = sbr.rel (0) target = $region25
    $region24: #{mse_cloze_forward.1} parent=1 // pred_region
      _
    $region25: #{mse_cloze_forward.1} parent=1 // pred_fallthru
      _
    %v28 = vld [vmem:[%s0] sm:$0xff]
    %v29 = vld [vmem:[%s0 + $0x8] sm:$0xff]
    %v30 = vld [vmem:[%s0 + $0x10] sm:$0xff]
    %v31 = vld [vmem:[%s0 + $0x18] sm:$0xff]
    %v32 = vld [vmem:[%s0 + $0x20] sm:$0xff]
    %v33 = vld [vmem:[%s0 + $0x28] sm:$0xff]
    %v34 = vld [vmem:[%s0 + $0x30] sm:$0xff]
    %v35 = vld [vmem:[%s0 + $0x38] sm:$0xff]
    %v36 = vld [vmem:[%s0 + $0x40] sm:$0xff]
    %v37 = vld [vmem:[%s0 + $0x48] sm:$0xff]
    %v38 = vld [vmem:[%s0 + $0x50] sm:$0xff]
    %v39 = vld [vmem:[%s0 + $0x58] sm:$0xff]
    %v40 = vld [vmem:[%s0 + $0x60] sm:$0xff]
    %v41 = vld [vmem:[%s0 + $0x68] sm:$0xff]
    %v42 = vld [vmem:[%s0 + $0x70] sm:$0xff]
    %v43 = vld [vmem:[%s0 + $0x78] sm:$0xff]
    %v44 = vld [vmem:[%s4] sm:$0xff]
    %v45 = vld [vmem:[%s4 + $0x8] sm:$0xff]
    %v46 = vld [vmem:[%s4 + $0x10] sm:$0xff]
    %v47 = vld [vmem:[%s4 + $0x18] sm:$0xff]
    %v48 = vld [vmem:[%s5] sm:$0x1]
    %v50 = vlaneseq
    %v51 = vshrl.u32 %v50, 7
    %v52 = vsub.s32 0, %v51
    %v53 = vrot.slane %v48, %v52
    %vm55 = vcmask 261120
    %v57 = vsel %vm55, %v28, 0
    %v60 = vsel %vm55, %v29, 0
    %v63 = vsel %vm55, %v30, 0
    %v66 = vsel %vm55, %v31, 0
    %v69 = vsel %vm55, %v32, 0
    %v72 = vsel %vm55, %v33, 0
    %v75 = vsel %vm55, %v34, 0
    %v78 = vsel %vm55, %v35, 0
    %v81 = vsel %vm55, %v36, 0
    %v84 = vsel %vm55, %v37, 0
    %v87 = vsel %vm55, %v38, 0
    %v90 = vsel %vm55, %v39, 0
    %v93 = vsel %vm55, %v40, 0
    %v96 = vsel %vm55, %v41, 0
    %v99 = vsel %vm55, %v42, 0
    %v102 = vsel %vm55, %v43, 0
    %104 = vmatprep.subr.mxu0 0.0
    %105 = vmatpush1.msra.mxu0 %v44
    %106 = vmatprep.subr.mxu0 0.0
    %107 = vmatpush1.msra.mxu0 %v45
    %108 = vmatprep.subr.mxu0 0.0
    %109 = vmatpush1.msra.mxu0 %v46
    %110 = vmatprep.subr.mxu0 0.0
    %111 = vmatpush1.msra.mxu0 %v47
    %112 = vmatprep.subr.mxu0 0.0
    %113 = vmatpush1.msra.mxu0 0.0
    %114 = vmatprep.subr.mxu0 0.0
    %115 = vmatpush1.msra.mxu0 0.0
    %116 = vmatprep.subr.mxu0 0.0
    %117 = vmatpush1.msra.mxu0 0.0
    %118 = vmatprep.subr.mxu0 0.0
    %119 = vmatpush1.msra.mxu0 0.0
    %120 = vmatprep.subr.mxu0 0.0
    %121 = vmatpush1.msra.mxu0 0.0
    %122 = vmatprep.subr.mxu0 0.0
    %123 = vmatpush1.msra.mxu0 0.0
    %124 = vmatprep.subr.mxu0 0.0
    %125 = vmatpush1.msra.mxu0 0.0
    %126 = vmatprep.subr.mxu0 0.0
    %127 = vmatpush1.msra.mxu0 0.0
    %128 = vmatprep.subr.mxu0 0.0
    %129 = vmatpush1.msra.mxu0 0.0
    %130 = vmatprep.subr.mxu0 0.0
    %131 = vmatpush1.msra.mxu0 0.0
    %132 = vmatprep.subr.mxu0 0.0
    %133 = vmatpush1.msra.mxu0 0.0
    %134 = vmatprep.subr.mxu0 0.0
    %135 = vmatpush1.msra.mxu0 0.0
    %136 = vmatprep.subr.mxu0 0.0
    %137 = vmatpush1.msra.mxu0 0.0
    %138 = vmatprep.subr.mxu0 0.0
    %139 = vmatpush1.msra.mxu0 0.0
    %140 = vmatprep.subr.mxu0 0.0
    %141 = vmatpush1.msra.mxu0 0.0
    %142 = vmatprep.subr.mxu0 0.0
    %143 = vmatpush1.msra.mxu0 0.0
    %144 = vmatprep.subr.mxu0 0.0
    %145 = vmatpush1.msra.mxu0 0.0
    %146 = vmatprep.subr.mxu0 0.0
    %147 = vmatpush1.msra.mxu0 0.0
    %148 = vmatprep.subr.mxu0 0.0
    %149 = vmatpush1.msra.mxu0 0.0
    %150 = vmatprep.subr.mxu0 0.0
    %151 = vmatpush1.msra.mxu0 0.0
    %152 = vmatprep.subr.mxu0 0.0
    %153 = vmatpush1.msra.mxu0 0.0
    %154 = vmatprep.subr.mxu0 0.0
    %155 = vmatpush1.msra.mxu0 0.0
    %156 = vmatprep.subr.mxu0 0.0
    %157 = vmatpush1.msra.mxu0 0.0
    %158 = vmatprep.subr.mxu0 0.0
    %159 = vmatpush1.msra.mxu0 0.0
    %160 = vmatprep.subr.mxu0 0.0
    %161 = vmatpush1.msra.mxu0 0.0
    %162 = vmatprep.subr.mxu0 0.0
    %163 = vmatpush1.msra.mxu0 0.0
    %164 = vmatprep.subr.mxu0 0.0
    %165 = vmatpush1.msra.mxu0 0.0
    %166 = vmatprep.subr.mxu0 0.0
    %167 = vmatpush1.msra.mxu0 0.0
    %168 = vmatprep.mubr.f32.mxu0 0.0
    %169 = vmatmul.mubr.f32.gmra.mrb[0].mxu0 %v57
    %v170 = vpop.f32.mrb[0].mxu0
    %v171 = vadd.f32 %v53, %v170
    %v172 = vpop.f32.mrb[0].mxu0
    %173 = vmatprep.mubr.f32.mxu0 0.0
    %174 = vmatmul.mubr.f32.gmra.mrb[0].mxu0 %v60
    %v175 = vpop.f32.mrb[0].mxu0
    %v176 = vadd.f32 %v53, %v175
    %v177 = vpop.f32.mrb[0].mxu0
    %178 = vmatprep.mubr.f32.mxu0 0.0
    %179 = vmatmul.mubr.f32.gmra.mrb[0].mxu0 %v63
    %v180 = vpop.f32.mrb[0].mxu0
    %v181 = vadd.f32 %v53, %v180
    %v182 = vpop.f32.mrb[0].mxu0
    %183 = vmatprep.mubr.f32.mxu0 0.0
    %184 = vmatmul.mubr.f32.gmra.mrb[0].mxu0 %v66
    %v185 = vpop.f32.mrb[0].mxu0
    %v186 = vadd.f32 %v53, %v185
    %v187 = vpop.f32.mrb[0].mxu0
    %188 = vmatprep.mubr.f32.mxu0 0.0
    %189 = vmatmul.mubr.f32.gmra.mrb[0].mxu0 %v69
    %v190 = vpop.f32.mrb[0].mxu0
    %v191 = vadd.f32 %v53, %v190
    %v192 = vpop.f32.mrb[0].mxu0
    %193 = vmatprep.mubr.f32.mxu0 0.0
    %194 = vmatmul.mubr.f32.gmra.mrb[0].mxu0 %v72
    %v195 = vpop.f32.mrb[0].mxu0
    %v196 = vadd.f32 %v53, %v195
    %v197 = vpop.f32.mrb[0].mxu0
    %198 = vmatprep.mubr.f32.mxu0 0.0
    %199 = vmatmul.mubr.f32.gmra.mrb[0].mxu0 %v75
    %v200 = vpop.f32.mrb[0].mxu0
    %v201 = vadd.f32 %v53, %v200
    %v202 = vpop.f32.mrb[0].mxu0
    %203 = vmatprep.mubr.f32.mxu0 0.0
    %204 = vmatmul.mubr.f32.gmra.mrb[0].mxu0 %v78
    %v205 = vpop.f32.mrb[0].mxu0
    %v206 = vadd.f32 %v53, %v205
    %v207 = vpop.f32.mrb[0].mxu0
    %208 = vmatprep.mubr.f32.mxu0 0.0
    %209 = vmatmul.mubr.f32.gmra.mrb[0].mxu0 %v81
    %v210 = vpop.f32.mrb[0].mxu0
    %v211 = vadd.f32 %v53, %v210
    %v212 = vpop.f32.mrb[0].mxu0
    %213 = vmatprep.mubr.f32.mxu0 0.0
    %214 = vmatmul.mubr.f32.gmra.mrb[0].mxu0 %v84
    %v215 = vpop.f32.mrb[0].mxu0
    %v216 = vadd.f32 %v53, %v215
    %v217 = vpop.f32.mrb[0].mxu0
    %218 = vmatprep.mubr.f32.mxu0 0.0
    %219 = vmatmul.mubr.f32.gmra.mrb[0].mxu0 %v87
    %v220 = vpop.f32.mrb[0].mxu0
    %v221 = vadd.f32 %v53, %v220
    %v222 = vpop.f32.mrb[0].mxu0
    %223 = vmatprep.mubr.f32.mxu0 0.0
    %224 = vmatmul.mubr.f32.gmra.mrb[0].mxu0 %v90
    %v225 = vpop.f32.mrb[0].mxu0
    %v226 = vadd.f32 %v53, %v225
    %v227 = vpop.f32.mrb[0].mxu0
    %228 = vmatprep.mubr.f32.mxu0 0.0
    %229 = vmatmul.mubr.f32.gmra.mrb[0].mxu0 %v93
    %v230 = vpop.f32.mrb[0].mxu0
    %v231 = vadd.f32 %v53, %v230
    %v232 = vpop.f32.mrb[0].mxu0
    %233 = vmatprep.mubr.f32.mxu0 0.0
    %234 = vmatmul.mubr.f32.gmra.mrb[0].mxu0 %v96
    %v235 = vpop.f32.mrb[0].mxu0
    %v236 = vadd.f32 %v53, %v235
    %v237 = vpop.f32.mrb[0].mxu0
    %238 = vmatprep.mubr.f32.mxu0 0.0
    %239 = vmatmul.mubr.f32.gmra.mrb[0].mxu0 %v99
    %v240 = vpop.f32.mrb[0].mxu0
    %v241 = vadd.f32 %v53, %v240
    %v242 = vpop.f32.mrb[0].mxu0
    %243 = vmatprep.mubr.f32.mxu0 0.0
    %244 = vmatmul.mubr.f32.gmra.mrb[0].mxu0 %v102
    %v245 = vpop.f32.mrb[0].mxu0
    %v246 = vadd.f32 %v53, %v245
    %v247 = vpop.f32.mrb[0].mxu0
    %248 = vdwg.mxu0
    %v249 = vtanh.pop %v171
    %v250 = vtanh.pop %v176
    %v251 = vtanh.pop %v181
    %v252 = vtanh.pop %v186
    %v253 = vtanh.pop %v191
    %v254 = vtanh.pop %v196
    %v255 = vtanh.pop %v201
    %v256 = vtanh.pop %v206
    %v257 = vtanh.pop %v211
    %v258 = vtanh.pop %v216
    %v259 = vtanh.pop %v221
    %v260 = vtanh.pop %v226
    %v261 = vtanh.pop %v231
    %v262 = vtanh.pop %v236
    %v263 = vtanh.pop %v241
    %v264 = vtanh.pop %v246
    %s265 = scalar_lea.vmem %s4, 32
    %v266 = vld [vmem:[%s265] sm:$0xff]
    %v267 = vld [vmem:[%s265 + $0x8] sm:$0xff]
    %v268 = vld [vmem:[%s265 + $0x10] sm:$0xff]
    %v269 = vld [vmem:[%s265 + $0x18] sm:$0xff]
    %s270 = scalar_lea.vmem %s4, 64
    %v271 = vld [vmem:[%s270] sm:$0xff]
    %v272 = vld [vmem:[%s270 + $0x8] sm:$0xff]
    %v273 = vld [vmem:[%s270 + $0x10] sm:$0xff]
    %v274 = vld [vmem:[%s270 + $0x18] sm:$0xff]
    %v276 = vsel %vm55, %v249, 0
    %v279 = vsel %vm55, %v250, 0
    %v282 = vsel %vm55, %v251, 0
    %v285 = vsel %vm55, %v252, 0
    %v288 = vsel %vm55, %v253, 0
    %v291 = vsel %vm55, %v254, 0
    %v294 = vsel %vm55, %v255, 0
    %v297 = vsel %vm55, %v256, 0
    %v300 = vsel %vm55, %v257, 0
    %v303 = vsel %vm55, %v258, 0
    %v306 = vsel %vm55, %v259, 0
    %v309 = vsel %vm55, %v260, 0
    %v312 = vsel %vm55, %v261, 0
    %v315 = vsel %vm55, %v262, 0
    %v318 = vsel %vm55, %v263, 0
    %v321 = vsel %vm55, %v264, 0
    %323 = vmatprep.subr.mxu0 0.0
    %324 = vmatpush1.msra.mxu0 %v271
    %325 = vmatprep.subr.mxu0 0.0
    %326 = vmatpush1.msra.mxu0 %v272
    %327 = vmatprep.subr.mxu0 0.0
    %328 = vmatpush1.msra.mxu0 %v273
    %329 = vmatprep.subr.mxu0 0.0
    %330 = vmatpush1.msra.mxu0 %v274
    %331 = vmatprep.subr.mxu0 0.0
    %332 = vmatpush1.msra.mxu0 0.0
    %333 = vmatprep.subr.mxu0 0.0
    %334 = vmatpush1.msra.mxu0 0.0
    %335 = vmatprep.subr.mxu0 0.0
    %336 = vmatpush1.msra.mxu0 0.0
    %337 = vmatprep.subr.mxu0 0.0
    %338 = vmatpush1.msra.mxu0 0.0
    %339 = vmatprep.subr.mxu0 0.0
    %340 = vmatpush1.msra.mxu0 0.0
    %341 = vmatprep.subr.mxu0 0.0
    %342 = vmatpush1.msra.mxu0 0.0
    %343 = vmatprep.subr.mxu0 0.0
    %344 = vmatpush1.msra.mxu0 0.0
    %345 = vmatprep.subr.mxu0 0.0
    %346 = vmatpush1.msra.mxu0 0.0
    %347 = vmatprep.subr.mxu0 0.0
    %348 = vmatpush1.msra.mxu0 0.0
    %349 = vmatprep.subr.mxu0 0.0
    %350 = vmatpush1.msra.mxu0 0.0
    %351 = vmatprep.subr.mxu0 0.0
    %352 = vmatpush1.msra.mxu0 0.0
    %353 = vmatprep.subr.mxu0 0.0
    %354 = vmatpush1.msra.mxu0 0.0
    %355 = vmatprep.subr.mxu0 0.0
    %356 = vmatpush1.msra.mxu0 0.0
    %357 = vmatprep.subr.mxu0 0.0
    %358 = vmatpush1.msra.mxu0 0.0
    %359 = vmatprep.subr.mxu0 0.0
    %360 = vmatpush1.msra.mxu0 0.0
    %361 = vmatprep.subr.mxu0 0.0
    %362 = vmatpush1.msra.mxu0 0.0
    %363 = vmatprep.subr.mxu0 0.0
    %364 = vmatpush1.msra.mxu0 0.0
    %365 = vmatprep.subr.mxu0 0.0
    %366 = vmatpush1.msra.mxu0 0.0
    %367 = vmatprep.subr.mxu0 0.0
    %368 = vmatpush1.msra.mxu0 0.0
    %369 = vmatprep.subr.mxu0 0.0
    %370 = vmatpush1.msra.mxu0 0.0
    %371 = vmatprep.subr.mxu0 0.0
    %372 = vmatpush1.msra.mxu0 0.0
    %373 = vmatprep.subr.mxu0 0.0
    %374 = vmatpush1.msra.mxu0 0.0
    %375 = vmatprep.subr.mxu0 0.0
    %376 = vmatpush1.msra.mxu0 0.0
    %377 = vmatprep.subr.mxu0 0.0
    %378 = vmatpush1.msra.mxu0 0.0
    %379 = vmatprep.subr.mxu0 0.0
    %380 = vmatpush1.msra.mxu0 0.0
    %381 = vmatprep.subr.mxu0 0.0
    %382 = vmatpush1.msra.mxu0 0.0
    %383 = vmatprep.subr.mxu0 0.0
    %384 = vmatpush1.msra.mxu0 0.0
    %385 = vmatprep.subr.mxu0 0.0
    %386 = vmatpush1.msra.mxu0 0.0
    %387 = vmatprep.mubr.f32.mxu0 0.0
    %388 = vmatmul.mubr.f32.gmra.mrb[0].mxu0 %v276
    %v389 = vpop.f32.mrb[0].mxu0
    %v390 = vadd.f32 0.0, %v389
    %v391 = vpop.f32.mrb[0].mxu0
    %392 = vmatprep.mubr.f32.mxu0 0.0
    %393 = vmatmul.mubr.f32.gmra.mrb[0].mxu0 %v279
    %v394 = vpop.f32.mrb[0].mxu0
    %v395 = vadd.f32 0.0, %v394
    %v396 = vpop.f32.mrb[0].mxu0
    %397 = vmatprep.mubr.f32.mxu0 0.0
    %398 = vmatmul.mubr.f32.gmra.mrb[0].mxu0 %v282
    %v399 = vpop.f32.mrb[0].mxu0
    %v400 = vadd.f32 0.0, %v399
    %v401 = vpop.f32.mrb[0].mxu0
    %402 = vmatprep.mubr.f32.mxu0 0.0
    %403 = vmatmul.mubr.f32.gmra.mrb[0].mxu0 %v285
    %v404 = vpop.f32.mrb[0].mxu0
    %v405 = vadd.f32 0.0, %v404
    %v406 = vpop.f32.mrb[0].mxu0
    %407 = vmatprep.mubr.f32.mxu0 0.0
    %408 = vmatmul.mubr.f32.gmra.mrb[0].mxu0 %v288
    %v409 = vpop.f32.mrb[0].mxu0
    %v410 = vadd.f32 0.0, %v409
    %v411 = vpop.f32.mrb[0].mxu0
    %412 = vmatprep.mubr.f32.mxu0 0.0
    %413 = vmatmul.mubr.f32.gmra.mrb[0].mxu0 %v291
    %v414 = vpop.f32.mrb[0].mxu0
    %v415 = vadd.f32 0.0, %v414
    %v416 = vpop.f32.mrb[0].mxu0
    %417 = vmatprep.mubr.f32.mxu0 0.0
    %418 = vmatmul.mubr.f32.gmra.mrb[0].mxu0 %v294
    %v419 = vpop.f32.mrb[0].mxu0
    %v420 = vadd.f32 0.0, %v419
    %v421 = vpop.f32.mrb[0].mxu0
    %422 = vmatprep.mubr.f32.mxu0 0.0
    %423 = vmatmul.mubr.f32.gmra.mrb[0].mxu0 %v297
    %v424 = vpop.f32.mrb[0].mxu0
    %v425 = vadd.f32 0.0, %v424
    %v426 = vpop.f32.mrb[0].mxu0
    %427 = vmatprep.mubr.f32.mxu0 0.0
    %428 = vmatmul.mubr.f32.gmra.mrb[0].mxu0 %v300
    %v429 = vpop.f32.mrb[0].mxu0
    %v430 = vadd.f32 0.0, %v429
    %v431 = vpop.f32.mrb[0].mxu0
    %432 = vmatprep.mubr.f32.mxu0 0.0
    %433 = vmatmul.mubr.f32.gmra.mrb[0].mxu0 %v303
    %v434 = vpop.f32.mrb[0].mxu0
    %v435 = vadd.f32 0.0, %v434
    %v436 = vpop.f32.mrb[0].mxu0
    %437 = vmatprep.mubr.f32.mxu0 0.0
    %438 = vmatmul.mubr.f32.gmra.mrb[0].mxu0 %v306
    %v439 = vpop.f32.mrb[0].mxu0
    %v440 = vadd.f32 0.0, %v439
    %v441 = vpop.f32.mrb[0].mxu0
    %442 = vmatprep.mubr.f32.mxu0 0.0
    %443 = vmatmul.mubr.f32.gmra.mrb[0].mxu0 %v309
    %v444 = vpop.f32.mrb[0].mxu0
    %v445 = vadd.f32 0.0, %v444
    %v446 = vpop.f32.mrb[0].mxu0
    %447 = vmatprep.mubr.f32.mxu0 0.0
    %448 = vmatmul.mubr.f32.gmra.mrb[0].mxu0 %v312
    %v449 = vpop.f32.mrb[0].mxu0
    %v450 = vadd.f32 0.0, %v449
    %v451 = vpop.f32.mrb[0].mxu0
    %452 = vmatprep.mubr.f32.mxu0 0.0
    %453 = vmatmul.mubr.f32.gmra.mrb[0].mxu0 %v315
    %v454 = vpop.f32.mrb[0].mxu0
    %v455 = vadd.f32 0.0, %v454
    %v456 = vpop.f32.mrb[0].mxu0
    %457 = vmatprep.mubr.f32.mxu0 0.0
    %458 = vmatmul.mubr.f32.gmra.mrb[0].mxu0 %v318
    %v459 = vpop.f32.mrb[0].mxu0
    %v460 = vadd.f32 0.0, %v459
    %v461 = vpop.f32.mrb[0].mxu0
    %462 = vmatprep.mubr.f32.mxu0 0.0
    %463 = vmatmul.mubr.f32.gmra.mrb[0].mxu0 %v321
    %v464 = vpop.f32.mrb[0].mxu0
    %v465 = vadd.f32 0.0, %v464
    %v466 = vpop.f32.mrb[0].mxu0
    %467 = vdwg.mxu0
    %468 = vmatprep.subr.mxu0 0.0
    %469 = vmatpush1.msra.mxu0 %v266
    %470 = vmatprep.subr.mxu0 0.0
    %471 = vmatpush1.msra.mxu0 %v267
    %472 = vmatprep.subr.mxu0 0.0
    %473 = vmatpush1.msra.mxu0 %v268
    %474 = vmatprep.subr.mxu0 0.0
    %475 = vmatpush1.msra.mxu0 %v269
    %476 = vmatprep.subr.mxu0 0.0
    %477 = vmatpush1.msra.mxu0 0.0
    %478 = vmatprep.subr.mxu0 0.0
    %479 = vmatpush1.msra.mxu0 0.0
    %480 = vmatprep.subr.mxu0 0.0
    %481 = vmatpush1.msra.mxu0 0.0
    %482 = vmatprep.subr.mxu0 0.0
    %483 = vmatpush1.msra.mxu0 0.0
    %484 = vmatprep.subr.mxu0 0.0
    %485 = vmatpush1.msra.mxu0 0.0
    %486 = vmatprep.subr.mxu0 0.0
    %487 = vmatpush1.msra.mxu0 0.0
    %488 = vmatprep.subr.mxu0 0.0
    %489 = vmatpush1.msra.mxu0 0.0
    %490 = vmatprep.subr.mxu0 0.0
    %491 = vmatpush1.msra.mxu0 0.0
    %492 = vmatprep.subr.mxu0 0.0
    %493 = vmatpush1.msra.mxu0 0.0
    %494 = vmatprep.subr.mxu0 0.0
    %495 = vmatpush1.msra.mxu0 0.0
    %496 = vmatprep.subr.mxu0 0.0
    %497 = vmatpush1.msra.mxu0 0.0
    %498 = vmatprep.subr.mxu0 0.0
    %499 = vmatpush1.msra.mxu0 0.0
    %500 = vmatprep.subr.mxu0 0.0
    %501 = vmatpush1.msra.mxu0 0.0
    %502 = vmatprep.subr.mxu0 0.0
    %503 = vmatpush1.msra.mxu0 0.0
    %504 = vmatprep.subr.mxu0 0.0
    %505 = vmatpush1.msra.mxu0 0.0
    %506 = vmatprep.subr.mxu0 0.0
    %507 = vmatpush1.msra.mxu0 0.0
    %508 = vmatprep.subr.mxu0 0.0
    %509 = vmatpush1.msra.mxu0 0.0
    %510 = vmatprep.subr.mxu0 0.0
    %511 = vmatpush1.msra.mxu0 0.0
    %512 = vmatprep.subr.mxu0 0.0
    %513 = vmatpush1.msra.mxu0 0.0
    %514 = vmatprep.subr.mxu0 0.0
    %515 = vmatpush1.msra.mxu0 0.0
    %516 = vmatprep.subr.mxu0 0.0
    %517 = vmatpush1.msra.mxu0 0.0
    %518 = vmatprep.subr.mxu0 0.0
    %519 = vmatpush1.msra.mxu0 0.0
    %520 = vmatprep.subr.mxu0 0.0
    %521 = vmatpush1.msra.mxu0 0.0
    %522 = vmatprep.subr.mxu0 0.0
    %523 = vmatpush1.msra.mxu0 0.0
    %524 = vmatprep.subr.mxu0 0.0
    %525 = vmatpush1.msra.mxu0 0.0
    %526 = vmatprep.subr.mxu0 0.0
    %527 = vmatpush1.msra.mxu0 0.0
    %528 = vmatprep.subr.mxu0 0.0
    %529 = vmatpush1.msra.mxu0 0.0
    %530 = vmatprep.subr.mxu0 0.0
    %531 = vmatpush1.msra.mxu0 0.0
    %532 = vmatprep.mubr.f32.mxu0 0.0
    %533 = vmatmul.mubr.f32.gmra.mrb[0].mxu0 %v57
    %v534 = vpop.f32.mrb[0].mxu0
    %v535 = vadd.f32 %v390, %v534
    %v536 = vpop.f32.mrb[0].mxu0
    %537 = vmatprep.mubr.f32.mxu0 0.0
    %538 = vmatmul.mubr.f32.gmra.mrb[0].mxu0 %v60
    %v539 = vpop.f32.mrb[0].mxu0
    %v540 = vadd.f32 %v395, %v539
    %v541 = vpop.f32.mrb[0].mxu0
    %542 = vmatprep.mubr.f32.mxu0 0.0
    %543 = vmatmul.mubr.f32.gmra.mrb[0].mxu0 %v63
    %v544 = vpop.f32.mrb[0].mxu0
    %v545 = vadd.f32 %v400, %v544
    %v546 = vpop.f32.mrb[0].mxu0
    %547 = vmatprep.mubr.f32.mxu0 0.0
    %548 = vmatmul.mubr.f32.gmra.mrb[0].mxu0 %v66
    %v549 = vpop.f32.mrb[0].mxu0
    %v550 = vadd.f32 %v405, %v549
    %v551 = vpop.f32.mrb[0].mxu0
    %552 = vmatprep.mubr.f32.mxu0 0.0
    %553 = vmatmul.mubr.f32.gmra.mrb[0].mxu0 %v69
    %v554 = vpop.f32.mrb[0].mxu0
    %v555 = vadd.f32 %v410, %v554
    %v556 = vpop.f32.mrb[0].mxu0
    %557 = vmatprep.mubr.f32.mxu0 0.0
    %558 = vmatmul.mubr.f32.gmra.mrb[0].mxu0 %v72
    %v559 = vpop.f32.mrb[0].mxu0
    %v560 = vadd.f32 %v415, %v559
    %v561 = vpop.f32.mrb[0].mxu0
    %562 = vmatprep.mubr.f32.mxu0 0.0
    %563 = vmatmul.mubr.f32.gmra.mrb[0].mxu0 %v75
    %v564 = vpop.f32.mrb[0].mxu0
    %v565 = vadd.f32 %v420, %v564
    %v566 = vpop.f32.mrb[0].mxu0
    %567 = vmatprep.mubr.f32.mxu0 0.0
    %568 = vmatmul.mubr.f32.gmra.mrb[0].mxu0 %v78
    %v569 = vpop.f32.mrb[0].mxu0
    %v570 = vadd.f32 %v425, %v569
    %v571 = vpop.f32.mrb[0].mxu0
    %572 = vmatprep.mubr.f32.mxu0 0.0
    %573 = vmatmul.mubr.f32.gmra.mrb[0].mxu0 %v81
    %v574 = vpop.f32.mrb[0].mxu0
    %v575 = vadd.f32 %v430, %v574
    %v576 = vpop.f32.mrb[0].mxu0
    %577 = vmatprep.mubr.f32.mxu0 0.0
    %578 = vmatmul.mubr.f32.gmra.mrb[0].mxu0 %v84
    %v579 = vpop.f32.mrb[0].mxu0
    %v580 = vadd.f32 %v435, %v579
    %v581 = vpop.f32.mrb[0].mxu0
    %582 = vmatprep.mubr.f32.mxu0 0.0
    %583 = vmatmul.mubr.f32.gmra.mrb[0].mxu0 %v87
    %v584 = vpop.f32.mrb[0].mxu0
    %v585 = vadd.f32 %v440, %v584
    %v586 = vpop.f32.mrb[0].mxu0
    %587 = vmatprep.mubr.f32.mxu0 0.0
    %588 = vmatmul.mubr.f32.gmra.mrb[0].mxu0 %v90
    %v589 = vpop.f32.mrb[0].mxu0
    %v590 = vadd.f32 %v445, %v589
    %v591 = vpop.f32.mrb[0].mxu0
    %592 = vmatprep.mubr.f32.mxu0 0.0
    %593 = vmatmul.mubr.f32.gmra.mrb[0].mxu0 %v93
    %v594 = vpop.f32.mrb[0].mxu0
    %v595 = vadd.f32 %v450, %v594
    %v596 = vpop.f32.mrb[0].mxu0
    %597 = vmatprep.mubr.f32.mxu0 0.0
    %598 = vmatmul.mubr.f32.gmra.mrb[0].mxu0 %v96
    %v599 = vpop.f32.mrb[0].mxu0
    %v600 = vadd.f32 %v455, %v599
    %v601 = vpop.f32.mrb[0].mxu0
    %602 = vmatprep.mubr.f32.mxu0 0.0
    %603 = vmatmul.mubr.f32.gmra.mrb[0].mxu0 %v99
    %v604 = vpop.f32.mrb[0].mxu0
    %v605 = vadd.f32 %v460, %v604
    %v606 = vpop.f32.mrb[0].mxu0
    %607 = vmatprep.mubr.f32.mxu0 0.0
    %608 = vmatmul.mubr.f32.gmra.mrb[0].mxu0 %v102
    %v609 = vpop.f32.mrb[0].mxu0
    %v610 = vadd.f32 %v465, %v609
    %v611 = vpop.f32.mrb[0].mxu0
    %612 = vdwg.mxu0
    %s613 = scalar_lea.vmem %s5, 1
    %v614 = vld [vmem:[%s613] sm:$0x1]
    %v616 = vlaneseq
    %v617 = vshrl.u32 %v616, 7
    %v618 = vsub.s32 0, %v617
    %v619 = vrot.slane %v614, %v618
    %v621 = vadd.f32 %v535, %v619
    %v622 = vadd.f32 %v540, %v619
    %v623 = vadd.f32 %v545, %v619
    %v624 = vadd.f32 %v550, %v619
    %v625 = vadd.f32 %v555, %v619
    %v626 = vadd.f32 %v560, %v619
    %v627 = vadd.f32 %v565, %v619
    %v628 = vadd.f32 %v570, %v619
    %v629 = vadd.f32 %v575, %v619
    %v630 = vadd.f32 %v580, %v619
    %v631 = vadd.f32 %v585, %v619
    %v632 = vadd.f32 %v590, %v619
    %v633 = vadd.f32 %v595, %v619
    %v634 = vadd.f32 %v600, %v619
    %v635 = vadd.f32 %v605, %v619
    %v636 = vadd.f32 %v610, %v619
    %v637 = vxor.u32 %v621, 2147483648
    %v638 = vxor.u32 %v622, 2147483648
    %v639 = vxor.u32 %v623, 2147483648
    %v640 = vxor.u32 %v624, 2147483648
    %v641 = vxor.u32 %v625, 2147483648
    %v642 = vxor.u32 %v626, 2147483648
    %v643 = vxor.u32 %v627, 2147483648
    %v644 = vxor.u32 %v628, 2147483648
    %v645 = vxor.u32 %v629, 2147483648
    %v646 = vxor.u32 %v630, 2147483648
    %v647 = vxor.u32 %v631, 2147483648
    %v648 = vxor.u32 %v632, 2147483648
    %v649 = vxor.u32 %v633, 2147483648
    %v650 = vxor.u32 %v634, 2147483648
    %v651 = vxor.u32 %v635, 2147483648
    %v652 = vxor.u32 %v636, 2147483648
    %v653 = vmul.f32 %v637, 1.442695
    %v654 = vpow.pop %v653
    %v655 = vmul.f32 %v638, 1.442695
    %v656 = vpow.pop %v655
    %v657 = vmul.f32 %v639, 1.442695
    %v658 = vpow.pop %v657
    %v659 = vmul.f32 %v640, 1.442695
    %v660 = vpow.pop %v659
    %v661 = vmul.f32 %v641, 1.442695
    %v662 = vpow.pop %v661
    %v663 = vmul.f32 %v642, 1.442695
    %v664 = vpow.pop %v663
    %v665 = vmul.f32 %v643, 1.442695
    %v666 = vpow.pop %v665
    %v667 = vmul.f32 %v644, 1.442695
    %v668 = vpow.pop %v667
    %v669 = vmul.f32 %v645, 1.442695
    %v670 = vpow.pop %v669
    %v671 = vmul.f32 %v646, 1.442695
    %v672 = vpow.pop %v671
    %v673 = vmul.f32 %v647, 1.442695
    %v674 = vpow.pop %v673
    %v675 = vmul.f32 %v648, 1.442695
    %v676 = vpow.pop %v675
    %v677 = vmul.f32 %v649, 1.442695
    %v678 = vpow.pop %v677
    %v679 = vmul.f32 %v650, 1.442695
    %v680 = vpow.pop %v679
    %v681 = vmul.f32 %v651, 1.442695
    %v682 = vpow.pop %v681
    %v683 = vmul.f32 %v652, 1.442695
    %v684 = vpow.pop %v683
    %v685 = vadd.f32 %v654, 1.0
    %v686 = vadd.f32 %v656, 1.0
    %v687 = vadd.f32 %v658, 1.0
    %v688 = vadd.f32 %v660, 1.0
    %v689 = vadd.f32 %v662, 1.0
    %v690 = vadd.f32 %v664, 1.0
    %v691 = vadd.f32 %v666, 1.0
    %v692 = vadd.f32 %v668, 1.0
    %v693 = vadd.f32 %v670, 1.0
    %v694 = vadd.f32 %v672, 1.0
    %v695 = vadd.f32 %v674, 1.0
    %v696 = vadd.f32 %v676, 1.0
    %v697 = vadd.f32 %v678, 1.0
    %v698 = vadd.f32 %v680, 1.0
    %v699 = vadd.f32 %v682, 1.0
    %v700 = vadd.f32 %v684, 1.0
    %v701 = vrcp.pop %v685
    %v702 = vmul.f32 1.0, %v701
    %v703 = vrcp.pop %v686
    %v704 = vmul.f32 1.0, %v703
    %v705 = vrcp.pop %v687
    %v706 = vmul.f32 1.0, %v705
    %v707 = vrcp.pop %v688
    %v708 = vmul.f32 1.0, %v707
    %v709 = vrcp.pop %v689
    %v710 = vmul.f32 1.0, %v709
    %v711 = vrcp.pop %v690
    %v712 = vmul.f32 1.0, %v711
    %v713 = vrcp.pop %v691
    %v714 = vmul.f32 1.0, %v713
    %v715 = vrcp.pop %v692
    %v716 = vmul.f32 1.0, %v715
    %v717 = vrcp.pop %v693
    %v718 = vmul.f32 1.0, %v717
    %v719 = vrcp.pop %v694
    %v720 = vmul.f32 1.0, %v719
    %v721 = vrcp.pop %v695
    %v722 = vmul.f32 1.0, %v721
    %v723 = vrcp.pop %v696
    %v724 = vmul.f32 1.0, %v723
    %v725 = vrcp.pop %v697
    %v726 = vmul.f32 1.0, %v725
    %v727 = vrcp.pop %v698
    %v728 = vmul.f32 1.0, %v727
    %v729 = vrcp.pop %v699
    %v730 = vmul.f32 1.0, %v729
    %v731 = vrcp.pop %v700
    %v732 = vmul.f32 1.0, %v731
    %s733 = scalar_lea.vmem %s4, 96
    %v734 = vld [vmem:[%s733] sm:$0xff]
    %v735 = vld [vmem:[%s733 + $0x8] sm:$0xff]
    %v736 = vld [vmem:[%s733 + $0x10] sm:$0xff]
    %v737 = vld [vmem:[%s733 + $0x18] sm:$0xff]
    %s738 = scalar_lea.vmem %s4, 128
    %v739 = vld [vmem:[%s738] sm:$0xff]
    %v740 = vld [vmem:[%s738 + $0x8] sm:$0xff]
    %v741 = vld [vmem:[%s738 + $0x10] sm:$0xff]
    %v742 = vld [vmem:[%s738 + $0x18] sm:$0xff]
    %743 = vmatprep.subr.mxu0 0.0
    %744 = vmatpush1.msra.mxu0 %v739
    %745 = vmatprep.subr.mxu0 0.0
    %746 = vmatpush1.msra.mxu0 %v740
    %747 = vmatprep.subr.mxu0 0.0
    %748 = vmatpush1.msra.mxu0 %v741
    %749 = vmatprep.subr.mxu0 0.0
    %750 = vmatpush1.msra.mxu0 %v742
    %751 = vmatprep.subr.mxu0 0.0
    %752 = vmatpush1.msra.mxu0 0.0
    %753 = vmatprep.subr.mxu0 0.0
    %754 = vmatpush1.msra.mxu0 0.0
    %755 = vmatprep.subr.mxu0 0.0
    %756 = vmatpush1.msra.mxu0 0.0
    %757 = vmatprep.subr.mxu0 0.0
    %758 = vmatpush1.msra.mxu0 0.0
    %759 = vmatprep.subr.mxu0 0.0
    %760 = vmatpush1.msra.mxu0 0.0
    %761 = vmatprep.subr.mxu0 0.0
    %762 = vmatpush1.msra.mxu0 0.0
    %763 = vmatprep.subr.mxu0 0.0
    %764 = vmatpush1.msra.mxu0 0.0
    %765 = vmatprep.subr.mxu0 0.0
    %766 = vmatpush1.msra.mxu0 0.0
    %767 = vmatprep.subr.mxu0 0.0
    %768 = vmatpush1.msra.mxu0 0.0
    %769 = vmatprep.subr.mxu0 0.0
    %770 = vmatpush1.msra.mxu0 0.0
    %771 = vmatprep.subr.mxu0 0.0
    %772 = vmatpush1.msra.mxu0 0.0
    %773 = vmatprep.subr.mxu0 0.0
    %774 = vmatpush1.msra.mxu0 0.0
    %775 = vmatprep.subr.mxu0 0.0
    %776 = vmatpush1.msra.mxu0 0.0
    %777 = vmatprep.subr.mxu0 0.0
    %778 = vmatpush1.msra.mxu0 0.0
    %779 = vmatprep.subr.mxu0 0.0
    %780 = vmatpush1.msra.mxu0 0.0
    %781 = vmatprep.subr.mxu0 0.0
    %782 = vmatpush1.msra.mxu0 0.0
    %783 = vmatprep.subr.mxu0 0.0
    %784 = vmatpush1.msra.mxu0 0.0
    %785 = vmatprep.subr.mxu0 0.0
    %786 = vmatpush1.msra.mxu0 0.0
    %787 = vmatprep.subr.mxu0 0.0
    %788 = vmatpush1.msra.mxu0 0.0
    %789 = vmatprep.subr.mxu0 0.0
    %790 = vmatpush1.msra.mxu0 0.0
    %791 = vmatprep.subr.mxu0 0.0
    %792 = vmatpush1.msra.mxu0 0.0
    %793 = vmatprep.subr.mxu0 0.0
    %794 = vmatpush1.msra.mxu0 0.0
    %795 = vmatprep.subr.mxu0 0.0
    %796 = vmatpush1.msra.mxu0 0.0
    %797 = vmatprep.subr.mxu0 0.0
    %798 = vmatpush1.msra.mxu0 0.0
    %799 = vmatprep.subr.mxu0 0.0
    %800 = vmatpush1.msra.mxu0 0.0
    %801 = vmatprep.subr.mxu0 0.0
    %802 = vmatpush1.msra.mxu0 0.0
    %803 = vmatprep.subr.mxu0 0.0
    %804 = vmatpush1.msra.mxu0 0.0
    %805 = vmatprep.subr.mxu0 0.0
    %806 = vmatpush1.msra.mxu0 0.0
    %807 = vmatprep.mubr.f32.mxu0 0.0
    %808 = vmatmul.mubr.f32.gmra.mrb[0].mxu0 %v276
    %v809 = vpop.f32.mrb[0].mxu0
    %v810 = vadd.f32 0.0, %v809
    %v811 = vpop.f32.mrb[0].mxu0
    %812 = vmatprep.mubr.f32.mxu0 0.0
    %813 = vmatmul.mubr.f32.gmra.mrb[0].mxu0 %v279
    %v814 = vpop.f32.mrb[0].mxu0
    %v815 = vadd.f32 0.0, %v814
    %v816 = vpop.f32.mrb[0].mxu0
    %817 = vmatprep.mubr.f32.mxu0 0.0
    %818 = vmatmul.mubr.f32.gmra.mrb[0].mxu0 %v282
    %v819 = vpop.f32.mrb[0].mxu0
    %v820 = vadd.f32 0.0, %v819
    %v821 = vpop.f32.mrb[0].mxu0
    %822 = vmatprep.mubr.f32.mxu0 0.0
    %823 = vmatmul.mubr.f32.gmra.mrb[0].mxu0 %v285
    %v824 = vpop.f32.mrb[0].mxu0
    %v825 = vadd.f32 0.0, %v824
    %v826 = vpop.f32.mrb[0].mxu0
    %827 = vmatprep.mubr.f32.mxu0 0.0
    %828 = vmatmul.mubr.f32.gmra.mrb[0].mxu0 %v288
    %v829 = vpop.f32.mrb[0].mxu0
    %v830 = vadd.f32 0.0, %v829
    %v831 = vpop.f32.mrb[0].mxu0
    %832 = vmatprep.mubr.f32.mxu0 0.0
    %833 = vmatmul.mubr.f32.gmra.mrb[0].mxu0 %v291
    %v834 = vpop.f32.mrb[0].mxu0
    %v835 = vadd.f32 0.0, %v834
    %v836 = vpop.f32.mrb[0].mxu0
    %837 = vmatprep.mubr.f32.mxu0 0.0
    %838 = vmatmul.mubr.f32.gmra.mrb[0].mxu0 %v294
    %v839 = vpop.f32.mrb[0].mxu0
    %v840 = vadd.f32 0.0, %v839
    %v841 = vpop.f32.mrb[0].mxu0
    %842 = vmatprep.mubr.f32.mxu0 0.0
    %843 = vmatmul.mubr.f32.gmra.mrb[0].mxu0 %v297
    %v844 = vpop.f32.mrb[0].mxu0
    %v845 = vadd.f32 0.0, %v844
    %v846 = vpop.f32.mrb[0].mxu0
    %847 = vmatprep.mubr.f32.mxu0 0.0
    %848 = vmatmul.mubr.f32.gmra.mrb[0].mxu0 %v300
    %v849 = vpop.f32.mrb[0].mxu0
    %v850 = vadd.f32 0.0, %v849
    %v851 = vpop.f32.mrb[0].mxu0
    %852 = vmatprep.mubr.f32.mxu0 0.0
    %853 = vmatmul.mubr.f32.gmra.mrb[0].mxu0 %v303
    %v854 = vpop.f32.mrb[0].mxu0
    %v855 = vadd.f32 0.0, %v854
    %v856 = vpop.f32.mrb[0].mxu0
    %857 = vmatprep.mubr.f32.mxu0 0.0
    %858 = vmatmul.mubr.f32.gmra.mrb[0].mxu0 %v306
    %v859 = vpop.f32.mrb[0].mxu0
    %v860 = vadd.f32 0.0, %v859
    %v861 = vpop.f32.mrb[0].mxu0
    %862 = vmatprep.mubr.f32.mxu0 0.0
    %863 = vmatmul.mubr.f32.gmra.mrb[0].mxu0 %v309
    %v864 = vpop.f32.mrb[0].mxu0
    %v865 = vadd.f32 0.0, %v864
    %v866 = vpop.f32.mrb[0].mxu0
    %867 = vmatprep.mubr.f32.mxu0 0.0
    %868 = vmatmul.mubr.f32.gmra.mrb[0].mxu0 %v312
    %v869 = vpop.f32.mrb[0].mxu0
    %v870 = vadd.f32 0.0, %v869
    %v871 = vpop.f32.mrb[0].mxu0
    %872 = vmatprep.mubr.f32.mxu0 0.0
    %873 = vmatmul.mubr.f32.gmra.mrb[0].mxu0 %v315
    %v874 = vpop.f32.mrb[0].mxu0
    %v875 = vadd.f32 0.0, %v874
    %v876 = vpop.f32.mrb[0].mxu0
    %877 = vmatprep.mubr.f32.mxu0 0.0
    %878 = vmatmul.mubr.f32.gmra.mrb[0].mxu0 %v318
    %v879 = vpop.f32.mrb[0].mxu0
    %v880 = vadd.f32 0.0, %v879
    %v881 = vpop.f32.mrb[0].mxu0
    %882 = vmatprep.mubr.f32.mxu0 0.0
    %883 = vmatmul.mubr.f32.gmra.mrb[0].mxu0 %v321
    %v884 = vpop.f32.mrb[0].mxu0
    %v885 = vadd.f32 0.0, %v884
    %v886 = vpop.f32.mrb[0].mxu0
    %887 = vdwg.mxu0
    %888 = vmatprep.subr.mxu0 0.0
    %889 = vmatpush1.msra.mxu0 %v734
    %890 = vmatprep.subr.mxu0 0.0
    %891 = vmatpush1.msra.mxu0 %v735
    %892 = vmatprep.subr.mxu0 0.0
    %893 = vmatpush1.msra.mxu0 %v736
    %894 = vmatprep.subr.mxu0 0.0
    %895 = vmatpush1.msra.mxu0 %v737
    %896 = vmatprep.subr.mxu0 0.0
    %897 = vmatpush1.msra.mxu0 0.0
    %898 = vmatprep.subr.mxu0 0.0
    %899 = vmatpush1.msra.mxu0 0.0
    %900 = vmatprep.subr.mxu0 0.0
    %901 = vmatpush1.msra.mxu0 0.0
    %902 = vmatprep.subr.mxu0 0.0
    %903 = vmatpush1.msra.mxu0 0.0
    %904 = vmatprep.subr.mxu0 0.0
    %905 = vmatpush1.msra.mxu0 0.0
    %906 = vmatprep.subr.mxu0 0.0
    %907 = vmatpush1.msra.mxu0 0.0
    %908 = vmatprep.subr.mxu0 0.0
    %909 = vmatpush1.msra.mxu0 0.0
    %910 = vmatprep.subr.mxu0 0.0
    %911 = vmatpush1.msra.mxu0 0.0
    %912 = vmatprep.subr.mxu0 0.0
    %913 = vmatpush1.msra.mxu0 0.0
    %914 = vmatprep.subr.mxu0 0.0
    %915 = vmatpush1.msra.mxu0 0.0
    %916 = vmatprep.subr.mxu0 0.0
    %917 = vmatpush1.msra.mxu0 0.0
    %918 = vmatprep.subr.mxu0 0.0
    %919 = vmatpush1.msra.mxu0 0.0
    %920 = vmatprep.subr.mxu0 0.0
    %921 = vmatpush1.msra.mxu0 0.0
    %922 = vmatprep.subr.mxu0 0.0
    %923 = vmatpush1.msra.mxu0 0.0
    %924 = vmatprep.subr.mxu0 0.0
    %925 = vmatpush1.msra.mxu0 0.0
    %926 = vmatprep.subr.mxu0 0.0
    %927 = vmatpush1.msra.mxu0 0.0
    %928 = vmatprep.subr.mxu0 0.0
    %929 = vmatpush1.msra.mxu0 0.0
    %930 = vmatprep.subr.mxu0 0.0
    %931 = vmatpush1.msra.mxu0 0.0
    %932 = vmatprep.subr.mxu0 0.0
    %933 = vmatpush1.msra.mxu0 0.0
    %934 = vmatprep.subr.mxu0 0.0
    %935 = vmatpush1.msra.mxu0 0.0
    %936 = vmatprep.subr.mxu0 0.0
    %937 = vmatpush1.msra.mxu0 0.0
    %938 = vmatprep.subr.mxu0 0.0
    %939 = vmatpush1.msra.mxu0 0.0
    %940 = vmatprep.subr.mxu0 0.0
    %941 = vmatpush1.msra.mxu0 0.0
    %942 = vmatprep.subr.mxu0 0.0
    %943 = vmatpush1.msra.mxu0 0.0
    %944 = vmatprep.subr.mxu0 0.0
    %945 = vmatpush1.msra.mxu0 0.0
    %946 = vmatprep.subr.mxu0 0.0
    %947 = vmatpush1.msra.mxu0 0.0
    %948 = vmatprep.subr.mxu0 0.0
    %949 = vmatpush1.msra.mxu0 0.0
    %950 = vmatprep.subr.mxu0 0.0
    %951 = vmatpush1.msra.mxu0 0.0
    %952 = vmatprep.mubr.f32.mxu0 0.0
    %953 = vmatmul.mubr.f32.gmra.mrb[0].mxu0 %v57
    %v954 = vpop.f32.mrb[0].mxu0
    %v955 = vadd.f32 %v810, %v954
    %v956 = vpop.f32.mrb[0].mxu0
    %957 = vmatprep.mubr.f32.mxu0 0.0
    %958 = vmatmul.mubr.f32.gmra.mrb[0].mxu0 %v60
    %v959 = vpop.f32.mrb[0].mxu0
    %v960 = vadd.f32 %v815, %v959
    %v961 = vpop.f32.mrb[0].mxu0
    %962 = vmatprep.mubr.f32.mxu0 0.0
    %963 = vmatmul.mubr.f32.gmra.mrb[0].mxu0 %v63
    %v964 = vpop.f32.mrb[0].mxu0
    %v965 = vadd.f32 %v820, %v964
    %v966 = vpop.f32.mrb[0].mxu0
    %967 = vmatprep.mubr.f32.mxu0 0.0
    %968 = vmatmul.mubr.f32.gmra.mrb[0].mxu0 %v66
    %v969 = vpop.f32.mrb[0].mxu0
    %v970 = vadd.f32 %v825, %v969
    %v971 = vpop.f32.mrb[0].mxu0
    %972 = vmatprep.mubr.f32.mxu0 0.0
    %973 = vmatmul.mubr.f32.gmra.mrb[0].mxu0 %v69
    %v974 = vpop.f32.mrb[0].mxu0
    %v975 = vadd.f32 %v830, %v974
    %v976 = vpop.f32.mrb[0].mxu0
    %977 = vmatprep.mubr.f32.mxu0 0.0
    %978 = vmatmul.mubr.f32.gmra.mrb[0].mxu0 %v72
    %v979 = vpop.f32.mrb[0].mxu0
    %v980 = vadd.f32 %v835, %v979
    %v981 = vpop.f32.mrb[0].mxu0
    %982 = vmatprep.mubr.f32.mxu0 0.0
    %983 = vmatmul.mubr.f32.gmra.mrb[0].mxu0 %v75
    %v984 = vpop.f32.mrb[0].mxu0
    %v985 = vadd.f32 %v840, %v984
    %v986 = vpop.f32.mrb[0].mxu0
    %987 = vmatprep.mubr.f32.mxu0 0.0
    %988 = vmatmul.mubr.f32.gmra.mrb[0].mxu0 %v78
    %v989 = vpop.f32.mrb[0].mxu0
    %v990 = vadd.f32 %v845, %v989
    %v991 = vpop.f32.mrb[0].mxu0
    %992 = vmatprep.mubr.f32.mxu0 0.0
    %993 = vmatmul.mubr.f32.gmra.mrb[0].mxu0 %v81
    %v994 = vpop.f32.mrb[0].mxu0
    %v995 = vadd.f32 %v850, %v994
    %v996 = vpop.f32.mrb[0].mxu0
    %997 = vmatprep.mubr.f32.mxu0 0.0
    %998 = vmatmul.mubr.f32.gmra.mrb[0].mxu0 %v84
    %v999 = vpop.f32.mrb[0].mxu0
    %v1000 = vadd.f32 %v855, %v999
    %v1001 = vpop.f32.mrb[0].mxu0
    %1002 = vmatprep.mubr.f32.mxu0 0.0
    %1003 = vmatmul.mubr.f32.gmra.mrb[0].mxu0 %v87
    %v1004 = vpop.f32.mrb[0].mxu0
    %v1005 = vadd.f32 %v860, %v1004
    %v1006 = vpop.f32.mrb[0].mxu0
    %1007 = vmatprep.mubr.f32.mxu0 0.0
    %1008 = vmatmul.mubr.f32.gmra.mrb[0].mxu0 %v90
    %v1009 = vpop.f32.mrb[0].mxu0
    %v1010 = vadd.f32 %v865, %v1009
    %v1011 = vpop.f32.mrb[0].mxu0
    %1012 = vmatprep.mubr.f32.mxu0 0.0
    %1013 = vmatmul.mubr.f32.gmra.mrb[0].mxu0 %v93
    %v1014 = vpop.f32.mrb[0].mxu0
    %v1015 = vadd.f32 %v870, %v1014
    %v1016 = vpop.f32.mrb[0].mxu0
    %1017 = vmatprep.mubr.f32.mxu0 0.0
    %1018 = vmatmul.mubr.f32.gmra.mrb[0].mxu0 %v96
    %v1019 = vpop.f32.mrb[0].mxu0
    %v1020 = vadd.f32 %v875, %v1019
    %v1021 = vpop.f32.mrb[0].mxu0
    %1022 = vmatprep.mubr.f32.mxu0 0.0
    %1023 = vmatmul.mubr.f32.gmra.mrb[0].mxu0 %v99
    %v1024 = vpop.f32.mrb[0].mxu0
    %v1025 = vadd.f32 %v880, %v1024
    %v1026 = vpop.f32.mrb[0].mxu0
    %1027 = vmatprep.mubr.f32.mxu0 0.0
    %1028 = vmatmul.mubr.f32.gmra.mrb[0].mxu0 %v102
    %v1029 = vpop.f32.mrb[0].mxu0
    %v1030 = vadd.f32 %v885, %v1029
    %v1031 = vpop.f32.mrb[0].mxu0
    %1032 = vdwg.mxu0
    %s1033 = scalar_lea.vmem %s5, 2
    %v1034 = vld [vmem:[%s1033] sm:$0x1]
    %v1036 = vlaneseq
    %v1037 = vshrl.u32 %v1036, 7
    %v1038 = vsub.s32 0, %v1037
    %v1039 = vrot.slane %v1034, %v1038
    %v1041 = vadd.f32 %v955, %v1039
    %v1042 = vadd.f32 %v960, %v1039
    %v1043 = vadd.f32 %v965, %v1039
    %v1044 = vadd.f32 %v970, %v1039
    %v1045 = vadd.f32 %v975, %v1039
    %v1046 = vadd.f32 %v980, %v1039
    %v1047 = vadd.f32 %v985, %v1039
    %v1048 = vadd.f32 %v990, %v1039
    %v1049 = vadd.f32 %v995, %v1039
    %v1050 = vadd.f32 %v1000, %v1039
    %v1051 = vadd.f32 %v1005, %v1039
    %v1052 = vadd.f32 %v1010, %v1039
    %v1053 = vadd.f32 %v1015, %v1039
    %v1054 = vadd.f32 %v1020, %v1039
    %v1055 = vadd.f32 %v1025, %v1039
    %v1056 = vadd.f32 %v1030, %v1039
    %v1057 = vxor.u32 %v1041, 2147483648
    %v1058 = vxor.u32 %v1042, 2147483648
    %v1059 = vxor.u32 %v1043, 2147483648
    %v1060 = vxor.u32 %v1044, 2147483648
    %v1061 = vxor.u32 %v1045, 2147483648
    %v1062 = vxor.u32 %v1046, 2147483648
    %v1063 = vxor.u32 %v1047, 2147483648
    %v1064 = vxor.u32 %v1048, 2147483648
    %v1065 = vxor.u32 %v1049, 2147483648
    %v1066 = vxor.u32 %v1050, 2147483648
    %v1067 = vxor.u32 %v1051, 2147483648
    %v1068 = vxor.u32 %v1052, 2147483648
    %v1069 = vxor.u32 %v1053, 2147483648
    %v1070 = vxor.u32 %v1054, 2147483648
    %v1071 = vxor.u32 %v1055, 2147483648
    %v1072 = vxor.u32 %v1056, 2147483648
    %v1073 = vmul.f32 %v1057, 1.442695
    %v1074 = vpow.pop %v1073
    %v1075 = vmul.f32 %v1058, 1.442695
    %v1076 = vpow.pop %v1075
    %v1077 = vmul.f32 %v1059, 1.442695
    %v1078 = vpow.pop %v1077
    %v1079 = vmul.f32 %v1060, 1.442695
    %v1080 = vpow.pop %v1079
    %v1081 = vmul.f32 %v1061, 1.442695
    %v1082 = vpow.pop %v1081
    %v1083 = vmul.f32 %v1062, 1.442695
    %v1084 = vpow.pop %v1083
    %v1085 = vmul.f32 %v1063, 1.442695
    %v1086 = vpow.pop %v1085
    %v1087 = vmul.f32 %v1064, 1.442695
    %v1088 = vpow.pop %v1087
    %v1089 = vmul.f32 %v1065, 1.442695
    %v1090 = vpow.pop %v1089
    %v1091 = vmul.f32 %v1066, 1.442695
    %v1092 = vpow.pop %v1091
    %v1093 = vmul.f32 %v1067, 1.442695
    %v1094 = vpow.pop %v1093
    %v1095 = vmul.f32 %v1068, 1.442695
    %v1096 = vpow.pop %v1095
    %v1097 = vmul.f32 %v1069, 1.442695
    %v1098 = vpow.pop %v1097
    %v1099 = vmul.f32 %v1070, 1.442695
    %v1100 = vpow.pop %v1099
    %v1101 = vmul.f32 %v1071, 1.442695
    %v1102 = vpow.pop %v1101
    %v1103 = vmul.f32 %v1072, 1.442695
    %v1104 = vpow.pop %v1103
    %v1105 = vadd.f32 %v1074, 1.0
    %v1106 = vadd.f32 %v1076, 1.0
    %v1107 = vadd.f32 %v1078, 1.0
    %v1108 = vadd.f32 %v1080, 1.0
    %v1109 = vadd.f32 %v1082, 1.0
    %v1110 = vadd.f32 %v1084, 1.0
    %v1111 = vadd.f32 %v1086, 1.0
    %v1112 = vadd.f32 %v1088, 1.0
    %v1113 = vadd.f32 %v1090, 1.0
    %v1114 = vadd.f32 %v1092, 1.0
    %v1115 = vadd.f32 %v1094, 1.0
    %v1116 = vadd.f32 %v1096, 1.0
    %v1117 = vadd.f32 %v1098, 1.0
    %v1118 = vadd.f32 %v1100, 1.0
    %v1119 = vadd.f32 %v1102, 1.0
    %v1120 = vadd.f32 %v1104, 1.0
    %v1121 = vrcp.pop %v1105
    %v1122 = vmul.f32 1.0, %v1121
    %v1123 = vrcp.pop %v1106
    %v1124 = vmul.f32 1.0, %v1123
    %v1125 = vrcp.pop %v1107
    %v1126 = vmul.f32 1.0, %v1125
    %v1127 = vrcp.pop %v1108
    %v1128 = vmul.f32 1.0, %v1127
    %v1129 = vrcp.pop %v1109
    %v1130 = vmul.f32 1.0, %v1129
    %v1131 = vrcp.pop %v1110
    %v1132 = vmul.f32 1.0, %v1131
    %v1133 = vrcp.pop %v1111
    %v1134 = vmul.f32 1.0, %v1133
    %v1135 = vrcp.pop %v1112
    %v1136 = vmul.f32 1.0, %v1135
    %v1137 = vrcp.pop %v1113
    %v1138 = vmul.f32 1.0, %v1137
    %v1139 = vrcp.pop %v1114
    %v1140 = vmul.f32 1.0, %v1139
    %v1141 = vrcp.pop %v1115
    %v1142 = vmul.f32 1.0, %v1141
    %v1143 = vrcp.pop %v1116
    %v1144 = vmul.f32 1.0, %v1143
    %v1145 = vrcp.pop %v1117
    %v1146 = vmul.f32 1.0, %v1145
    %v1147 = vrcp.pop %v1118
    %v1148 = vmul.f32 1.0, %v1147
    %v1149 = vrcp.pop %v1119
    %v1150 = vmul.f32 1.0, %v1149
    %v1151 = vrcp.pop %v1120
    %v1152 = vmul.f32 1.0, %v1151
    %s1153 = scalar_lea.vmem %s4, 160
    %v1154 = vld [vmem:[%s1153] sm:$0xff]
    %v1155 = vld [vmem:[%s1153 + $0x8] sm:$0xff]
    %v1156 = vld [vmem:[%s1153 + $0x10] sm:$0xff]
    %v1157 = vld [vmem:[%s1153 + $0x18] sm:$0xff]
    %s1158 = scalar_lea.vmem %s4, 192
    %v1159 = vld [vmem:[%s1158] sm:$0xff]
    %v1160 = vld [vmem:[%s1158 + $0x8] sm:$0xff]
    %v1161 = vld [vmem:[%s1158 + $0x10] sm:$0xff]
    %v1162 = vld [vmem:[%s1158 + $0x18] sm:$0xff]
    %1163 = vmatprep.subr.mxu0 0.0
    %1164 = vmatpush1.msra.mxu0 %v1159
    %1165 = vmatprep.subr.mxu0 0.0
    %1166 = vmatpush1.msra.mxu0 %v1160
    %1167 = vmatprep.subr.mxu0 0.0
    %1168 = vmatpush1.msra.mxu0 %v1161
    %1169 = vmatprep.subr.mxu0 0.0
    %1170 = vmatpush1.msra.mxu0 %v1162
    %1171 = vmatprep.subr.mxu0 0.0
    %1172 = vmatpush1.msra.mxu0 0.0
    %1173 = vmatprep.subr.mxu0 0.0
    %1174 = vmatpush1.msra.mxu0 0.0
    %1175 = vmatprep.subr.mxu0 0.0
    %1176 = vmatpush1.msra.mxu0 0.0
    %1177 = vmatprep.subr.mxu0 0.0
    %1178 = vmatpush1.msra.mxu0 0.0
    %1179 = vmatprep.subr.mxu0 0.0
    %1180 = vmatpush1.msra.mxu0 0.0
    %1181 = vmatprep.subr.mxu0 0.0
    %1182 = vmatpush1.msra.mxu0 0.0
    %1183 = vmatprep.subr.mxu0 0.0
    %1184 = vmatpush1.msra.mxu0 0.0
    %1185 = vmatprep.subr.mxu0 0.0
    %1186 = vmatpush1.msra.mxu0 0.0
    %1187 = vmatprep.subr.mxu0 0.0
    %1188 = vmatpush1.msra.mxu0 0.0
    %1189 = vmatprep.subr.mxu0 0.0
    %1190 = vmatpush1.msra.mxu0 0.0
    %1191 = vmatprep.subr.mxu0 0.0
    %1192 = vmatpush1.msra.mxu0 0.0
    %1193 = vmatprep.subr.mxu0 0.0
    %1194 = vmatpush1.msra.mxu0 0.0
    %1195 = vmatprep.subr.mxu0 0.0
    %1196 = vmatpush1.msra.mxu0 0.0
    %1197 = vmatprep.subr.mxu0 0.0
    %1198 = vmatpush1.msra.mxu0 0.0
    %1199 = vmatprep.subr.mxu0 0.0
    %1200 = vmatpush1.msra.mxu0 0.0
    %1201 = vmatprep.subr.mxu0 0.0
    %1202 = vmatpush1.msra.mxu0 0.0
    %1203 = vmatprep.subr.mxu0 0.0
    %1204 = vmatpush1.msra.mxu0 0.0
    %1205 = vmatprep.subr.mxu0 0.0
    %1206 = vmatpush1.msra.mxu0 0.0
    %1207 = vmatprep.subr.mxu0 0.0
    %1208 = vmatpush1.msra.mxu0 0.0
    %1209 = vmatprep.subr.mxu0 0.0
    %1210 = vmatpush1.msra.mxu0 0.0
    %1211 = vmatprep.subr.mxu0 0.0
    %1212 = vmatpush1.msra.mxu0 0.0
    %1213 = vmatprep.subr.mxu0 0.0
    %1214 = vmatpush1.msra.mxu0 0.0
    %1215 = vmatprep.subr.mxu0 0.0
    %1216 = vmatpush1.msra.mxu0 0.0
    %1217 = vmatprep.subr.mxu0 0.0
    %1218 = vmatpush1.msra.mxu0 0.0
    %1219 = vmatprep.subr.mxu0 0.0
    %1220 = vmatpush1.msra.mxu0 0.0
    %1221 = vmatprep.subr.mxu0 0.0
    %1222 = vmatpush1.msra.mxu0 0.0
    %1223 = vmatprep.subr.mxu0 0.0
    %1224 = vmatpush1.msra.mxu0 0.0
    %1225 = vmatprep.subr.mxu0 0.0
    %1226 = vmatpush1.msra.mxu0 0.0
    %1227 = vmatprep.mubr.f32.mxu0 0.0
    %1228 = vmatmul.mubr.f32.gmra.mrb[0].mxu0 %v276
    %v1229 = vpop.f32.mrb[0].mxu0
    %v1230 = vadd.f32 0.0, %v1229
    %v1231 = vpop.f32.mrb[0].mxu0
    %1232 = vmatprep.mubr.f32.mxu0 0.0
    %1233 = vmatmul.mubr.f32.gmra.mrb[0].mxu0 %v279
    %v1234 = vpop.f32.mrb[0].mxu0
    %v1235 = vadd.f32 0.0, %v1234
    %v1236 = vpop.f32.mrb[0].mxu0
    %1237 = vmatprep.mubr.f32.mxu0 0.0
    %1238 = vmatmul.mubr.f32.gmra.mrb[0].mxu0 %v282
    %v1239 = vpop.f32.mrb[0].mxu0
    %v1240 = vadd.f32 0.0, %v1239
    %v1241 = vpop.f32.mrb[0].mxu0
    %1242 = vmatprep.mubr.f32.mxu0 0.0
    %1243 = vmatmul.mubr.f32.gmra.mrb[0].mxu0 %v285
    %v1244 = vpop.f32.mrb[0].mxu0
    %v1245 = vadd.f32 0.0, %v1244
    %v1246 = vpop.f32.mrb[0].mxu0
    %1247 = vmatprep.mubr.f32.mxu0 0.0
    %1248 = vmatmul.mubr.f32.gmra.mrb[0].mxu0 %v288
    %v1249 = vpop.f32.mrb[0].mxu0
    %v1250 = vadd.f32 0.0, %v1249
    %v1251 = vpop.f32.mrb[0].mxu0
    %1252 = vmatprep.mubr.f32.mxu0 0.0
    %1253 = vmatmul.mubr.f32.gmra.mrb[0].mxu0 %v291
    %v1254 = vpop.f32.mrb[0].mxu0
    %v1255 = vadd.f32 0.0, %v1254
    %v1256 = vpop.f32.mrb[0].mxu0
    %1257 = vmatprep.mubr.f32.mxu0 0.0
    %1258 = vmatmul.mubr.f32.gmra.mrb[0].mxu0 %v294
    %v1259 = vpop.f32.mrb[0].mxu0
    %v1260 = vadd.f32 0.0, %v1259
    %v1261 = vpop.f32.mrb[0].mxu0
    %1262 = vmatprep.mubr.f32.mxu0 0.0
    %1263 = vmatmul.mubr.f32.gmra.mrb[0].mxu0 %v297
    %v1264 = vpop.f32.mrb[0].mxu0
    %v1265 = vadd.f32 0.0, %v1264
    %v1266 = vpop.f32.mrb[0].mxu0
    %1267 = vmatprep.mubr.f32.mxu0 0.0
    %1268 = vmatmul.mubr.f32.gmra.mrb[0].mxu0 %v300
    %v1269 = vpop.f32.mrb[0].mxu0
    %v1270 = vadd.f32 0.0, %v1269
    %v1271 = vpop.f32.mrb[0].mxu0
    %1272 = vmatprep.mubr.f32.mxu0 0.0
    %1273 = vmatmul.mubr.f32.gmra.mrb[0].mxu0 %v303
    %v1274 = vpop.f32.mrb[0].mxu0
    %v1275 = vadd.f32 0.0, %v1274
    %v1276 = vpop.f32.mrb[0].mxu0
    %1277 = vmatprep.mubr.f32.mxu0 0.0
    %1278 = vmatmul.mubr.f32.gmra.mrb[0].mxu0 %v306
    %v1279 = vpop.f32.mrb[0].mxu0
    %v1280 = vadd.f32 0.0, %v1279
    %v1281 = vpop.f32.mrb[0].mxu0
    %1282 = vmatprep.mubr.f32.mxu0 0.0
    %1283 = vmatmul.mubr.f32.gmra.mrb[0].mxu0 %v309
    %v1284 = vpop.f32.mrb[0].mxu0
    %v1285 = vadd.f32 0.0, %v1284
    %v1286 = vpop.f32.mrb[0].mxu0
    %1287 = vmatprep.mubr.f32.mxu0 0.0
    %1288 = vmatmul.mubr.f32.gmra.mrb[0].mxu0 %v312
    %v1289 = vpop.f32.mrb[0].mxu0
    %v1290 = vadd.f32 0.0, %v1289
    %v1291 = vpop.f32.mrb[0].mxu0
    %1292 = vmatprep.mubr.f32.mxu0 0.0
    %1293 = vmatmul.mubr.f32.gmra.mrb[0].mxu0 %v315
    %v1294 = vpop.f32.mrb[0].mxu0
    %v1295 = vadd.f32 0.0, %v1294
    %v1296 = vpop.f32.mrb[0].mxu0
    %1297 = vmatprep.mubr.f32.mxu0 0.0
    %1298 = vmatmul.mubr.f32.gmra.mrb[0].mxu0 %v318
    %v1299 = vpop.f32.mrb[0].mxu0
    %v1300 = vadd.f32 0.0, %v1299
    %v1301 = vpop.f32.mrb[0].mxu0
    %1302 = vmatprep.mubr.f32.mxu0 0.0
    %1303 = vmatmul.mubr.f32.gmra.mrb[0].mxu0 %v321
    %v1304 = vpop.f32.mrb[0].mxu0
    %v1305 = vadd.f32 0.0, %v1304
    %v1306 = vpop.f32.mrb[0].mxu0
    %1307 = vdwg.mxu0
    %1308 = vmatprep.subr.mxu0 0.0
    %1309 = vmatpush1.msra.mxu0 %v1154
    %1310 = vmatprep.subr.mxu0 0.0
    %1311 = vmatpush1.msra.mxu0 %v1155
    %1312 = vmatprep.subr.mxu0 0.0
    %1313 = vmatpush1.msra.mxu0 %v1156
    %1314 = vmatprep.subr.mxu0 0.0
    %1315 = vmatpush1.msra.mxu0 %v1157
    %1316 = vmatprep.subr.mxu0 0.0
    %1317 = vmatpush1.msra.mxu0 0.0
    %1318 = vmatprep.subr.mxu0 0.0
    %1319 = vmatpush1.msra.mxu0 0.0
    %1320 = vmatprep.subr.mxu0 0.0
    %1321 = vmatpush1.msra.mxu0 0.0
    %1322 = vmatprep.subr.mxu0 0.0
    %1323 = vmatpush1.msra.mxu0 0.0
    %1324 = vmatprep.subr.mxu0 0.0
    %1325 = vmatpush1.msra.mxu0 0.0
    %1326 = vmatprep.subr.mxu0 0.0
    %1327 = vmatpush1.msra.mxu0 0.0
    %1328 = vmatprep.subr.mxu0 0.0
    %1329 = vmatpush1.msra.mxu0 0.0
    %1330 = vmatprep.subr.mxu0 0.0
    %1331 = vmatpush1.msra.mxu0 0.0
    %1332 = vmatprep.subr.mxu0 0.0
    %1333 = vmatpush1.msra.mxu0 0.0
    %1334 = vmatprep.subr.mxu0 0.0
    %1335 = vmatpush1.msra.mxu0 0.0
    %1336 = vmatprep.subr.mxu0 0.0
    %1337 = vmatpush1.msra.mxu0 0.0
    %1338 = vmatprep.subr.mxu0 0.0
    %1339 = vmatpush1.msra.mxu0 0.0
    %1340 = vmatprep.subr.mxu0 0.0
    %1341 = vmatpush1.msra.mxu0 0.0
    %1342 = vmatprep.subr.mxu0 0.0
    %1343 = vmatpush1.msra.mxu0 0.0
    %1344 = vmatprep.subr.mxu0 0.0
    %1345 = vmatpush1.msra.mxu0 0.0
    %1346 = vmatprep.subr.mxu0 0.0
    %1347 = vmatpush1.msra.mxu0 0.0
    %1348 = vmatprep.subr.mxu0 0.0
    %1349 = vmatpush1.msra.mxu0 0.0
    %1350 = vmatprep.subr.mxu0 0.0
    %1351 = vmatpush1.msra.mxu0 0.0
    %1352 = vmatprep.subr.mxu0 0.0
    %1353 = vmatpush1.msra.mxu0 0.0
    %1354 = vmatprep.subr.mxu0 0.0
    %1355 = vmatpush1.msra.mxu0 0.0
    %1356 = vmatprep.subr.mxu0 0.0
    %1357 = vmatpush1.msra.mxu0 0.0
    %1358 = vmatprep.subr.mxu0 0.0
    %1359 = vmatpush1.msra.mxu0 0.0
    %1360 = vmatprep.subr.mxu0 0.0
    %1361 = vmatpush1.msra.mxu0 0.0
    %1362 = vmatprep.subr.mxu0 0.0
    %1363 = vmatpush1.msra.mxu0 0.0
    %1364 = vmatprep.subr.mxu0 0.0
    %1365 = vmatpush1.msra.mxu0 0.0
    %1366 = vmatprep.subr.mxu0 0.0
    %1367 = vmatpush1.msra.mxu0 0.0
    %1368 = vmatprep.subr.mxu0 0.0
    %1369 = vmatpush1.msra.mxu0 0.0
    %1370 = vmatprep.subr.mxu0 0.0
    %1371 = vmatpush1.msra.mxu0 0.0
    %1372 = vmatprep.mubr.f32.mxu0 0.0
    %1373 = vmatmul.mubr.f32.gmra.mrb[0].mxu0 %v57
    %v1374 = vpop.f32.mrb[0].mxu0
    %v1375 = vadd.f32 %v1230, %v1374
    %v1376 = vpop.f32.mrb[0].mxu0
    %1377 = vmatprep.mubr.f32.mxu0 0.0
    %1378 = vmatmul.mubr.f32.gmra.mrb[0].mxu0 %v60
    %v1379 = vpop.f32.mrb[0].mxu0
    %v1380 = vadd.f32 %v1235, %v1379
    %v1381 = vpop.f32.mrb[0].mxu0
    %1382 = vmatprep.mubr.f32.mxu0 0.0
    %1383 = vmatmul.mubr.f32.gmra.mrb[0].mxu0 %v63
    %v1384 = vpop.f32.mrb[0].mxu0
    %v1385 = vadd.f32 %v1240, %v1384
    %v1386 = vpop.f32.mrb[0].mxu0
    %1387 = vmatprep.mubr.f32.mxu0 0.0
    %1388 = vmatmul.mubr.f32.gmra.mrb[0].mxu0 %v66
    %v1389 = vpop.f32.mrb[0].mxu0
    %v1390 = vadd.f32 %v1245, %v1389
    %v1391 = vpop.f32.mrb[0].mxu0
    %1392 = vmatprep.mubr.f32.mxu0 0.0
    %1393 = vmatmul.mubr.f32.gmra.mrb[0].mxu0 %v69
    %v1394 = vpop.f32.mrb[0].mxu0
    %v1395 = vadd.f32 %v1250, %v1394
    %v1396 = vpop.f32.mrb[0].mxu0
    %1397 = vmatprep.mubr.f32.mxu0 0.0
    %1398 = vmatmul.mubr.f32.gmra.mrb[0].mxu0 %v72
    %v1399 = vpop.f32.mrb[0].mxu0
    %v1400 = vadd.f32 %v1255, %v1399
    %v1401 = vpop.f32.mrb[0].mxu0
    %1402 = vmatprep.mubr.f32.mxu0 0.0
    %1403 = vmatmul.mubr.f32.gmra.mrb[0].mxu0 %v75
    %v1404 = vpop.f32.mrb[0].mxu0
    %v1405 = vadd.f32 %v1260, %v1404
    %v1406 = vpop.f32.mrb[0].mxu0
    %1407 = vmatprep.mubr.f32.mxu0 0.0
    %1408 = vmatmul.mubr.f32.gmra.mrb[0].mxu0 %v78
    %v1409 = vpop.f32.mrb[0].mxu0
    %v1410 = vadd.f32 %v1265, %v1409
    %v1411 = vpop.f32.mrb[0].mxu0
    %1412 = vmatprep.mubr.f32.mxu0 0.0
    %1413 = vmatmul.mubr.f32.gmra.mrb[0].mxu0 %v81
    %v1414 = vpop.f32.mrb[0].mxu0
    %v1415 = vadd.f32 %v1270, %v1414
    %v1416 = vpop.f32.mrb[0].mxu0
    %1417 = vmatprep.mubr.f32.mxu0 0.0
    %1418 = vmatmul.mubr.f32.gmra.mrb[0].mxu0 %v84
    %v1419 = vpop.f32.mrb[0].mxu0
    %v1420 = vadd.f32 %v1275, %v1419
    %v1421 = vpop.f32.mrb[0].mxu0
    %1422 = vmatprep.mubr.f32.mxu0 0.0
    %1423 = vmatmul.mubr.f32.gmra.mrb[0].mxu0 %v87
    %v1424 = vpop.f32.mrb[0].mxu0
    %v1425 = vadd.f32 %v1280, %v1424
    %v1426 = vpop.f32.mrb[0].mxu0
    %1427 = vmatprep.mubr.f32.mxu0 0.0
    %1428 = vmatmul.mubr.f32.gmra.mrb[0].mxu0 %v90
    %v1429 = vpop.f32.mrb[0].mxu0
    %v1430 = vadd.f32 %v1285, %v1429
    %v1431 = vpop.f32.mrb[0].mxu0
    %1432 = vmatprep.mubr.f32.mxu0 0.0
    %1433 = vmatmul.mubr.f32.gmra.mrb[0].mxu0 %v93
    %v1434 = vpop.f32.mrb[0].mxu0
    %v1435 = vadd.f32 %v1290, %v1434
    %v1436 = vpop.f32.mrb[0].mxu0
    %1437 = vmatprep.mubr.f32.mxu0 0.0
    %1438 = vmatmul.mubr.f32.gmra.mrb[0].mxu0 %v96
    %v1439 = vpop.f32.mrb[0].mxu0
    %v1440 = vadd.f32 %v1295, %v1439
    %v1441 = vpop.f32.mrb[0].mxu0
    %1442 = vmatprep.mubr.f32.mxu0 0.0
    %1443 = vmatmul.mubr.f32.gmra.mrb[0].mxu0 %v99
    %v1444 = vpop.f32.mrb[0].mxu0
    %v1445 = vadd.f32 %v1300, %v1444
    %v1446 = vpop.f32.mrb[0].mxu0
    %1447 = vmatprep.mubr.f32.mxu0 0.0
    %1448 = vmatmul.mubr.f32.gmra.mrb[0].mxu0 %v102
    %v1449 = vpop.f32.mrb[0].mxu0
    %v1450 = vadd.f32 %v1305, %v1449
    %v1451 = vpop.f32.mrb[0].mxu0
    %1452 = vdwg.mxu0
    %s1453 = scalar_lea.vmem %s5, 3
    %v1454 = vld [vmem:[%s1453] sm:$0x1]
    %v1456 = vlaneseq
    %v1457 = vshrl.u32 %v1456, 7
    %v1458 = vsub.s32 0, %v1457
    %v1459 = vrot.slane %v1454, %v1458
    %v1461 = vadd.f32 %v1375, %v1459
    %v1462 = vadd.f32 %v1380, %v1459
    %v1463 = vadd.f32 %v1385, %v1459
    %v1464 = vadd.f32 %v1390, %v1459
    %v1465 = vadd.f32 %v1395, %v1459
    %v1466 = vadd.f32 %v1400, %v1459
    %v1467 = vadd.f32 %v1405, %v1459
    %v1468 = vadd.f32 %v1410, %v1459
    %v1469 = vadd.f32 %v1415, %v1459
    %v1470 = vadd.f32 %v1420, %v1459
    %v1471 = vadd.f32 %v1425, %v1459
    %v1472 = vadd.f32 %v1430, %v1459
    %v1473 = vadd.f32 %v1435, %v1459
    %v1474 = vadd.f32 %v1440, %v1459
    %v1475 = vadd.f32 %v1445, %v1459
    %v1476 = vadd.f32 %v1450, %v1459
    %v1477 = vmax.f32 %v1461, 0.0
    %v1478 = vmax.f32 %v1462, 0.0
    %v1479 = vmax.f32 %v1463, 0.0
    %v1480 = vmax.f32 %v1464, 0.0
    %v1481 = vmax.f32 %v1465, 0.0
    %v1482 = vmax.f32 %v1466, 0.0
    %v1483 = vmax.f32 %v1467, 0.0
    %v1484 = vmax.f32 %v1468, 0.0
    %v1485 = vmax.f32 %v1469, 0.0
    %v1486 = vmax.f32 %v1470, 0.0
    %v1487 = vmax.f32 %v1471, 0.0
    %v1488 = vmax.f32 %v1472, 0.0
    %v1489 = vmax.f32 %v1473, 0.0
    %v1490 = vmax.f32 %v1474, 0.0
    %v1491 = vmax.f32 %v1475, 0.0
    %v1492 = vmax.f32 %v1476, 0.0
    %s1493 = scalar_lea.vmem %s4, 224
    %v1494 = vld [vmem:[%s1493] sm:$0xff]
    %v1495 = vld [vmem:[%s1493 + $0x8] sm:$0xff]
    %v1496 = vld [vmem:[%s1493 + $0x10] sm:$0xff]
    %v1497 = vld [vmem:[%s1493 + $0x18] sm:$0xff]
    %s1498 = scalar_lea.vmem %s4, 256
    %v1499 = vld [vmem:[%s1498] sm:$0xff]
    %v1500 = vld [vmem:[%s1498 + $0x8] sm:$0xff]
    %v1501 = vld [vmem:[%s1498 + $0x10] sm:$0xff]
    %v1502 = vld [vmem:[%s1498 + $0x18] sm:$0xff]
    %1503 = vmatprep.subr.mxu0 0.0
    %1504 = vmatpush1.msra.mxu0 %v1499
    %1505 = vmatprep.subr.mxu0 0.0
    %1506 = vmatpush1.msra.mxu0 %v1500
    %1507 = vmatprep.subr.mxu0 0.0
    %1508 = vmatpush1.msra.mxu0 %v1501
    %1509 = vmatprep.subr.mxu0 0.0
    %1510 = vmatpush1.msra.mxu0 %v1502
    %1511 = vmatprep.subr.mxu0 0.0
    %1512 = vmatpush1.msra.mxu0 0.0
    %1513 = vmatprep.subr.mxu0 0.0
    %1514 = vmatpush1.msra.mxu0 0.0
    %1515 = vmatprep.subr.mxu0 0.0
    %1516 = vmatpush1.msra.mxu0 0.0
    %1517 = vmatprep.subr.mxu0 0.0
    %1518 = vmatpush1.msra.mxu0 0.0
    %1519 = vmatprep.subr.mxu0 0.0
    %1520 = vmatpush1.msra.mxu0 0.0
    %1521 = vmatprep.subr.mxu0 0.0
    %1522 = vmatpush1.msra.mxu0 0.0
    %1523 = vmatprep.subr.mxu0 0.0
    %1524 = vmatpush1.msra.mxu0 0.0
    %1525 = vmatprep.subr.mxu0 0.0
    %1526 = vmatpush1.msra.mxu0 0.0
    %1527 = vmatprep.subr.mxu0 0.0
    %1528 = vmatpush1.msra.mxu0 0.0
    %1529 = vmatprep.subr.mxu0 0.0
    %1530 = vmatpush1.msra.mxu0 0.0
    %1531 = vmatprep.subr.mxu0 0.0
    %1532 = vmatpush1.msra.mxu0 0.0
    %1533 = vmatprep.subr.mxu0 0.0
    %1534 = vmatpush1.msra.mxu0 0.0
    %1535 = vmatprep.subr.mxu0 0.0
    %1536 = vmatpush1.msra.mxu0 0.0
    %1537 = vmatprep.subr.mxu0 0.0
    %1538 = vmatpush1.msra.mxu0 0.0
    %1539 = vmatprep.subr.mxu0 0.0
    %1540 = vmatpush1.msra.mxu0 0.0
    %1541 = vmatprep.subr.mxu0 0.0
    %1542 = vmatpush1.msra.mxu0 0.0
    %1543 = vmatprep.subr.mxu0 0.0
    %1544 = vmatpush1.msra.mxu0 0.0
    %1545 = vmatprep.subr.mxu0 0.0
    %1546 = vmatpush1.msra.mxu0 0.0
    %1547 = vmatprep.subr.mxu0 0.0
    %1548 = vmatpush1.msra.mxu0 0.0
    %1549 = vmatprep.subr.mxu0 0.0
    %1550 = vmatpush1.msra.mxu0 0.0
    %1551 = vmatprep.subr.mxu0 0.0
    %1552 = vmatpush1.msra.mxu0 0.0
    %1553 = vmatprep.subr.mxu0 0.0
    %1554 = vmatpush1.msra.mxu0 0.0
    %1555 = vmatprep.subr.mxu0 0.0
    %1556 = vmatpush1.msra.mxu0 0.0
    %1557 = vmatprep.subr.mxu0 0.0
    %1558 = vmatpush1.msra.mxu0 0.0
    %1559 = vmatprep.subr.mxu0 0.0
    %1560 = vmatpush1.msra.mxu0 0.0
    %1561 = vmatprep.subr.mxu0 0.0
    %1562 = vmatpush1.msra.mxu0 0.0
    %1563 = vmatprep.subr.mxu0 0.0
    %1564 = vmatpush1.msra.mxu0 0.0
    %1565 = vmatprep.subr.mxu0 0.0
    %1566 = vmatpush1.msra.mxu0 0.0
    %1567 = vmatprep.mubr.f32.mxu0 0.0
    %1568 = vmatmul.mubr.f32.gmra.mrb[0].mxu0 %v276
    %v1569 = vpop.f32.mrb[0].mxu0
    %v1570 = vadd.f32 0.0, %v1569
    %v1571 = vpop.f32.mrb[0].mxu0
    %1572 = vmatprep.mubr.f32.mxu0 0.0
    %1573 = vmatmul.mubr.f32.gmra.mrb[0].mxu0 %v279
    %v1574 = vpop.f32.mrb[0].mxu0
    %v1575 = vadd.f32 0.0, %v1574
    %v1576 = vpop.f32.mrb[0].mxu0
    %1577 = vmatprep.mubr.f32.mxu0 0.0
    %1578 = vmatmul.mubr.f32.gmra.mrb[0].mxu0 %v282
    %v1579 = vpop.f32.mrb[0].mxu0
    %v1580 = vadd.f32 0.0, %v1579
    %v1581 = vpop.f32.mrb[0].mxu0
    %1582 = vmatprep.mubr.f32.mxu0 0.0
    %1583 = vmatmul.mubr.f32.gmra.mrb[0].mxu0 %v285
    %v1584 = vpop.f32.mrb[0].mxu0
    %v1585 = vadd.f32 0.0, %v1584
    %v1586 = vpop.f32.mrb[0].mxu0
    %1587 = vmatprep.mubr.f32.mxu0 0.0
    %1588 = vmatmul.mubr.f32.gmra.mrb[0].mxu0 %v288
    %v1589 = vpop.f32.mrb[0].mxu0
    %v1590 = vadd.f32 0.0, %v1589
    %v1591 = vpop.f32.mrb[0].mxu0
    %1592 = vmatprep.mubr.f32.mxu0 0.0
    %1593 = vmatmul.mubr.f32.gmra.mrb[0].mxu0 %v291
    %v1594 = vpop.f32.mrb[0].mxu0
    %v1595 = vadd.f32 0.0, %v1594
    %v1596 = vpop.f32.mrb[0].mxu0
    %1597 = vmatprep.mubr.f32.mxu0 0.0
    %1598 = vmatmul.mubr.f32.gmra.mrb[0].mxu0 %v294
    %v1599 = vpop.f32.mrb[0].mxu0
    %v1600 = vadd.f32 0.0, %v1599
    %v1601 = vpop.f32.mrb[0].mxu0
    %1602 = vmatprep.mubr.f32.mxu0 0.0
    %1603 = vmatmul.mubr.f32.gmra.mrb[0].mxu0 %v297
    %v1604 = vpop.f32.mrb[0].mxu0
    %v1605 = vadd.f32 0.0, %v1604
    %v1606 = vpop.f32.mrb[0].mxu0
    %1607 = vmatprep.mubr.f32.mxu0 0.0
    %1608 = vmatmul.mubr.f32.gmra.mrb[0].mxu0 %v300
    %v1609 = vpop.f32.mrb[0].mxu0
    %v1610 = vadd.f32 0.0, %v1609
    %v1611 = vpop.f32.mrb[0].mxu0
    %1612 = vmatprep.mubr.f32.mxu0 0.0
    %1613 = vmatmul.mubr.f32.gmra.mrb[0].mxu0 %v303
    %v1614 = vpop.f32.mrb[0].mxu0
    %v1615 = vadd.f32 0.0, %v1614
    %v1616 = vpop.f32.mrb[0].mxu0
    %1617 = vmatprep.mubr.f32.mxu0 0.0
    %1618 = vmatmul.mubr.f32.gmra.mrb[0].mxu0 %v306
    %v1619 = vpop.f32.mrb[0].mxu0
    %v1620 = vadd.f32 0.0, %v1619
    %v1621 = vpop.f32.mrb[0].mxu0
    %1622 = vmatprep.mubr.f32.mxu0 0.0
    %1623 = vmatmul.mubr.f32.gmra.mrb[0].mxu0 %v309
    %v1624 = vpop.f32.mrb[0].mxu0
    %v1625 = vadd.f32 0.0, %v1624
    %v1626 = vpop.f32.mrb[0].mxu0
    %1627 = vmatprep.mubr.f32.mxu0 0.0
    %1628 = vmatmul.mubr.f32.gmra.mrb[0].mxu0 %v312
    %v1629 = vpop.f32.mrb[0].mxu0
    %v1630 = vadd.f32 0.0, %v1629
    %v1631 = vpop.f32.mrb[0].mxu0
    %1632 = vmatprep.mubr.f32.mxu0 0.0
    %1633 = vmatmul.mubr.f32.gmra.mrb[0].mxu0 %v315
    %v1634 = vpop.f32.mrb[0].mxu0
    %v1635 = vadd.f32 0.0, %v1634
    %v1636 = vpop.f32.mrb[0].mxu0
    %1637 = vmatprep.mubr.f32.mxu0 0.0
    %1638 = vmatmul.mubr.f32.gmra.mrb[0].mxu0 %v318
    %v1639 = vpop.f32.mrb[0].mxu0
    %v1640 = vadd.f32 0.0, %v1639
    %v1641 = vpop.f32.mrb[0].mxu0
    %1642 = vmatprep.mubr.f32.mxu0 0.0
    %1643 = vmatmul.mubr.f32.gmra.mrb[0].mxu0 %v321
    %v1644 = vpop.f32.mrb[0].mxu0
    %v1645 = vadd.f32 0.0, %v1644
    %v1646 = vpop.f32.mrb[0].mxu0
    %1647 = vdwg.mxu0
    %1648 = vmatprep.subr.mxu0 0.0
    %1649 = vmatpush1.msra.mxu0 %v1494
    %1650 = vmatprep.subr.mxu0 0.0
    %1651 = vmatpush1.msra.mxu0 %v1495
    %1652 = vmatprep.subr.mxu0 0.0
    %1653 = vmatpush1.msra.mxu0 %v1496
    %1654 = vmatprep.subr.mxu0 0.0
    %1655 = vmatpush1.msra.mxu0 %v1497
    %1656 = vmatprep.subr.mxu0 0.0
    %1657 = vmatpush1.msra.mxu0 0.0
    %1658 = vmatprep.subr.mxu0 0.0
    %1659 = vmatpush1.msra.mxu0 0.0
    %1660 = vmatprep.subr.mxu0 0.0
    %1661 = vmatpush1.msra.mxu0 0.0
    %1662 = vmatprep.subr.mxu0 0.0
    %1663 = vmatpush1.msra.mxu0 0.0
    %1664 = vmatprep.subr.mxu0 0.0
    %1665 = vmatpush1.msra.mxu0 0.0
    %1666 = vmatprep.subr.mxu0 0.0
    %1667 = vmatpush1.msra.mxu0 0.0
    %1668 = vmatprep.subr.mxu0 0.0
    %1669 = vmatpush1.msra.mxu0 0.0
    %1670 = vmatprep.subr.mxu0 0.0
    %1671 = vmatpush1.msra.mxu0 0.0
    %1672 = vmatprep.subr.mxu0 0.0
    %1673 = vmatpush1.msra.mxu0 0.0
    %1674 = vmatprep.subr.mxu0 0.0
    %1675 = vmatpush1.msra.mxu0 0.0
    %1676 = vmatprep.subr.mxu0 0.0
    %1677 = vmatpush1.msra.mxu0 0.0
    %1678 = vmatprep.subr.mxu0 0.0
    %1679 = vmatpush1.msra.mxu0 0.0
    %1680 = vmatprep.subr.mxu0 0.0
    %1681 = vmatpush1.msra.mxu0 0.0
    %1682 = vmatprep.subr.mxu0 0.0
    %1683 = vmatpush1.msra.mxu0 0.0
    %1684 = vmatprep.subr.mxu0 0.0
    %1685 = vmatpush1.msra.mxu0 0.0
    %1686 = vmatprep.subr.mxu0 0.0
    %1687 = vmatpush1.msra.mxu0 0.0
    %1688 = vmatprep.subr.mxu0 0.0
    %1689 = vmatpush1.msra.mxu0 0.0
    %1690 = vmatprep.subr.mxu0 0.0
    %1691 = vmatpush1.msra.mxu0 0.0
    %1692 = vmatprep.subr.mxu0 0.0
    %1693 = vmatpush1.msra.mxu0 0.0
    %1694 = vmatprep.subr.mxu0 0.0
    %1695 = vmatpush1.msra.mxu0 0.0
    %1696 = vmatprep.subr.mxu0 0.0
    %1697 = vmatpush1.msra.mxu0 0.0
    %1698 = vmatprep.subr.mxu0 0.0
    %1699 = vmatpush1.msra.mxu0 0.0
    %1700 = vmatprep.subr.mxu0 0.0
    %1701 = vmatpush1.msra.mxu0 0.0
    %1702 = vmatprep.subr.mxu0 0.0
    %1703 = vmatpush1.msra.mxu0 0.0
    %1704 = vmatprep.subr.mxu0 0.0
    %1705 = vmatpush1.msra.mxu0 0.0
    %1706 = vmatprep.subr.mxu0 0.0
    %1707 = vmatpush1.msra.mxu0 0.0
    %1708 = vmatprep.subr.mxu0 0.0
    %1709 = vmatpush1.msra.mxu0 0.0
    %1710 = vmatprep.subr.mxu0 0.0
    %1711 = vmatpush1.msra.mxu0 0.0
    %1712 = vmatprep.mubr.f32.mxu0 0.0
    %1713 = vmatmul.mubr.f32.gmra.mrb[0].mxu0 %v57
    %v1714 = vpop.f32.mrb[0].mxu0
    %v1715 = vadd.f32 %v1570, %v1714
    %v1716 = vpop.f32.mrb[0].mxu0
    %1717 = vmatprep.mubr.f32.mxu0 0.0
    %1718 = vmatmul.mubr.f32.gmra.mrb[0].mxu0 %v60
    %v1719 = vpop.f32.mrb[0].mxu0
    %v1720 = vadd.f32 %v1575, %v1719
    %v1721 = vpop.f32.mrb[0].mxu0
    %1722 = vmatprep.mubr.f32.mxu0 0.0
    %1723 = vmatmul.mubr.f32.gmra.mrb[0].mxu0 %v63
    %v1724 = vpop.f32.mrb[0].mxu0
    %v1725 = vadd.f32 %v1580, %v1724
    %v1726 = vpop.f32.mrb[0].mxu0
    %1727 = vmatprep.mubr.f32.mxu0 0.0
    %1728 = vmatmul.mubr.f32.gmra.mrb[0].mxu0 %v66
    %v1729 = vpop.f32.mrb[0].mxu0
    %v1730 = vadd.f32 %v1585, %v1729
    %v1731 = vpop.f32.mrb[0].mxu0
    %1732 = vmatprep.mubr.f32.mxu0 0.0
    %1733 = vmatmul.mubr.f32.gmra.mrb[0].mxu0 %v69
    %v1734 = vpop.f32.mrb[0].mxu0
    %v1735 = vadd.f32 %v1590, %v1734
    %v1736 = vpop.f32.mrb[0].mxu0
    %1737 = vmatprep.mubr.f32.mxu0 0.0
    %1738 = vmatmul.mubr.f32.gmra.mrb[0].mxu0 %v72
    %v1739 = vpop.f32.mrb[0].mxu0
    %v1740 = vadd.f32 %v1595, %v1739
    %v1741 = vpop.f32.mrb[0].mxu0
    %1742 = vmatprep.mubr.f32.mxu0 0.0
    %1743 = vmatmul.mubr.f32.gmra.mrb[0].mxu0 %v75
    %v1744 = vpop.f32.mrb[0].mxu0
    %v1745 = vadd.f32 %v1600, %v1744
    %v1746 = vpop.f32.mrb[0].mxu0
    %1747 = vmatprep.mubr.f32.mxu0 0.0
    %1748 = vmatmul.mubr.f32.gmra.mrb[0].mxu0 %v78
    %v1749 = vpop.f32.mrb[0].mxu0
    %v1750 = vadd.f32 %v1605, %v1749
    %v1751 = vpop.f32.mrb[0].mxu0
    %1752 = vmatprep.mubr.f32.mxu0 0.0
    %1753 = vmatmul.mubr.f32.gmra.mrb[0].mxu0 %v81
    %v1754 = vpop.f32.mrb[0].mxu0
    %v1755 = vadd.f32 %v1610, %v1754
    %v1756 = vpop.f32.mrb[0].mxu0
    %1757 = vmatprep.mubr.f32.mxu0 0.0
    %1758 = vmatmul.mubr.f32.gmra.mrb[0].mxu0 %v84
    %v1759 = vpop.f32.mrb[0].mxu0
    %v1760 = vadd.f32 %v1615, %v1759
    %v1761 = vpop.f32.mrb[0].mxu0
    %1762 = vmatprep.mubr.f32.mxu0 0.0
    %1763 = vmatmul.mubr.f32.gmra.mrb[0].mxu0 %v87
    %v1764 = vpop.f32.mrb[0].mxu0
    %v1765 = vadd.f32 %v1620, %v1764
    %v1766 = vpop.f32.mrb[0].mxu0
    %1767 = vmatprep.mubr.f32.mxu0 0.0
    %1768 = vmatmul.mubr.f32.gmra.mrb[0].mxu0 %v90
    %v1769 = vpop.f32.mrb[0].mxu0
    %v1770 = vadd.f32 %v1625, %v1769
    %v1771 = vpop.f32.mrb[0].mxu0
    %1772 = vmatprep.mubr.f32.mxu0 0.0
    %1773 = vmatmul.mubr.f32.gmra.mrb[0].mxu0 %v93
    %v1774 = vpop.f32.mrb[0].mxu0
    %v1775 = vadd.f32 %v1630, %v1774
    %v1776 = vpop.f32.mrb[0].mxu0
    %1777 = vmatprep.mubr.f32.mxu0 0.0
    %1778 = vmatmul.mubr.f32.gmra.mrb[0].mxu0 %v96
    %v1779 = vpop.f32.mrb[0].mxu0
    %v1780 = vadd.f32 %v1635, %v1779
    %v1781 = vpop.f32.mrb[0].mxu0
    %1782 = vmatprep.mubr.f32.mxu0 0.0
    %1783 = vmatmul.mubr.f32.gmra.mrb[0].mxu0 %v99
    %v1784 = vpop.f32.mrb[0].mxu0
    %v1785 = vadd.f32 %v1640, %v1784
    %v1786 = vpop.f32.mrb[0].mxu0
    %1787 = vmatprep.mubr.f32.mxu0 0.0
    %1788 = vmatmul.mubr.f32.gmra.mrb[0].mxu0 %v102
    %v1789 = vpop.f32.mrb[0].mxu0
    %v1790 = vadd.f32 %v1645, %v1789
    %v1791 = vpop.f32.mrb[0].mxu0
    %1792 = vdwg.mxu0
    %s1793 = scalar_lea.vmem %s5, 4
    %v1794 = vld [vmem:[%s1793] sm:$0x1]
    %v1796 = vlaneseq
    %v1797 = vshrl.u32 %v1796, 7
    %v1798 = vsub.s32 0, %v1797
    %v1799 = vrot.slane %v1794, %v1798
    %v1801 = vadd.f32 %v1715, %v1799
    %v1802 = vadd.f32 %v1720, %v1799
    %v1803 = vadd.f32 %v1725, %v1799
    %v1804 = vadd.f32 %v1730, %v1799
    %v1805 = vadd.f32 %v1735, %v1799
    %v1806 = vadd.f32 %v1740, %v1799
    %v1807 = vadd.f32 %v1745, %v1799
    %v1808 = vadd.f32 %v1750, %v1799
    %v1809 = vadd.f32 %v1755, %v1799
    %v1810 = vadd.f32 %v1760, %v1799
    %v1811 = vadd.f32 %v1765, %v1799
    %v1812 = vadd.f32 %v1770, %v1799
    %v1813 = vadd.f32 %v1775, %v1799
    %v1814 = vadd.f32 %v1780, %v1799
    %v1815 = vadd.f32 %v1785, %v1799
    %v1816 = vadd.f32 %v1790, %v1799
    %v1817 = vmax.f32 %v1801, 0.0
    %v1818 = vmax.f32 %v1802, 0.0
    %v1819 = vmax.f32 %v1803, 0.0
    %v1820 = vmax.f32 %v1804, 0.0
    %v1821 = vmax.f32 %v1805, 0.0
    %v1822 = vmax.f32 %v1806, 0.0
    %v1823 = vmax.f32 %v1807, 0.0
    %v1824 = vmax.f32 %v1808, 0.0
    %v1825 = vmax.f32 %v1809, 0.0
    %v1826 = vmax.f32 %v1810, 0.0
    %v1827 = vmax.f32 %v1811, 0.0
    %v1828 = vmax.f32 %v1812, 0.0
    %v1829 = vmax.f32 %v1813, 0.0
    %v1830 = vmax.f32 %v1814, 0.0
    %v1831 = vmax.f32 %v1815, 0.0
    %v1832 = vmax.f32 %v1816, 0.0
    %v1833 = vmul.f32 %v702, %v1477
    %v1834 = vmul.f32 %v704, %v1478
    %v1835 = vmul.f32 %v706, %v1479
    %v1836 = vmul.f32 %v708, %v1480
    %v1837 = vmul.f32 %v710, %v1481
    %v1838 = vmul.f32 %v712, %v1482
    %v1839 = vmul.f32 %v714, %v1483
    %v1840 = vmul.f32 %v716, %v1484
    %v1841 = vmul.f32 %v718, %v1485
    %v1842 = vmul.f32 %v720, %v1486
    %v1843 = vmul.f32 %v722, %v1487
    %v1844 = vmul.f32 %v724, %v1488
    %v1845 = vmul.f32 %v726, %v1489
    %v1846 = vmul.f32 %v728, %v1490
    %v1847 = vmul.f32 %v730, %v1491
    %v1848 = vmul.f32 %v732, %v1492
    %v1849 = vsub.f32 1.0, %v702
    %v1850 = vsub.f32 1.0, %v704
    %v1851 = vsub.f32 1.0, %v706
    %v1852 = vsub.f32 1.0, %v708
    %v1853 = vsub.f32 1.0, %v710
    %v1854 = vsub.f32 1.0, %v712
    %v1855 = vsub.f32 1.0, %v714
    %v1856 = vsub.f32 1.0, %v716
    %v1857 = vsub.f32 1.0, %v718
    %v1858 = vsub.f32 1.0, %v720
    %v1859 = vsub.f32 1.0, %v722
    %v1860 = vsub.f32 1.0, %v724
    %v1861 = vsub.f32 1.0, %v726
    %v1862 = vsub.f32 1.0, %v728
    %v1863 = vsub.f32 1.0, %v730
    %v1864 = vsub.f32 1.0, %v732
    %v1865 = vmul.f32 %v1849, %v28
    %v1866 = vmul.f32 %v1850, %v29
    %v1867 = vmul.f32 %v1851, %v30
    %v1868 = vmul.f32 %v1852, %v31
    %v1869 = vmul.f32 %v1853, %v32
    %v1870 = vmul.f32 %v1854, %v33
    %v1871 = vmul.f32 %v1855, %v34
    %v1872 = vmul.f32 %v1856, %v35
    %v1873 = vmul.f32 %v1857, %v36
    %v1874 = vmul.f32 %v1858, %v37
    %v1875 = vmul.f32 %v1859, %v38
    %v1876 = vmul.f32 %v1860, %v39
    %v1877 = vmul.f32 %v1861, %v40
    %v1878 = vmul.f32 %v1862, %v41
    %v1879 = vmul.f32 %v1863, %v42
    %v1880 = vmul.f32 %v1864, %v43
    %v1881 = vadd.f32 %v1833, %v1865
    %v1882 = vadd.f32 %v1834, %v1866
    %v1883 = vadd.f32 %v1835, %v1867
    %v1884 = vadd.f32 %v1836, %v1868
    %v1885 = vadd.f32 %v1837, %v1869
    %v1886 = vadd.f32 %v1838, %v1870
    %v1887 = vadd.f32 %v1839, %v1871
    %v1888 = vadd.f32 %v1840, %v1872
    %v1889 = vadd.f32 %v1841, %v1873
    %v1890 = vadd.f32 %v1842, %v1874
    %v1891 = vadd.f32 %v1843, %v1875
    %v1892 = vadd.f32 %v1844, %v1876
    %v1893 = vadd.f32 %v1845, %v1877
    %v1894 = vadd.f32 %v1846, %v1878
    %v1895 = vadd.f32 %v1847, %v1879
    %v1896 = vadd.f32 %v1848, %v1880
    %v1897 = vmul.f32 %v1122, %v1817
    %v1898 = vmul.f32 %v1124, %v1818
    %v1899 = vmul.f32 %v1126, %v1819
    %v1900 = vmul.f32 %v1128, %v1820
    %v1901 = vmul.f32 %v1130, %v1821
    %v1902 = vmul.f32 %v1132, %v1822
    %v1903 = vmul.f32 %v1134, %v1823
    %v1904 = vmul.f32 %v1136, %v1824
    %v1905 = vmul.f32 %v1138, %v1825
    %v1906 = vmul.f32 %v1140, %v1826
    %v1907 = vmul.f32 %v1142, %v1827
    %v1908 = vmul.f32 %v1144, %v1828
    %v1909 = vmul.f32 %v1146, %v1829
    %v1910 = vmul.f32 %v1148, %v1830
    %v1911 = vmul.f32 %v1150, %v1831
    %v1912 = vmul.f32 %v1152, %v1832
    %v1913 = vsub.f32 1.0, %v1122
    %v1914 = vsub.f32 1.0, %v1124
    %v1915 = vsub.f32 1.0, %v1126
    %v1916 = vsub.f32 1.0, %v1128
    %v1917 = vsub.f32 1.0, %v1130
    %v1918 = vsub.f32 1.0, %v1132
    %v1919 = vsub.f32 1.0, %v1134
    %v1920 = vsub.f32 1.0, %v1136
    %v1921 = vsub.f32 1.0, %v1138
    %v1922 = vsub.f32 1.0, %v1140
    %v1923 = vsub.f32 1.0, %v1142
    %v1924 = vsub.f32 1.0, %v1144
    %v1925 = vsub.f32 1.0, %v1146
    %v1926 = vsub.f32 1.0, %v1148
    %v1927 = vsub.f32 1.0, %v1150
    %v1928 = vsub.f32 1.0, %v1152
    %v1929 = vmul.f32 %v1913, %v249
    %v1930 = vmul.f32 %v1914, %v250
    %v1931 = vmul.f32 %v1915, %v251
    %v1932 = vmul.f32 %v1916, %v252
    %v1933 = vmul.f32 %v1917, %v253
    %v1934 = vmul.f32 %v1918, %v254
    %v1935 = vmul.f32 %v1919, %v255
    %v1936 = vmul.f32 %v1920, %v256
    %v1937 = vmul.f32 %v1921, %v257
    %v1938 = vmul.f32 %v1922, %v258
    %v1939 = vmul.f32 %v1923, %v259
    %v1940 = vmul.f32 %v1924, %v260
    %v1941 = vmul.f32 %v1925, %v261
    %v1942 = vmul.f32 %v1926, %v262
    %v1943 = vmul.f32 %v1927, %v263
    %v1944 = vmul.f32 %v1928, %v264
    %v1945 = vadd.f32 %v1897, %v1929
    %v1946 = vadd.f32 %v1898, %v1930
    %v1947 = vadd.f32 %v1899, %v1931
    %v1948 = vadd.f32 %v1900, %v1932
    %v1949 = vadd.f32 %v1901, %v1933
    %v1950 = vadd.f32 %v1902, %v1934
    %v1951 = vadd.f32 %v1903, %v1935
    %v1952 = vadd.f32 %v1904, %v1936
    %v1953 = vadd.f32 %v1905, %v1937
    %v1954 = vadd.f32 %v1906, %v1938
    %v1955 = vadd.f32 %v1907, %v1939
    %v1956 = vadd.f32 %v1908, %v1940
    %v1957 = vadd.f32 %v1909, %v1941
    %v1958 = vadd.f32 %v1910, %v1942
    %v1959 = vadd.f32 %v1911, %v1943
    %v1960 = vadd.f32 %v1912, %v1944
    %s1961 = scalar_lea.vmem %s4, 288
    %v1962 = vld [vmem:[%s1961] sm:$0xff]
    %v1963 = vld [vmem:[%s1961 + $0x8] sm:$0xff]
    %v1964 = vld [vmem:[%s1961 + $0x10] sm:$0xff]
    %v1965 = vld [vmem:[%s1961 + $0x18] sm:$0xff]
    %s1966 = scalar_lea.vmem %s4, 320
    %v1967 = vld [vmem:[%s1966] sm:$0xff]
    %v1968 = vld [vmem:[%s1966 + $0x8] sm:$0xff]
    %v1969 = vld [vmem:[%s1966 + $0x10] sm:$0xff]
    %v1970 = vld [vmem:[%s1966 + $0x18] sm:$0xff]
    %v1972 = vsel %vm55, %v1945, 0
    %v1975 = vsel %vm55, %v1946, 0
    %v1978 = vsel %vm55, %v1947, 0
    %v1981 = vsel %vm55, %v1948, 0
    %v1984 = vsel %vm55, %v1949, 0
    %v1987 = vsel %vm55, %v1950, 0
    %v1990 = vsel %vm55, %v1951, 0
    %v1993 = vsel %vm55, %v1952, 0
    %v1996 = vsel %vm55, %v1953, 0
    %v1999 = vsel %vm55, %v1954, 0
    %v2002 = vsel %vm55, %v1955, 0
    %v2005 = vsel %vm55, %v1956, 0
    %v2008 = vsel %vm55, %v1957, 0
    %v2011 = vsel %vm55, %v1958, 0
    %v2014 = vsel %vm55, %v1959, 0
    %v2017 = vsel %vm55, %v1960, 0
    %2019 = vmatprep.subr.mxu0 0.0
    %2020 = vmatpush1.msra.mxu0 %v1967
    %2021 = vmatprep.subr.mxu0 0.0
    %2022 = vmatpush1.msra.mxu0 %v1968
    %2023 = vmatprep.subr.mxu0 0.0
    %2024 = vmatpush1.msra.mxu0 %v1969
    %2025 = vmatprep.subr.mxu0 0.0
    %2026 = vmatpush1.msra.mxu0 %v1970
    %2027 = vmatprep.subr.mxu0 0.0
    %2028 = vmatpush1.msra.mxu0 0.0
    %2029 = vmatprep.subr.mxu0 0.0
    %2030 = vmatpush1.msra.mxu0 0.0
    %2031 = vmatprep.subr.mxu0 0.0
    %2032 = vmatpush1.msra.mxu0 0.0
    %2033 = vmatprep.subr.mxu0 0.0
    %2034 = vmatpush1.msra.mxu0 0.0
    %2035 = vmatprep.subr.mxu0 0.0
    %2036 = vmatpush1.msra.mxu0 0.0
    %2037 = vmatprep.subr.mxu0 0.0
    %2038 = vmatpush1.msra.mxu0 0.0
    %2039 = vmatprep.subr.mxu0 0.0
    %2040 = vmatpush1.msra.mxu0 0.0
    %2041 = vmatprep.subr.mxu0 0.0
    %2042 = vmatpush1.msra.mxu0 0.0
    %2043 = vmatprep.subr.mxu0 0.0
    %2044 = vmatpush1.msra.mxu0 0.0
    %2045 = vmatprep.subr.mxu0 0.0
    %2046 = vmatpush1.msra.mxu0 0.0
    %2047 = vmatprep.subr.mxu0 0.0
    %2048 = vmatpush1.msra.mxu0 0.0
    %2049 = vmatprep.subr.mxu0 0.0
    %2050 = vmatpush1.msra.mxu0 0.0
    %2051 = vmatprep.subr.mxu0 0.0
    %2052 = vmatpush1.msra.mxu0 0.0
    %2053 = vmatprep.subr.mxu0 0.0
    %2054 = vmatpush1.msra.mxu0 0.0
    %2055 = vmatprep.subr.mxu0 0.0
    %2056 = vmatpush1.msra.mxu0 0.0
    %2057 = vmatprep.subr.mxu0 0.0
    %2058 = vmatpush1.msra.mxu0 0.0
    %2059 = vmatprep.subr.mxu0 0.0
    %2060 = vmatpush1.msra.mxu0 0.0
    %2061 = vmatprep.subr.mxu0 0.0
    %2062 = vmatpush1.msra.mxu0 0.0
    %2063 = vmatprep.subr.mxu0 0.0
    %2064 = vmatpush1.msra.mxu0 0.0
    %2065 = vmatprep.subr.mxu0 0.0
    %2066 = vmatpush1.msra.mxu0 0.0
    %2067 = vmatprep.subr.mxu0 0.0
    %2068 = vmatpush1.msra.mxu0 0.0
    %2069 = vmatprep.subr.mxu0 0.0
    %2070 = vmatpush1.msra.mxu0 0.0
    %2071 = vmatprep.subr.mxu0 0.0
    %2072 = vmatpush1.msra.mxu0 0.0
    %2073 = vmatprep.subr.mxu0 0.0
    %2074 = vmatpush1.msra.mxu0 0.0
    %2075 = vmatprep.subr.mxu0 0.0
    %2076 = vmatpush1.msra.mxu0 0.0
    %2077 = vmatprep.subr.mxu0 0.0
    %2078 = vmatpush1.msra.mxu0 0.0
    %2079 = vmatprep.subr.mxu0 0.0
    %2080 = vmatpush1.msra.mxu0 0.0
    %2081 = vmatprep.subr.mxu0 0.0
    %2082 = vmatpush1.msra.mxu0 0.0
    %2083 = vmatprep.mubr.f32.mxu0 0.0
    %2084 = vmatmul.mubr.f32.gmra.mrb[0].mxu0 %v1972
    %v2085 = vpop.f32.mrb[0].mxu0
    %v2086 = vadd.f32 0.0, %v2085
    %v2087 = vpop.f32.mrb[0].mxu0
    %2088 = vmatprep.mubr.f32.mxu0 0.0
    %2089 = vmatmul.mubr.f32.gmra.mrb[0].mxu0 %v1975
    %v2090 = vpop.f32.mrb[0].mxu0
    %v2091 = vadd.f32 0.0, %v2090
    %v2092 = vpop.f32.mrb[0].mxu0
    %2093 = vmatprep.mubr.f32.mxu0 0.0
    %2094 = vmatmul.mubr.f32.gmra.mrb[0].mxu0 %v1978
    %v2095 = vpop.f32.mrb[0].mxu0
    %v2096 = vadd.f32 0.0, %v2095
    %v2097 = vpop.f32.mrb[0].mxu0
    %2098 = vmatprep.mubr.f32.mxu0 0.0
    %2099 = vmatmul.mubr.f32.gmra.mrb[0].mxu0 %v1981
    %v2100 = vpop.f32.mrb[0].mxu0
    %v2101 = vadd.f32 0.0, %v2100
    %v2102 = vpop.f32.mrb[0].mxu0
    %2103 = vmatprep.mubr.f32.mxu0 0.0
    %2104 = vmatmul.mubr.f32.gmra.mrb[0].mxu0 %v1984
    %v2105 = vpop.f32.mrb[0].mxu0
    %v2106 = vadd.f32 0.0, %v2105
    %v2107 = vpop.f32.mrb[0].mxu0
    %2108 = vmatprep.mubr.f32.mxu0 0.0
    %2109 = vmatmul.mubr.f32.gmra.mrb[0].mxu0 %v1987
    %v2110 = vpop.f32.mrb[0].mxu0
    %v2111 = vadd.f32 0.0, %v2110
    %v2112 = vpop.f32.mrb[0].mxu0
    %2113 = vmatprep.mubr.f32.mxu0 0.0
    %2114 = vmatmul.mubr.f32.gmra.mrb[0].mxu0 %v1990
    %v2115 = vpop.f32.mrb[0].mxu0
    %v2116 = vadd.f32 0.0, %v2115
    %v2117 = vpop.f32.mrb[0].mxu0
    %2118 = vmatprep.mubr.f32.mxu0 0.0
    %2119 = vmatmul.mubr.f32.gmra.mrb[0].mxu0 %v1993
    %v2120 = vpop.f32.mrb[0].mxu0
    %v2121 = vadd.f32 0.0, %v2120
    %v2122 = vpop.f32.mrb[0].mxu0
    %2123 = vmatprep.mubr.f32.mxu0 0.0
    %2124 = vmatmul.mubr.f32.gmra.mrb[0].mxu0 %v1996
    %v2125 = vpop.f32.mrb[0].mxu0
    %v2126 = vadd.f32 0.0, %v2125
    %v2127 = vpop.f32.mrb[0].mxu0
    %2128 = vmatprep.mubr.f32.mxu0 0.0
    %2129 = vmatmul.mubr.f32.gmra.mrb[0].mxu0 %v1999
    %v2130 = vpop.f32.mrb[0].mxu0
    %v2131 = vadd.f32 0.0, %v2130
    %v2132 = vpop.f32.mrb[0].mxu0
    %2133 = vmatprep.mubr.f32.mxu0 0.0
    %2134 = vmatmul.mubr.f32.gmra.mrb[0].mxu0 %v2002
    %v2135 = vpop.f32.mrb[0].mxu0
    %v2136 = vadd.f32 0.0, %v2135
    %v2137 = vpop.f32.mrb[0].mxu0
    %2138 = vmatprep.mubr.f32.mxu0 0.0
    %2139 = vmatmul.mubr.f32.gmra.mrb[0].mxu0 %v2005
    %v2140 = vpop.f32.mrb[0].mxu0
    %v2141 = vadd.f32 0.0, %v2140
    %v2142 = vpop.f32.mrb[0].mxu0
    %2143 = vmatprep.mubr.f32.mxu0 0.0
    %2144 = vmatmul.mubr.f32.gmra.mrb[0].mxu0 %v2008
    %v2145 = vpop.f32.mrb[0].mxu0
    %v2146 = vadd.f32 0.0, %v2145
    %v2147 = vpop.f32.mrb[0].mxu0
    %2148 = vmatprep.mubr.f32.mxu0 0.0
    %2149 = vmatmul.mubr.f32.gmra.mrb[0].mxu0 %v2011
    %v2150 = vpop.f32.mrb[0].mxu0
    %v2151 = vadd.f32 0.0, %v2150
    %v2152 = vpop.f32.mrb[0].mxu0
    %2153 = vmatprep.mubr.f32.mxu0 0.0
    %2154 = vmatmul.mubr.f32.gmra.mrb[0].mxu0 %v2014
    %v2155 = vpop.f32.mrb[0].mxu0
    %v2156 = vadd.f32 0.0, %v2155
    %v2157 = vpop.f32.mrb[0].mxu0
    %2158 = vmatprep.mubr.f32.mxu0 0.0
    %2159 = vmatmul.mubr.f32.gmra.mrb[0].mxu0 %v2017
    %v2160 = vpop.f32.mrb[0].mxu0
    %v2161 = vadd.f32 0.0, %v2160
    %v2162 = vpop.f32.mrb[0].mxu0
    %2163 = vdwg.mxu0
    %v2165 = vsel %vm55, %v1881, 0
    %v2168 = vsel %vm55, %v1882, 0
    %v2171 = vsel %vm55, %v1883, 0
    %v2174 = vsel %vm55, %v1884, 0
    %v2177 = vsel %vm55, %v1885, 0
    %v2180 = vsel %vm55, %v1886, 0
    %v2183 = vsel %vm55, %v1887, 0
    %v2186 = vsel %vm55, %v1888, 0
    %v2189 = vsel %vm55, %v1889, 0
    %v2192 = vsel %vm55, %v1890, 0
    %v2195 = vsel %vm55, %v1891, 0
    %v2198 = vsel %vm55, %v1892, 0
    %v2201 = vsel %vm55, %v1893, 0
    %v2204 = vsel %vm55, %v1894, 0
    %v2207 = vsel %vm55, %v1895, 0
    %v2210 = vsel %vm55, %v1896, 0
    %2212 = vmatprep.subr.mxu0 0.0
    %2213 = vmatpush1.msra.mxu0 %v1962
    %2214 = vmatprep.subr.mxu0 0.0
    %2215 = vmatpush1.msra.mxu0 %v1963
    %2216 = vmatprep.subr.mxu0 0.0
    %2217 = vmatpush1.msra.mxu0 %v1964
    %2218 = vmatprep.subr.mxu0 0.0
    %2219 = vmatpush1.msra.mxu0 %v1965
    %2220 = vmatprep.subr.mxu0 0.0
    %2221 = vmatpush1.msra.mxu0 0.0
    %2222 = vmatprep.subr.mxu0 0.0
    %2223 = vmatpush1.msra.mxu0 0.0
    %2224 = vmatprep.subr.mxu0 0.0
    %2225 = vmatpush1.msra.mxu0 0.0
    %2226 = vmatprep.subr.mxu0 0.0
    %2227 = vmatpush1.msra.mxu0 0.0
    %2228 = vmatprep.subr.mxu0 0.0
    %2229 = vmatpush1.msra.mxu0 0.0
    %2230 = vmatprep.subr.mxu0 0.0
    %2231 = vmatpush1.msra.mxu0 0.0
    %2232 = vmatprep.subr.mxu0 0.0
    %2233 = vmatpush1.msra.mxu0 0.0
    %2234 = vmatprep.subr.mxu0 0.0
    %2235 = vmatpush1.msra.mxu0 0.0
    %2236 = vmatprep.subr.mxu0 0.0
    %2237 = vmatpush1.msra.mxu0 0.0
    %2238 = vmatprep.subr.mxu0 0.0
    %2239 = vmatpush1.msra.mxu0 0.0
    %2240 = vmatprep.subr.mxu0 0.0
    %2241 = vmatpush1.msra.mxu0 0.0
    %2242 = vmatprep.subr.mxu0 0.0
    %2243 = vmatpush1.msra.mxu0 0.0
    %2244 = vmatprep.subr.mxu0 0.0
    %2245 = vmatpush1.msra.mxu0 0.0
    %2246 = vmatprep.subr.mxu0 0.0
    %2247 = vmatpush1.msra.mxu0 0.0
    %2248 = vmatprep.subr.mxu0 0.0
    %2249 = vmatpush1.msra.mxu0 0.0
    %2250 = vmatprep.subr.mxu0 0.0
    %2251 = vmatpush1.msra.mxu0 0.0
    %2252 = vmatprep.subr.mxu0 0.0
    %2253 = vmatpush1.msra.mxu0 0.0
    %2254 = vmatprep.subr.mxu0 0.0
    %2255 = vmatpush1.msra.mxu0 0.0
    %2256 = vmatprep.subr.mxu0 0.0
    %2257 = vmatpush1.msra.mxu0 0.0
    %2258 = vmatprep.subr.mxu0 0.0
    %2259 = vmatpush1.msra.mxu0 0.0
    %2260 = vmatprep.subr.mxu0 0.0
    %2261 = vmatpush1.msra.mxu0 0.0
    %2262 = vmatprep.subr.mxu0 0.0
    %2263 = vmatpush1.msra.mxu0 0.0
    %2264 = vmatprep.subr.mxu0 0.0
    %2265 = vmatpush1.msra.mxu0 0.0
    %2266 = vmatprep.subr.mxu0 0.0
    %2267 = vmatpush1.msra.mxu0 0.0
    %2268 = vmatprep.subr.mxu0 0.0
    %2269 = vmatpush1.msra.mxu0 0.0
    %2270 = vmatprep.subr.mxu0 0.0
    %2271 = vmatpush1.msra.mxu0 0.0
    %2272 = vmatprep.subr.mxu0 0.0
    %2273 = vmatpush1.msra.mxu0 0.0
    %2274 = vmatprep.subr.mxu0 0.0
    %2275 = vmatpush1.msra.mxu0 0.0
    %2276 = vmatprep.mubr.f32.mxu0 0.0
    %2277 = vmatmul.mubr.f32.gmra.mrb[0].mxu0 %v2165
    %v2278 = vpop.f32.mrb[0].mxu0
    %v2279 = vadd.f32 %v2086, %v2278
    %v2280 = vpop.f32.mrb[0].mxu0
    %2281 = vmatprep.mubr.f32.mxu0 0.0
    %2282 = vmatmul.mubr.f32.gmra.mrb[0].mxu0 %v2168
    %v2283 = vpop.f32.mrb[0].mxu0
    %v2284 = vadd.f32 %v2091, %v2283
    %v2285 = vpop.f32.mrb[0].mxu0
    %2286 = vmatprep.mubr.f32.mxu0 0.0
    %2287 = vmatmul.mubr.f32.gmra.mrb[0].mxu0 %v2171
    %v2288 = vpop.f32.mrb[0].mxu0
    %v2289 = vadd.f32 %v2096, %v2288
    %v2290 = vpop.f32.mrb[0].mxu0
    %2291 = vmatprep.mubr.f32.mxu0 0.0
    %2292 = vmatmul.mubr.f32.gmra.mrb[0].mxu0 %v2174
    %v2293 = vpop.f32.mrb[0].mxu0
    %v2294 = vadd.f32 %v2101, %v2293
    %v2295 = vpop.f32.mrb[0].mxu0
    %2296 = vmatprep.mubr.f32.mxu0 0.0
    %2297 = vmatmul.mubr.f32.gmra.mrb[0].mxu0 %v2177
    %v2298 = vpop.f32.mrb[0].mxu0
    %v2299 = vadd.f32 %v2106, %v2298
    %v2300 = vpop.f32.mrb[0].mxu0
    %2301 = vmatprep.mubr.f32.mxu0 0.0
    %2302 = vmatmul.mubr.f32.gmra.mrb[0].mxu0 %v2180
    %v2303 = vpop.f32.mrb[0].mxu0
    %v2304 = vadd.f32 %v2111, %v2303
    %v2305 = vpop.f32.mrb[0].mxu0
    %2306 = vmatprep.mubr.f32.mxu0 0.0
    %2307 = vmatmul.mubr.f32.gmra.mrb[0].mxu0 %v2183
    %v2308 = vpop.f32.mrb[0].mxu0
    %v2309 = vadd.f32 %v2116, %v2308
    %v2310 = vpop.f32.mrb[0].mxu0
    %2311 = vmatprep.mubr.f32.mxu0 0.0
    %2312 = vmatmul.mubr.f32.gmra.mrb[0].mxu0 %v2186
    %v2313 = vpop.f32.mrb[0].mxu0
    %v2314 = vadd.f32 %v2121, %v2313
    %v2315 = vpop.f32.mrb[0].mxu0
    %2316 = vmatprep.mubr.f32.mxu0 0.0
    %2317 = vmatmul.mubr.f32.gmra.mrb[0].mxu0 %v2189
    %v2318 = vpop.f32.mrb[0].mxu0
    %v2319 = vadd.f32 %v2126, %v2318
    %v2320 = vpop.f32.mrb[0].mxu0
    %2321 = vmatprep.mubr.f32.mxu0 0.0
    %2322 = vmatmul.mubr.f32.gmra.mrb[0].mxu0 %v2192
    %v2323 = vpop.f32.mrb[0].mxu0
    %v2324 = vadd.f32 %v2131, %v2323
    %v2325 = vpop.f32.mrb[0].mxu0
    %2326 = vmatprep.mubr.f32.mxu0 0.0
    %2327 = vmatmul.mubr.f32.gmra.mrb[0].mxu0 %v2195
    %v2328 = vpop.f32.mrb[0].mxu0
    %v2329 = vadd.f32 %v2136, %v2328
    %v2330 = vpop.f32.mrb[0].mxu0
    %2331 = vmatprep.mubr.f32.mxu0 0.0
    %2332 = vmatmul.mubr.f32.gmra.mrb[0].mxu0 %v2198
    %v2333 = vpop.f32.mrb[0].mxu0
    %v2334 = vadd.f32 %v2141, %v2333
    %v2335 = vpop.f32.mrb[0].mxu0
    %2336 = vmatprep.mubr.f32.mxu0 0.0
    %2337 = vmatmul.mubr.f32.gmra.mrb[0].mxu0 %v2201
    %v2338 = vpop.f32.mrb[0].mxu0
    %v2339 = vadd.f32 %v2146, %v2338
    %v2340 = vpop.f32.mrb[0].mxu0
    %2341 = vmatprep.mubr.f32.mxu0 0.0
    %2342 = vmatmul.mubr.f32.gmra.mrb[0].mxu0 %v2204
    %v2343 = vpop.f32.mrb[0].mxu0
    %v2344 = vadd.f32 %v2151, %v2343
    %v2345 = vpop.f32.mrb[0].mxu0
    %2346 = vmatprep.mubr.f32.mxu0 0.0
    %2347 = vmatmul.mubr.f32.gmra.mrb[0].mxu0 %v2207
    %v2348 = vpop.f32.mrb[0].mxu0
    %v2349 = vadd.f32 %v2156, %v2348
    %v2350 = vpop.f32.mrb[0].mxu0
    %2351 = vmatprep.mubr.f32.mxu0 0.0
    %2352 = vmatmul.mubr.f32.gmra.mrb[0].mxu0 %v2210
    %v2353 = vpop.f32.mrb[0].mxu0
    %v2354 = vadd.f32 %v2161, %v2353
    %v2355 = vpop.f32.mrb[0].mxu0
    %2356 = vdwg.mxu0
    %s2357 = scalar_lea.vmem %s5, 5
    %v2358 = vld [vmem:[%s2357] sm:$0x1]
    %v2360 = vlaneseq
    %v2361 = vshrl.u32 %v2360, 7
    %v2362 = vsub.s32 0, %v2361
    %v2363 = vrot.slane %v2358, %v2362
    %v2365 = vadd.f32 %v2279, %v2363
    %v2366 = vadd.f32 %v2284, %v2363
    %v2367 = vadd.f32 %v2289, %v2363
    %v2368 = vadd.f32 %v2294, %v2363
    %v2369 = vadd.f32 %v2299, %v2363
    %v2370 = vadd.f32 %v2304, %v2363
    %v2371 = vadd.f32 %v2309, %v2363
    %v2372 = vadd.f32 %v2314, %v2363
    %v2373 = vadd.f32 %v2319, %v2363
    %v2374 = vadd.f32 %v2324, %v2363
    %v2375 = vadd.f32 %v2329, %v2363
    %v2376 = vadd.f32 %v2334, %v2363
    %v2377 = vadd.f32 %v2339, %v2363
    %v2378 = vadd.f32 %v2344, %v2363
    %v2379 = vadd.f32 %v2349, %v2363
    %v2380 = vadd.f32 %v2354, %v2363
    %2381 = vst.msk [vmem:[%s6] sm:$0xff] %vm55, %v2365
    %2382 = vst.msk [vmem:[%s6 + $0x8] sm:$0xff] %vm55, %v2366
    %2383 = vst.msk [vmem:[%s6 + $0x10] sm:$0xff] %vm55, %v2367
    %2384 = vst.msk [vmem:[%s6 + $0x18] sm:$0xff] %vm55, %v2368
    %2385 = vst.msk [vmem:[%s6 + $0x20] sm:$0xff] %vm55, %v2369
    %2386 = vst.msk [vmem:[%s6 + $0x28] sm:$0xff] %vm55, %v2370
    %2387 = vst.msk [vmem:[%s6 + $0x30] sm:$0xff] %vm55, %v2371
    %2388 = vst.msk [vmem:[%s6 + $0x38] sm:$0xff] %vm55, %v2372
    %2389 = vst.msk [vmem:[%s6 + $0x40] sm:$0xff] %vm55, %v2373
    %2390 = vst.msk [vmem:[%s6 + $0x48] sm:$0xff] %vm55, %v2374
    %2391 = vst.msk [vmem:[%s6 + $0x50] sm:$0xff] %vm55, %v2375
    %2392 = vst.msk [vmem:[%s6 + $0x58] sm:$0xff] %vm55, %v2376
    %2393 = vst.msk [vmem:[%s6 + $0x60] sm:$0xff] %vm55, %v2377
    %2394 = vst.msk [vmem:[%s6 + $0x68] sm:$0xff] %vm55, %v2378
    %2395 = vst.msk [vmem:[%s6 + $0x70] sm:$0xff] %vm55, %v2379
    %2396 = vst.msk [vmem:[%s6 + $0x78] sm:$0xff] %vm55, %v2380
    %v2397 = vlaneseq
    %v2398 = vshrl.u32 %v2397, 7
    %v2399 = vadd.s32 %v2398, 8
    %v2400 = vadd.s32 %v2398, 16
    %v2401 = vadd.s32 %v2398, 24
    %v2402 = vadd.s32 %v2398, 32
    %v2403 = vadd.s32 %v2398, 40
    %v2404 = vadd.s32 %v2398, 48
    %v2405 = vadd.s32 %v2398, 56
    %v2406 = vadd.s32 %v2398, 64
    %v2407 = vadd.s32 %v2398, 72
    %v2408 = vadd.s32 %v2398, 80
    %v2409 = vadd.s32 %v2398, 88
    %v2410 = vadd.s32 %v2398, 96
    %v2411 = vadd.s32 %v2398, 104
    %v2412 = vadd.s32 %v2398, 112
    %v2413 = vadd.s32 %v2398, 120
    %vm2414 = vcmp.lt.s32.totalorder %v2398, 16
    %vm2415 = vcmp.lt.s32.totalorder %v2399, 16
    %vm2416 = vcmp.lt.s32.totalorder %v2400, 16
    %vm2417 = vcmp.lt.s32.totalorder %v2401, 16
    %vm2418 = vcmp.lt.s32.totalorder %v2402, 16
    %vm2419 = vcmp.lt.s32.totalorder %v2403, 16
    %vm2420 = vcmp.lt.s32.totalorder %v2404, 16
    %vm2421 = vcmp.lt.s32.totalorder %v2405, 16
    %vm2422 = vcmp.lt.s32.totalorder %v2406, 16
    %vm2423 = vcmp.lt.s32.totalorder %v2407, 16
    %vm2424 = vcmp.lt.s32.totalorder %v2408, 16
    %vm2425 = vcmp.lt.s32.totalorder %v2409, 16
    %vm2426 = vcmp.lt.s32.totalorder %v2410, 16
    %vm2427 = vcmp.lt.s32.totalorder %v2411, 16
    %vm2428 = vcmp.lt.s32.totalorder %v2412, 16
    %vm2429 = vcmp.lt.s32.totalorder %v2413, 16
    %v2430 = vsel %vm2414, 1, 0
    %v2431 = vsel %vm2415, 1, 0
    %v2432 = vsel %vm2416, 1, 0
    %v2433 = vsel %vm2417, 1, 0
    %v2434 = vsel %vm2418, 1, 0
    %v2435 = vsel %vm2419, 1, 0
    %v2436 = vsel %vm2420, 1, 0
    %v2437 = vsel %vm2421, 1, 0
    %v2438 = vsel %vm2422, 1, 0
    %v2439 = vsel %vm2423, 1, 0
    %v2440 = vsel %vm2424, 1, 0
    %v2441 = vsel %vm2425, 1, 0
    %v2442 = vsel %vm2426, 1, 0
    %v2443 = vsel %vm2427, 1, 0
    %v2444 = vsel %vm2428, 1, 0
    %v2445 = vsel %vm2429, 1, 0
    %v2446 = vcvt.s32.f32 %v2430
    %v2447 = vcvt.s32.f32 %v2431
    %v2448 = vcvt.s32.f32 %v2432
    %v2449 = vcvt.s32.f32 %v2433
    %v2450 = vcvt.s32.f32 %v2434
    %v2451 = vcvt.s32.f32 %v2435
    %v2452 = vcvt.s32.f32 %v2436
    %v2453 = vcvt.s32.f32 %v2437
    %v2454 = vcvt.s32.f32 %v2438
    %v2455 = vcvt.s32.f32 %v2439
    %v2456 = vcvt.s32.f32 %v2440
    %v2457 = vcvt.s32.f32 %v2441
    %v2458 = vcvt.s32.f32 %v2442
    %v2459 = vcvt.s32.f32 %v2443
    %v2460 = vcvt.s32.f32 %v2444
    %v2461 = vcvt.s32.f32 %v2445
    %v2462 = vld [vmem:[%s1] sm:$0xff]
    %v2463 = vld [vmem:[%s1 + $0x8] sm:$0xff]
    %v2464 = vld [vmem:[%s1 + $0x10] sm:$0xff]
    %v2465 = vld [vmem:[%s1 + $0x18] sm:$0xff]
    %v2466 = vld [vmem:[%s1 + $0x20] sm:$0xff]
    %v2467 = vld [vmem:[%s1 + $0x28] sm:$0xff]
    %v2468 = vld [vmem:[%s1 + $0x30] sm:$0xff]
    %v2469 = vld [vmem:[%s1 + $0x38] sm:$0xff]
    %v2470 = vld [vmem:[%s1 + $0x40] sm:$0xff]
    %v2471 = vld [vmem:[%s1 + $0x48] sm:$0xff]
    %v2472 = vld [vmem:[%s1 + $0x50] sm:$0xff]
    %v2473 = vld [vmem:[%s1 + $0x58] sm:$0xff]
    %v2474 = vld [vmem:[%s1 + $0x60] sm:$0xff]
    %v2475 = vld [vmem:[%s1 + $0x68] sm:$0xff]
    %v2476 = vld [vmem:[%s1 + $0x70] sm:$0xff]
    %v2477 = vld [vmem:[%s1 + $0x78] sm:$0xff]
    %v2478 = vsub.f32 %v2365, %v2462
    %v2479 = vsub.f32 %v2366, %v2463
    %v2480 = vsub.f32 %v2367, %v2464
    %v2481 = vsub.f32 %v2368, %v2465
    %v2482 = vsub.f32 %v2369, %v2466
    %v2483 = vsub.f32 %v2370, %v2467
    %v2484 = vsub.f32 %v2371, %v2468
    %v2485 = vsub.f32 %v2372, %v2469
    %v2486 = vsub.f32 %v2373, %v2470
    %v2487 = vsub.f32 %v2374, %v2471
    %v2488 = vsub.f32 %v2375, %v2472
    %v2489 = vsub.f32 %v2376, %v2473
    %v2490 = vsub.f32 %v2377, %v2474
    %v2491 = vsub.f32 %v2378, %v2475
    %v2492 = vsub.f32 %v2379, %v2476
    %v2493 = vsub.f32 %v2380, %v2477
    %v2494 = vmul.f32 %v2478, %v2446
    %v2495 = vmul.f32 %v2479, %v2447
    %v2496 = vmul.f32 %v2480, %v2448
    %v2497 = vmul.f32 %v2481, %v2449
    %v2498 = vmul.f32 %v2482, %v2450
    %v2499 = vmul.f32 %v2483, %v2451
    %v2500 = vmul.f32 %v2484, %v2452
    %v2501 = vmul.f32 %v2485, %v2453
    %v2502 = vmul.f32 %v2486, %v2454
    %v2503 = vmul.f32 %v2487, %v2455
    %v2504 = vmul.f32 %v2488, %v2456
    %v2505 = vmul.f32 %v2489, %v2457
    %v2506 = vmul.f32 %v2490, %v2458
    %v2507 = vmul.f32 %v2491, %v2459
    %v2508 = vmul.f32 %v2492, %v2460
    %v2509 = vmul.f32 %v2493, %v2461
    %v2510 = vmul.f32 %v2494, %v2494
    %v2511 = vmul.f32 %v2495, %v2495
    %v2512 = vmul.f32 %v2496, %v2496
    %v2513 = vmul.f32 %v2497, %v2497
    %v2514 = vmul.f32 %v2498, %v2498
    %v2515 = vmul.f32 %v2499, %v2499
    %v2516 = vmul.f32 %v2500, %v2500
    %v2517 = vmul.f32 %v2501, %v2501
    %v2518 = vmul.f32 %v2502, %v2502
    %v2519 = vmul.f32 %v2503, %v2503
    %v2520 = vmul.f32 %v2504, %v2504
    %v2521 = vmul.f32 %v2505, %v2505
    %v2522 = vmul.f32 %v2506, %v2506
    %v2523 = vmul.f32 %v2507, %v2507
    %v2524 = vmul.f32 %v2508, %v2508
    %v2525 = vmul.f32 %v2509, %v2509
    %v2526 = vsel %vm55, %v2510, 0.0
    %v2527 = vsel %vm55, %v2511, 0.0
    %v2528 = vadd.f32 %v2526, %v2527
    %v2529 = vsel %vm55, %v2512, 0.0
    %v2530 = vadd.f32 %v2528, %v2529
    %v2531 = vsel %vm55, %v2513, 0.0
    %v2532 = vadd.f32 %v2530, %v2531
    %v2533 = vsel %vm55, %v2514, 0.0
    %v2534 = vadd.f32 %v2532, %v2533
    %v2535 = vsel %vm55, %v2515, 0.0
    %v2536 = vadd.f32 %v2534, %v2535
    %v2537 = vsel %vm55, %v2516, 0.0
    %v2538 = vadd.f32 %v2536, %v2537
    %v2539 = vsel %vm55, %v2517, 0.0
    %v2540 = vadd.f32 %v2538, %v2539
    %v2541 = vsel %vm55, %v2518, 0.0
    %v2542 = vadd.f32 %v2540, %v2541
    %v2543 = vsel %vm55, %v2519, 0.0
    %v2544 = vadd.f32 %v2542, %v2543
    %v2545 = vsel %vm55, %v2520, 0.0
    %v2546 = vadd.f32 %v2544, %v2545
    %v2547 = vsel %vm55, %v2521, 0.0
    %v2548 = vadd.f32 %v2546, %v2547
    %v2549 = vsel %vm55, %v2522, 0.0
    %v2550 = vadd.f32 %v2548, %v2549
    %v2551 = vsel %vm55, %v2523, 0.0
    %v2552 = vadd.f32 %v2550, %v2551
    %v2553 = vsel %vm55, %v2524, 0.0
    %v2554 = vadd.f32 %v2552, %v2553
    %v2555 = vsel %vm55, %v2525, 0.0
    %v2556 = vadd.f32 %v2554, %v2555
    %2557 = vadd.xlane.f32.xlu0 %v2556
    %v2558 = vpop.xlane.xlu0 %2557
    %v2559 = vrot.slane %v2558, 4
    %v2560 = vadd.f32 %v2558, %v2559
    %v2561 = vrot.slane %v2560, 2
    %v2562 = vadd.f32 %v2560, %v2561
    %v2563 = vrot.slane %v2562, 1
    %v2564 = vadd.f32 %v2562, %v2563
    %s2565 = vtos %v2564
    %s2566 = scalar_lea.smem [#allocation2], 0
    %2567 = sst [smem:[%s2566]] %s2565
    %v2568 = vld [vmem:[%s2] sm:$0xff]
    %v2569 = vld [vmem:[%s2 + $0x8] sm:$0xff]
    %v2570 = vld [vmem:[%s2 + $0x10] sm:$0xff]
    %v2571 = vld [vmem:[%s2 + $0x18] sm:$0xff]
    %v2572 = vld [vmem:[%s2 + $0x20] sm:$0xff]
    %v2573 = vld [vmem:[%s2 + $0x28] sm:$0xff]
    %v2574 = vld [vmem:[%s2 + $0x30] sm:$0xff]
    %v2575 = vld [vmem:[%s2 + $0x38] sm:$0xff]
    %v2576 = vld [vmem:[%s2 + $0x40] sm:$0xff]
    %v2577 = vld [vmem:[%s2 + $0x48] sm:$0xff]
    %v2578 = vld [vmem:[%s2 + $0x50] sm:$0xff]
    %v2579 = vld [vmem:[%s2 + $0x58] sm:$0xff]
    %v2580 = vld [vmem:[%s2 + $0x60] sm:$0xff]
    %v2581 = vld [vmem:[%s2 + $0x68] sm:$0xff]
    %v2582 = vld [vmem:[%s2 + $0x70] sm:$0xff]
    %v2583 = vld [vmem:[%s2 + $0x78] sm:$0xff]
    %v2585 = vsel %vm55, %v2365, 0
    %v2588 = vsel %vm55, %v2366, 0
    %v2591 = vsel %vm55, %v2367, 0
    %v2594 = vsel %vm55, %v2368, 0
    %v2597 = vsel %vm55, %v2369, 0
    %v2600 = vsel %vm55, %v2370, 0
    %v2603 = vsel %vm55, %v2371, 0
    %v2606 = vsel %vm55, %v2372, 0
    %v2609 = vsel %vm55, %v2373, 0
    %v2612 = vsel %vm55, %v2374, 0
    %v2615 = vsel %vm55, %v2375, 0
    %v2618 = vsel %vm55, %v2376, 0
    %v2621 = vsel %vm55, %v2377, 0
    %v2624 = vsel %vm55, %v2378, 0
    %v2627 = vsel %vm55, %v2379, 0
    %v2630 = vsel %vm55, %v2380, 0
    %v2633 = vsel %vm55, %v2568, 0
    %v2636 = vsel %vm55, %v2569, 0
    %v2639 = vsel %vm55, %v2570, 0
    %v2642 = vsel %vm55, %v2571, 0
    %v2645 = vsel %vm55, %v2572, 0
    %v2648 = vsel %vm55, %v2573, 0
    %v2651 = vsel %vm55, %v2574, 0
    %v2654 = vsel %vm55, %v2575, 0
    %v2657 = vsel %vm55, %v2576, 0
    %v2660 = vsel %vm55, %v2577, 0
    %v2663 = vsel %vm55, %v2578, 0
    %v2666 = vsel %vm55, %v2579, 0
    %v2669 = vsel %vm55, %v2580, 0
    %v2672 = vsel %vm55, %v2581, 0
    %v2675 = vsel %vm55, %v2582, 0
    %v2678 = vsel %vm55, %v2583, 0
    %2680 = vmatprep.subr.mxu0 0.0
    %2681 = vmatpush1.xpose.msra.mxu0 %v2633
    %2682 = vmatprep.subr.mxu0 0.0
    %2683 = vmatpush1.xpose.msra.mxu0 %v2636
    %2684 = vmatprep.subr.mxu0 0.0
    %2685 = vmatpush1.xpose.msra.mxu0 %v2639
    %2686 = vmatprep.subr.mxu0 0.0
    %2687 = vmatpush1.xpose.msra.mxu0 %v2642
    %2688 = vmatprep.subr.mxu0 0.0
    %2689 = vmatpush1.xpose.msra.mxu0 %v2645
    %2690 = vmatprep.subr.mxu0 0.0
    %2691 = vmatpush1.xpose.msra.mxu0 %v2648
    %2692 = vmatprep.subr.mxu0 0.0
    %2693 = vmatpush1.xpose.msra.mxu0 %v2651
    %2694 = vmatprep.subr.mxu0 0.0
    %2695 = vmatpush1.xpose.msra.mxu0 %v2654
    %2696 = vmatprep.subr.mxu0 0.0
    %2697 = vmatpush1.xpose.msra.mxu0 %v2657
    %2698 = vmatprep.subr.mxu0 0.0
    %2699 = vmatpush1.xpose.msra.mxu0 %v2660
    %2700 = vmatprep.subr.mxu0 0.0
    %2701 = vmatpush1.xpose.msra.mxu0 %v2663
    %2702 = vmatprep.subr.mxu0 0.0
    %2703 = vmatpush1.xpose.msra.mxu0 %v2666
    %2704 = vmatprep.subr.mxu0 0.0
    %2705 = vmatpush1.xpose.msra.mxu0 %v2669
    %2706 = vmatprep.subr.mxu0 0.0
    %2707 = vmatpush1.xpose.msra.mxu0 %v2672
    %2708 = vmatprep.subr.mxu0 0.0
    %2709 = vmatpush1.xpose.msra.mxu0 %v2675
    %2710 = vmatprep.subr.mxu0 0.0
    %2711 = vmatpush1.xpose.msra.mxu0 %v2678
    %2712 = vmatprep.subr.mxu0 0.0
    %2713 = vmatpush1.xpose.msra.mxu0 0.0
    %2714 = vmatprep.subr.mxu0 0.0
    %2715 = vmatpush1.xpose.msra.mxu0 0.0
    %2716 = vmatprep.subr.mxu0 0.0
    %2717 = vmatpush1.xpose.msra.mxu0 0.0
    %2718 = vmatprep.subr.mxu0 0.0
    %2719 = vmatpush1.xpose.msra.mxu0 0.0
    %2720 = vmatprep.subr.mxu0 0.0
    %2721 = vmatpush1.xpose.msra.mxu0 0.0
    %2722 = vmatprep.subr.mxu0 0.0
    %2723 = vmatpush1.xpose.msra.mxu0 0.0
    %2724 = vmatprep.subr.mxu0 0.0
    %2725 = vmatpush1.xpose.msra.mxu0 0.0
    %2726 = vmatprep.subr.mxu0 0.0
    %2727 = vmatpush1.xpose.msra.mxu0 0.0
    %2728 = vmatprep.subr.mxu0 0.0
    %2729 = vmatpush1.xpose.msra.mxu0 0.0
    %2730 = vmatprep.subr.mxu0 0.0
    %2731 = vmatpush1.xpose.msra.mxu0 0.0
    %2732 = vmatprep.subr.mxu0 0.0
    %2733 = vmatpush1.xpose.msra.mxu0 0.0
    %2734 = vmatprep.subr.mxu0 0.0
    %2735 = vmatpush1.xpose.msra.mxu0 0.0
    %2736 = vmatprep.subr.mxu0 0.0
    %2737 = vmatpush1.xpose.msra.mxu0 0.0
    %2738 = vmatprep.subr.mxu0 0.0
    %2739 = vmatpush1.xpose.msra.mxu0 0.0
    %2740 = vmatprep.subr.mxu0 0.0
    %2741 = vmatpush1.xpose.msra.mxu0 0.0
    %2742 = vmatprep.subr.mxu0 0.0
    %2743 = vmatpush1.xpose.msra.mxu0 0.0
    %2744 = vmatprep.mubr.f32.mxu0 0.0
    %2745 = vmatmul.mubr.f32.gmra.mrb[0].mxu0 %v2585
    %v2746 = vpop.f32.mrb[0].mxu0
    %v2747 = vadd.f32 0.0, %v2746
    %v2748 = vpop.f32.mrb[0].mxu0
    %2749 = vmatprep.mubr.f32.mxu0 0.0
    %2750 = vmatmul.mubr.f32.gmra.mrb[0].mxu0 %v2588
    %v2751 = vpop.f32.mrb[0].mxu0
    %v2752 = vadd.f32 0.0, %v2751
    %v2753 = vpop.f32.mrb[0].mxu0
    %2754 = vmatprep.mubr.f32.mxu0 0.0
    %2755 = vmatmul.mubr.f32.gmra.mrb[0].mxu0 %v2591
    %v2756 = vpop.f32.mrb[0].mxu0
    %v2757 = vadd.f32 0.0, %v2756
    %v2758 = vpop.f32.mrb[0].mxu0
    %2759 = vmatprep.mubr.f32.mxu0 0.0
    %2760 = vmatmul.mubr.f32.gmra.mrb[0].mxu0 %v2594
    %v2761 = vpop.f32.mrb[0].mxu0
    %v2762 = vadd.f32 0.0, %v2761
    %v2763 = vpop.f32.mrb[0].mxu0
    %2764 = vmatprep.mubr.f32.mxu0 0.0
    %2765 = vmatmul.mubr.f32.gmra.mrb[0].mxu0 %v2597
    %v2766 = vpop.f32.mrb[0].mxu0
    %v2767 = vadd.f32 0.0, %v2766
    %v2768 = vpop.f32.mrb[0].mxu0
    %2769 = vmatprep.mubr.f32.mxu0 0.0
    %2770 = vmatmul.mubr.f32.gmra.mrb[0].mxu0 %v2600
    %v2771 = vpop.f32.mrb[0].mxu0
    %v2772 = vadd.f32 0.0, %v2771
    %v2773 = vpop.f32.mrb[0].mxu0
    %2774 = vmatprep.mubr.f32.mxu0 0.0
    %2775 = vmatmul.mubr.f32.gmra.mrb[0].mxu0 %v2603
    %v2776 = vpop.f32.mrb[0].mxu0
    %v2777 = vadd.f32 0.0, %v2776
    %v2778 = vpop.f32.mrb[0].mxu0
    %2779 = vmatprep.mubr.f32.mxu0 0.0
    %2780 = vmatmul.mubr.f32.gmra.mrb[0].mxu0 %v2606
    %v2781 = vpop.f32.mrb[0].mxu0
    %v2782 = vadd.f32 0.0, %v2781
    %v2783 = vpop.f32.mrb[0].mxu0
    %2784 = vmatprep.mubr.f32.mxu0 0.0
    %2785 = vmatmul.mubr.f32.gmra.mrb[0].mxu0 %v2609
    %v2786 = vpop.f32.mrb[0].mxu0
    %v2787 = vadd.f32 0.0, %v2786
    %v2788 = vpop.f32.mrb[0].mxu0
    %2789 = vmatprep.mubr.f32.mxu0 0.0
    %2790 = vmatmul.mubr.f32.gmra.mrb[0].mxu0 %v2612
    %v2791 = vpop.f32.mrb[0].mxu0
    %v2792 = vadd.f32 0.0, %v2791
    %v2793 = vpop.f32.mrb[0].mxu0
    %2794 = vmatprep.mubr.f32.mxu0 0.0
    %2795 = vmatmul.mubr.f32.gmra.mrb[0].mxu0 %v2615
    %v2796 = vpop.f32.mrb[0].mxu0
    %v2797 = vadd.f32 0.0, %v2796
    %v2798 = vpop.f32.mrb[0].mxu0
    %2799 = vmatprep.mubr.f32.mxu0 0.0
    %2800 = vmatmul.mubr.f32.gmra.mrb[0].mxu0 %v2618
    %v2801 = vpop.f32.mrb[0].mxu0
    %v2802 = vadd.f32 0.0, %v2801
    %v2803 = vpop.f32.mrb[0].mxu0
    %2804 = vmatprep.mubr.f32.mxu0 0.0
    %2805 = vmatmul.mubr.f32.gmra.mrb[0].mxu0 %v2621
    %v2806 = vpop.f32.mrb[0].mxu0
    %v2807 = vadd.f32 0.0, %v2806
    %v2808 = vpop.f32.mrb[0].mxu0
    %2809 = vmatprep.mubr.f32.mxu0 0.0
    %2810 = vmatmul.mubr.f32.gmra.mrb[0].mxu0 %v2624
    %v2811 = vpop.f32.mrb[0].mxu0
    %v2812 = vadd.f32 0.0, %v2811
    %v2813 = vpop.f32.mrb[0].mxu0
    %2814 = vmatprep.mubr.f32.mxu0 0.0
    %2815 = vmatmul.mubr.f32.gmra.mrb[0].mxu0 %v2627
    %v2816 = vpop.f32.mrb[0].mxu0
    %v2817 = vadd.f32 0.0, %v2816
    %v2818 = vpop.f32.mrb[0].mxu0
    %2819 = vmatprep.mubr.f32.mxu0 0.0
    %2820 = vmatmul.mubr.f32.gmra.mrb[0].mxu0 %v2630
    %v2821 = vpop.f32.mrb[0].mxu0
    %v2822 = vadd.f32 0.0, %v2821
    %v2823 = vpop.f32.mrb[0].mxu0
    %2824 = vdwg.mxu0
    %v2825 = vlaneseq
    %v2826 = vand.u32 %v2825, 127
    %vm2827 = vcmp.lt.s32.totalorder %v2826, 64
    %v2828 = vsel %vm2827, %v2747, -inf
    %v2829 = vsel %vm2827, %v2752, -inf
    %v2830 = vsel %vm2827, %v2757, -inf
    %v2831 = vsel %vm2827, %v2762, -inf
    %v2832 = vsel %vm2827, %v2767, -inf
    %v2833 = vsel %vm2827, %v2772, -inf
    %v2834 = vsel %vm2827, %v2777, -inf
    %v2835 = vsel %vm2827, %v2782, -inf
    %v2836 = vsel %vm2827, %v2787, -inf
    %v2837 = vsel %vm2827, %v2792, -inf
    %v2838 = vsel %vm2827, %v2797, -inf
    %v2839 = vsel %vm2827, %v2802, -inf
    %v2840 = vsel %vm2827, %v2807, -inf
    %v2841 = vsel %vm2827, %v2812, -inf
    %v2842 = vsel %vm2827, %v2817, -inf
    %v2843 = vsel %vm2827, %v2822, -inf
    %2844 = vmax.xlane.f32.xlu0 %v2828
    %v2845 = vpop.xlane.xlu0 %2844
    %2846 = vmax.xlane.f32.xlu0 %v2829
    %v2847 = vpop.xlane.xlu0 %2846
    %2848 = vmax.xlane.f32.xlu0 %v2830
    %v2849 = vpop.xlane.xlu0 %2848
    %2850 = vmax.xlane.f32.xlu0 %v2831
    %v2851 = vpop.xlane.xlu0 %2850
    %2852 = vmax.xlane.f32.xlu0 %v2832
    %v2853 = vpop.xlane.xlu0 %2852
    %2854 = vmax.xlane.f32.xlu0 %v2833
    %v2855 = vpop.xlane.xlu0 %2854
    %2856 = vmax.xlane.f32.xlu0 %v2834
    %v2857 = vpop.xlane.xlu0 %2856
    %2858 = vmax.xlane.f32.xlu0 %v2835
    %v2859 = vpop.xlane.xlu0 %2858
    %2860 = vmax.xlane.f32.xlu0 %v2836
    %v2861 = vpop.xlane.xlu0 %2860
    %2862 = vmax.xlane.f32.xlu0 %v2837
    %v2863 = vpop.xlane.xlu0 %2862
    %2864 = vmax.xlane.f32.xlu0 %v2838
    %v2865 = vpop.xlane.xlu0 %2864
    %2866 = vmax.xlane.f32.xlu0 %v2839
    %v2867 = vpop.xlane.xlu0 %2866
    %2868 = vmax.xlane.f32.xlu0 %v2840
    %v2869 = vpop.xlane.xlu0 %2868
    %2870 = vmax.xlane.f32.xlu0 %v2841
    %v2871 = vpop.xlane.xlu0 %2870
    %2872 = vmax.xlane.f32.xlu0 %v2842
    %v2873 = vpop.xlane.xlu0 %2872
    %2874 = vmax.xlane.f32.xlu0 %v2843
    %v2875 = vpop.xlane.xlu0 %2874
    %vm2876 = vcmp.eq.f32.partialorder %v2828, %v2845
    %vm2877 = vcmp.eq.f32.partialorder %v2829, %v2847
    %vm2878 = vcmp.eq.f32.partialorder %v2830, %v2849
    %vm2879 = vcmp.eq.f32.partialorder %v2831, %v2851
    %vm2880 = vcmp.eq.f32.partialorder %v2832, %v2853
    %vm2881 = vcmp.eq.f32.partialorder %v2833, %v2855
    %vm2882 = vcmp.eq.f32.partialorder %v2834, %v2857
    %vm2883 = vcmp.eq.f32.partialorder %v2835, %v2859
    %vm2884 = vcmp.eq.f32.partialorder %v2836, %v2861
    %vm2885 = vcmp.eq.f32.partialorder %v2837, %v2863
    %vm2886 = vcmp.eq.f32.partialorder %v2838, %v2865
    %vm2887 = vcmp.eq.f32.partialorder %v2839, %v2867
    %vm2888 = vcmp.eq.f32.partialorder %v2840, %v2869
    %vm2889 = vcmp.eq.f32.partialorder %v2841, %v2871
    %vm2890 = vcmp.eq.f32.partialorder %v2842, %v2873
    %vm2891 = vcmp.eq.f32.partialorder %v2843, %v2875
    %v2892 = vsel %vm2876, %v2826, 128
    %v2893 = vsel %vm2877, %v2826, 128
    %v2894 = vsel %vm2878, %v2826, 128
    %v2895 = vsel %vm2879, %v2826, 128
    %v2896 = vsel %vm2880, %v2826, 128
    %v2897 = vsel %vm2881, %v2826, 128
    %v2898 = vsel %vm2882, %v2826, 128
    %v2899 = vsel %vm2883, %v2826, 128
    %v2900 = vsel %vm2884, %v2826, 128
    %v2901 = vsel %vm2885, %v2826, 128
    %v2902 = vsel %vm2886, %v2826, 128
    %v2903 = vsel %vm2887, %v2826, 128
    %v2904 = vsel %vm2888, %v2826, 128
    %v2905 = vsel %vm2889, %v2826, 128
    %v2906 = vsel %vm2890, %v2826, 128
    %v2907 = vsel %vm2891, %v2826, 128
    %v2908 = vand.u32 %v2892, 65535
    %v2909 = vshra.s32 %v2892, 16
    %v2910 = vcvt.s32.f32 %v2908
    %v2911 = vcvt.s32.f32 %v2909
    %2912 = vmin.xlane.f32.xlu0 %v2911
    %v2913 = vpop.xlane.xlu0 %2912
    %vm2914 = vcmp.eq.f32.partialorder %v2911, %v2913
    %v2915 = vsel %vm2914, %v2910, inf
    %2916 = vmin.xlane.f32.xlu0 %v2915
    %v2917 = vpop.xlane.xlu0 %2916
    %v2918 = vcvt.f32.s32 %v2917
    %v2919 = vcvt.f32.s32 %v2913
    %v2920 = vshll.u32 %v2919, 16
    %v2921 = vadd.s32 %v2920, %v2918
    %v2922 = vand.u32 %v2893, 65535
    %v2923 = vshra.s32 %v2893, 16
    %v2924 = vcvt.s32.f32 %v2922
    %v2925 = vcvt.s32.f32 %v2923
    %2926 = vmin.xlane.f32.xlu0 %v2925
    %v2927 = vpop.xlane.xlu0 %2926
    %vm2928 = vcmp.eq.f32.partialorder %v2925, %v2927
    %v2929 = vsel %vm2928, %v2924, inf
    %2930 = vmin.xlane.f32.xlu0 %v2929
    %v2931 = vpop.xlane.xlu0 %2930
    %v2932 = vcvt.f32.s32 %v2931
    %v2933 = vcvt.f32.s32 %v2927
    %v2934 = vshll.u32 %v2933, 16
    %v2935 = vadd.s32 %v2934, %v2932
    %v2936 = vand.u32 %v2894, 65535
    %v2937 = vshra.s32 %v2894, 16
    %v2938 = vcvt.s32.f32 %v2936
    %v2939 = vcvt.s32.f32 %v2937
    %2940 = vmin.xlane.f32.xlu0 %v2939
    %v2941 = vpop.xlane.xlu0 %2940
    %vm2942 = vcmp.eq.f32.partialorder %v2939, %v2941
    %v2943 = vsel %vm2942, %v2938, inf
    %2944 = vmin.xlane.f32.xlu0 %v2943
    %v2945 = vpop.xlane.xlu0 %2944
    %v2946 = vcvt.f32.s32 %v2945
    %v2947 = vcvt.f32.s32 %v2941
    %v2948 = vshll.u32 %v2947, 16
    %v2949 = vadd.s32 %v2948, %v2946
    %v2950 = vand.u32 %v2895, 65535
    %v2951 = vshra.s32 %v2895, 16
    %v2952 = vcvt.s32.f32 %v2950
    %v2953 = vcvt.s32.f32 %v2951
    %2954 = vmin.xlane.f32.xlu0 %v2953
    %v2955 = vpop.xlane.xlu0 %2954
    %vm2956 = vcmp.eq.f32.partialorder %v2953, %v2955
    %v2957 = vsel %vm2956, %v2952, inf
    %2958 = vmin.xlane.f32.xlu0 %v2957
    %v2959 = vpop.xlane.xlu0 %2958
    %v2960 = vcvt.f32.s32 %v2959
    %v2961 = vcvt.f32.s32 %v2955
    %v2962 = vshll.u32 %v2961, 16
    %v2963 = vadd.s32 %v2962, %v2960
    %v2964 = vand.u32 %v2896, 65535
    %v2965 = vshra.s32 %v2896, 16
    %v2966 = vcvt.s32.f32 %v2964
    %v2967 = vcvt.s32.f32 %v2965
    %2968 = vmin.xlane.f32.xlu0 %v2967
    %v2969 = vpop.xlane.xlu0 %2968
    %vm2970 = vcmp.eq.f32.partialorder %v2967, %v2969
    %v2971 = vsel %vm2970, %v2966, inf
    %2972 = vmin.xlane.f32.xlu0 %v2971
    %v2973 = vpop.xlane.xlu0 %2972
    %v2974 = vcvt.f32.s32 %v2973
    %v2975 = vcvt.f32.s32 %v2969
    %v2976 = vshll.u32 %v2975, 16
    %v2977 = vadd.s32 %v2976, %v2974
    %v2978 = vand.u32 %v2897, 65535
    %v2979 = vshra.s32 %v2897, 16
    %v2980 = vcvt.s32.f32 %v2978
    %v2981 = vcvt.s32.f32 %v2979
    %2982 = vmin.xlane.f32.xlu0 %v2981
    %v2983 = vpop.xlane.xlu0 %2982
    %vm2984 = vcmp.eq.f32.partialorder %v2981, %v2983
    %v2985 = vsel %vm2984, %v2980, inf
    %2986 = vmin.xlane.f32.xlu0 %v2985
    %v2987 = vpop.xlane.xlu0 %2986
    %v2988 = vcvt.f32.s32 %v2987
    %v2989 = vcvt.f32.s32 %v2983
    %v2990 = vshll.u32 %v2989, 16
    %v2991 = vadd.s32 %v2990, %v2988
    %v2992 = vand.u32 %v2898, 65535
    %v2993 = vshra.s32 %v2898, 16
    %v2994 = vcvt.s32.f32 %v2992
    %v2995 = vcvt.s32.f32 %v2993
    %2996 = vmin.xlane.f32.xlu0 %v2995
    %v2997 = vpop.xlane.xlu0 %2996
    %vm2998 = vcmp.eq.f32.partialorder %v2995, %v2997
    %v2999 = vsel %vm2998, %v2994, inf
    %3000 = vmin.xlane.f32.xlu0 %v2999
    %v3001 = vpop.xlane.xlu0 %3000
    %v3002 = vcvt.f32.s32 %v3001
    %v3003 = vcvt.f32.s32 %v2997
    %v3004 = vshll.u32 %v3003, 16
    %v3005 = vadd.s32 %v3004, %v3002
    %v3006 = vand.u32 %v2899, 65535
    %v3007 = vshra.s32 %v2899, 16
    %v3008 = vcvt.s32.f32 %v3006
    %v3009 = vcvt.s32.f32 %v3007
    %3010 = vmin.xlane.f32.xlu0 %v3009
    %v3011 = vpop.xlane.xlu0 %3010
    %vm3012 = vcmp.eq.f32.partialorder %v3009, %v3011
    %v3013 = vsel %vm3012, %v3008, inf
    %3014 = vmin.xlane.f32.xlu0 %v3013
    %v3015 = vpop.xlane.xlu0 %3014
    %v3016 = vcvt.f32.s32 %v3015
    %v3017 = vcvt.f32.s32 %v3011
    %v3018 = vshll.u32 %v3017, 16
    %v3019 = vadd.s32 %v3018, %v3016
    %v3020 = vand.u32 %v2900, 65535
    %v3021 = vshra.s32 %v2900, 16
    %v3022 = vcvt.s32.f32 %v3020
    %v3023 = vcvt.s32.f32 %v3021
    %3024 = vmin.xlane.f32.xlu0 %v3023
    %v3025 = vpop.xlane.xlu0 %3024
    %vm3026 = vcmp.eq.f32.partialorder %v3023, %v3025
    %v3027 = vsel %vm3026, %v3022, inf
    %3028 = vmin.xlane.f32.xlu0 %v3027
    %v3029 = vpop.xlane.xlu0 %3028
    %v3030 = vcvt.f32.s32 %v3029
    %v3031 = vcvt.f32.s32 %v3025
    %v3032 = vshll.u32 %v3031, 16
    %v3033 = vadd.s32 %v3032, %v3030
    %v3034 = vand.u32 %v2901, 65535
    %v3035 = vshra.s32 %v2901, 16
    %v3036 = vcvt.s32.f32 %v3034
    %v3037 = vcvt.s32.f32 %v3035
    %3038 = vmin.xlane.f32.xlu0 %v3037
    %v3039 = vpop.xlane.xlu0 %3038
    %vm3040 = vcmp.eq.f32.partialorder %v3037, %v3039
    %v3041 = vsel %vm3040, %v3036, inf
    %3042 = vmin.xlane.f32.xlu0 %v3041
    %v3043 = vpop.xlane.xlu0 %3042
    %v3044 = vcvt.f32.s32 %v3043
    %v3045 = vcvt.f32.s32 %v3039
    %v3046 = vshll.u32 %v3045, 16
    %v3047 = vadd.s32 %v3046, %v3044
    %v3048 = vand.u32 %v2902, 65535
    %v3049 = vshra.s32 %v2902, 16
    %v3050 = vcvt.s32.f32 %v3048
    %v3051 = vcvt.s32.f32 %v3049
    %3052 = vmin.xlane.f32.xlu0 %v3051
    %v3053 = vpop.xlane.xlu0 %3052
    %vm3054 = vcmp.eq.f32.partialorder %v3051, %v3053
    %v3055 = vsel %vm3054, %v3050, inf
    %3056 = vmin.xlane.f32.xlu0 %v3055
    %v3057 = vpop.xlane.xlu0 %3056
    %v3058 = vcvt.f32.s32 %v3057
    %v3059 = vcvt.f32.s32 %v3053
    %v3060 = vshll.u32 %v3059, 16
    %v3061 = vadd.s32 %v3060, %v3058
    %v3062 = vand.u32 %v2903, 65535
    %v3063 = vshra.s32 %v2903, 16
    %v3064 = vcvt.s32.f32 %v3062
    %v3065 = vcvt.s32.f32 %v3063
    %3066 = vmin.xlane.f32.xlu0 %v3065
    %v3067 = vpop.xlane.xlu0 %3066
    %vm3068 = vcmp.eq.f32.partialorder %v3065, %v3067
    %v3069 = vsel %vm3068, %v3064, inf
    %3070 = vmin.xlane.f32.xlu0 %v3069
    %v3071 = vpop.xlane.xlu0 %3070
    %v3072 = vcvt.f32.s32 %v3071
    %v3073 = vcvt.f32.s32 %v3067
    %v3074 = vshll.u32 %v3073, 16
    %v3075 = vadd.s32 %v3074, %v3072
    %v3076 = vand.u32 %v2904, 65535
    %v3077 = vshra.s32 %v2904, 16
    %v3078 = vcvt.s32.f32 %v3076
    %v3079 = vcvt.s32.f32 %v3077
    %3080 = vmin.xlane.f32.xlu0 %v3079
    %v3081 = vpop.xlane.xlu0 %3080
    %vm3082 = vcmp.eq.f32.partialorder %v3079, %v3081
    %v3083 = vsel %vm3082, %v3078, inf
    %3084 = vmin.xlane.f32.xlu0 %v3083
    %v3085 = vpop.xlane.xlu0 %3084
    %v3086 = vcvt.f32.s32 %v3085
    %v3087 = vcvt.f32.s32 %v3081
    %v3088 = vshll.u32 %v3087, 16
    %v3089 = vadd.s32 %v3088, %v3086
    %v3090 = vand.u32 %v2905, 65535
    %v3091 = vshra.s32 %v2905, 16
    %v3092 = vcvt.s32.f32 %v3090
    %v3093 = vcvt.s32.f32 %v3091
    %3094 = vmin.xlane.f32.xlu0 %v3093
    %v3095 = vpop.xlane.xlu0 %3094
    %vm3096 = vcmp.eq.f32.partialorder %v3093, %v3095
    %v3097 = vsel %vm3096, %v3092, inf
    %3098 = vmin.xlane.f32.xlu0 %v3097
    %v3099 = vpop.xlane.xlu0 %3098
    %v3100 = vcvt.f32.s32 %v3099
    %v3101 = vcvt.f32.s32 %v3095
    %v3102 = vshll.u32 %v3101, 16
    %v3103 = vadd.s32 %v3102, %v3100
    %v3104 = vand.u32 %v2906, 65535
    %v3105 = vshra.s32 %v2906, 16
    %v3106 = vcvt.s32.f32 %v3104
    %v3107 = vcvt.s32.f32 %v3105
    %3108 = vmin.xlane.f32.xlu0 %v3107
    %v3109 = vpop.xlane.xlu0 %3108
    %vm3110 = vcmp.eq.f32.partialorder %v3107, %v3109
    %v3111 = vsel %vm3110, %v3106, inf
    %3112 = vmin.xlane.f32.xlu0 %v3111
    %v3113 = vpop.xlane.xlu0 %3112
    %v3114 = vcvt.f32.s32 %v3113
    %v3115 = vcvt.f32.s32 %v3109
    %v3116 = vshll.u32 %v3115, 16
    %v3117 = vadd.s32 %v3116, %v3114
    %v3118 = vand.u32 %v2907, 65535
    %v3119 = vshra.s32 %v2907, 16
    %v3120 = vcvt.s32.f32 %v3118
    %v3121 = vcvt.s32.f32 %v3119
    %3122 = vmin.xlane.f32.xlu0 %v3121
    %v3123 = vpop.xlane.xlu0 %3122
    %vm3124 = vcmp.eq.f32.partialorder %v3121, %v3123
    %v3125 = vsel %vm3124, %v3120, inf
    %3126 = vmin.xlane.f32.xlu0 %v3125
    %v3127 = vpop.xlane.xlu0 %3126
    %v3128 = vcvt.f32.s32 %v3127
    %v3129 = vcvt.f32.s32 %v3123
    %v3130 = vshll.u32 %v3129, 16
    %v3131 = vadd.s32 %v3130, %v3128
    %v3132 = vld [vmem:[%s3] sm:$0xff]
    %v3133 = vld [vmem:[%s3 + $0x8] sm:$0xff]
    %v3134 = vld [vmem:[%s3 + $0x10] sm:$0xff]
    %v3135 = vld [vmem:[%s3 + $0x18] sm:$0xff]
    %v3136 = vld [vmem:[%s3 + $0x20] sm:$0xff]
    %v3137 = vld [vmem:[%s3 + $0x28] sm:$0xff]
    %v3138 = vld [vmem:[%s3 + $0x30] sm:$0xff]
    %v3139 = vld [vmem:[%s3 + $0x38] sm:$0xff]
    %v3140 = vld [vmem:[%s3 + $0x40] sm:$0xff]
    %v3141 = vld [vmem:[%s3 + $0x48] sm:$0xff]
    %v3142 = vld [vmem:[%s3 + $0x50] sm:$0xff]
    %v3143 = vld [vmem:[%s3 + $0x58] sm:$0xff]
    %v3144 = vld [vmem:[%s3 + $0x60] sm:$0xff]
    %v3145 = vld [vmem:[%s3 + $0x68] sm:$0xff]
    %v3146 = vld [vmem:[%s3 + $0x70] sm:$0xff]
    %v3147 = vld [vmem:[%s3 + $0x78] sm:$0xff]
    %vm3148 = vcmp.eq.s32.totalorder %v2921, %v3132
    %vm3149 = vcmp.eq.s32.totalorder %v2935, %v3133
    %vm3150 = vcmp.eq.s32.totalorder %v2949, %v3134
    %vm3151 = vcmp.eq.s32.totalorder %v2963, %v3135
    %vm3152 = vcmp.eq.s32.totalorder %v2977, %v3136
    %vm3153 = vcmp.eq.s32.totalorder %v2991, %v3137
    %vm3154 = vcmp.eq.s32.totalorder %v3005, %v3138
    %vm3155 = vcmp.eq.s32.totalorder %v3019, %v3139
    %vm3156 = vcmp.eq.s32.totalorder %v3033, %v3140
    %vm3157 = vcmp.eq.s32.totalorder %v3047, %v3141
    %vm3158 = vcmp.eq.s32.totalorder %v3061, %v3142
    %vm3159 = vcmp.eq.s32.totalorder %v3075, %v3143
    %vm3160 = vcmp.eq.s32.totalorder %v3089, %v3144
    %vm3161 = vcmp.eq.s32.totalorder %v3103, %v3145
    %vm3162 = vcmp.eq.s32.totalorder %v3117, %v3146
    %vm3163 = vcmp.eq.s32.totalorder %v3131, %v3147
    %v3164 = vsel %vm3148, 1, 0
    %v3165 = vsel %vm3149, 1, 0
    %v3166 = vsel %vm3150, 1, 0
    %v3167 = vsel %vm3151, 1, 0
    %v3168 = vsel %vm3152, 1, 0
    %v3169 = vsel %vm3153, 1, 0
    %v3170 = vsel %vm3154, 1, 0
    %v3171 = vsel %vm3155, 1, 0
    %v3172 = vsel %vm3156, 1, 0
    %v3173 = vsel %vm3157, 1, 0
    %v3174 = vsel %vm3158, 1, 0
    %v3175 = vsel %vm3159, 1, 0
    %v3176 = vsel %vm3160, 1, 0
    %v3177 = vsel %vm3161, 1, 0
    %v3178 = vsel %vm3162, 1, 0
    %v3179 = vsel %vm3163, 1, 0
    %v3180 = vcvt.s32.f32 %v3164
    %v3181 = vcvt.s32.f32 %v3165
    %v3182 = vcvt.s32.f32 %v3166
    %v3183 = vcvt.s32.f32 %v3167
    %v3184 = vcvt.s32.f32 %v3168
    %v3185 = vcvt.s32.f32 %v3169
    %v3186 = vcvt.s32.f32 %v3170
    %v3187 = vcvt.s32.f32 %v3171
    %v3188 = vcvt.s32.f32 %v3172
    %v3189 = vcvt.s32.f32 %v3173
    %v3190 = vcvt.s32.f32 %v3174
    %v3191 = vcvt.s32.f32 %v3175
    %v3192 = vcvt.s32.f32 %v3176
    %v3193 = vcvt.s32.f32 %v3177
    %v3194 = vcvt.s32.f32 %v3178
    %v3195 = vcvt.s32.f32 %v3179
    %v3196 = vmul.f32 %v3180, %v2446
    %v3197 = vmul.f32 %v3181, %v2447
    %v3198 = vmul.f32 %v3182, %v2448
    %v3199 = vmul.f32 %v3183, %v2449
    %v3200 = vmul.f32 %v3184, %v2450
    %v3201 = vmul.f32 %v3185, %v2451
    %v3202 = vmul.f32 %v3186, %v2452
    %v3203 = vmul.f32 %v3187, %v2453
    %v3204 = vmul.f32 %v3188, %v2454
    %v3205 = vmul.f32 %v3189, %v2455
    %v3206 = vmul.f32 %v3190, %v2456
    %v3207 = vmul.f32 %v3191, %v2457
    %v3208 = vmul.f32 %v3192, %v2458
    %v3209 = vmul.f32 %v3193, %v2459
    %v3210 = vmul.f32 %v3194, %v2460
    %v3211 = vmul.f32 %v3195, %v2461
    %vm3212 = vcmask 7168
    %v3213 = vsel %vm3212, %v3196, 0.0
    %v3214 = vsel %vm3212, %v3197, 0.0
    %v3215 = vadd.f32 %v3213, %v3214
    %v3216 = vsel %vm3212, %v3198, 0.0
    %v3217 = vadd.f32 %v3215, %v3216
    %v3218 = vsel %vm3212, %v3199, 0.0
    %v3219 = vadd.f32 %v3217, %v3218
    %v3220 = vsel %vm3212, %v3200, 0.0
    %v3221 = vadd.f32 %v3219, %v3220
    %v3222 = vsel %vm3212, %v3201, 0.0
    %v3223 = vadd.f32 %v3221, %v3222
    %v3224 = vsel %vm3212, %v3202, 0.0
    %v3225 = vadd.f32 %v3223, %v3224
    %v3226 = vsel %vm3212, %v3203, 0.0
    %v3227 = vadd.f32 %v3225, %v3226
    %v3228 = vsel %vm3212, %v3204, 0.0
    %v3229 = vadd.f32 %v3227, %v3228
    %v3230 = vsel %vm3212, %v3205, 0.0
    %v3231 = vadd.f32 %v3229, %v3230
    %v3232 = vsel %vm3212, %v3206, 0.0
    %v3233 = vadd.f32 %v3231, %v3232
    %v3234 = vsel %vm3212, %v3207, 0.0
    %v3235 = vadd.f32 %v3233, %v3234
    %v3236 = vsel %vm3212, %v3208, 0.0
    %v3237 = vadd.f32 %v3235, %v3236
    %v3238 = vsel %vm3212, %v3209, 0.0
    %v3239 = vadd.f32 %v3237, %v3238
    %v3240 = vsel %vm3212, %v3210, 0.0
    %v3241 = vadd.f32 %v3239, %v3240
    %v3242 = vsel %vm3212, %v3211, 0.0
    %v3243 = vadd.f32 %v3241, %v3242
    %3244 = vadd.xlane.f32.xlu0 %v3243
    %v3245 = vpop.xlane.xlu0 %3244
    %v3246 = vrot.slane %v3245, 4
    %v3247 = vadd.f32 %v3245, %v3246
    %v3248 = vrot.slane %v3247, 2
    %v3249 = vadd.f32 %v3247, %v3248
    %v3250 = vrot.slane %v3249, 1
    %v3251 = vadd.f32 %v3249, %v3250
    %s3252 = vtos %v3251
    %s3253 = smul.f32 %s3252, 0.0625
    %s3254 = scalar_lea.smem [#allocation4], 0
    %3255 = sst [smem:[%s3254]] %s3253
    // Predicated region
    $region26: #{mse_cloze_forward.1} parent=1 // pred_check
      _
    $region27: #{mse_cloze_forward.1} parent=1 // pred_check_branch
      %3257 = sbr.rel (0) target = $region29
    $region28: #{mse_cloze_forward.1} parent=1 // pred_region
      _
    $region29: #{mse_cloze_forward.1} parent=1 // pred_fallthru
      _
    // Predicated region
    $region30: #{mse_cloze_forward.1} parent=1 // pred_check
      _
    $region31: #{mse_cloze_forward.1} parent=1 // pred_check_branch
      %3259 = sbr.rel (0) target = $region33
    $region32: #{mse_cloze_forward.1} parent=1 // pred_region
      %s3261 = ssub.s32 16, 16
      %3262 = vsyncadd [#allocation3], %s3261
      %3265 = dma.smem_to_hbm [#allocation2], 16, %s7, [#allocation3]
    $region33: #{mse_cloze_forward.1} parent=1 // pred_fallthru
      _
    // Predicated region
    $region34: #{mse_cloze_forward.1} parent=1 // pred_check
      _
    $region35: #{mse_cloze_forward.1} parent=1 // pred_check_branch
      %3267 = sbr.rel (0) target = $region37
    $region36: #{mse_cloze_forward.1} parent=1 // pred_region
      %s3269 = ssub.s32 16, 16
      %3270 = vsyncadd [#allocation5], %s3269
      %3273 = dma.smem_to_hbm [#allocation4], 16, %s8, [#allocation5]
    $region37: #{mse_cloze_forward.1} parent=1 // pred_fallthru
      _
    // Predicated region
    $region38: #{mse_cloze_forward.1} parent=1 // pred_check
      _
    $region39: #{mse_cloze_forward.1} parent=1 // pred_check_branch
      %3275 = sbr.rel (0) target = $region41
    $region40: #{mse_cloze_forward.1} parent=1 // pred_region
      _
    $region41: #{mse_cloze_forward.1} parent=1 // pred_fallthru
      _
    // Predicated region
    $region42: #{mse_cloze_forward.1} parent=1 // pred_check
      _
    $region43: #{mse_cloze_forward.1} parent=1 // pred_check_branch
      %3277 = sbr.rel (0) target = $region45
    $region44: #{mse_cloze_forward.1} parent=1 // pred_region
      %3278 = dma.done [#allocation3], 16
    $region45: #{mse_cloze_forward.1} parent=1 // pred_fallthru
      _
    // Predicated region
    $region46: #{mse_cloze_forward.1} parent=1 // pred_check
      _
    $region47: #{mse_cloze_forward.1} parent=1 // pred_check_branch
      %3280 = sbr.rel (0) target = $region49
    $region48: #{mse_cloze_forward.1} parent=1 // pred_region
      %3281 = dma.done [#allocation5], 16
    $region49: #{mse_cloze_forward.1} parent=1 // pred_fallthru
      _
    %3282 = sfence
    %3283 = vsyncpa [#allocation3], 1
    %3284 = vsyncpa [#allocation5], 1

</llo_original>
